<compile_context>
chip_gen: v5e
topology: v5e:2x2
jax: 0.10.0
libtpu: 0.0.40
codegen_flags: <defaults>
</compile_context>

<pallas_src>
import functools

import jax
import jax.numpy as jnp
from jax.experimental import pallas as pl
from jax.experimental.pallas import tpu as pltpu


# ---------------------------------------------------------------------------
# In-kernel math helpers
# ---------------------------------------------------------------------------

def _layer_norm_f32(x, g, b, eps):
    mean = jnp.mean(x, axis=-1, keepdims=True)
    var = jnp.mean(jnp.square(x - mean), axis=-1, keepdims=True)
    return (x - mean) * jax.lax.rsqrt(var + eps) * g + b


def _erf_poly(x):
    # Abramowitz & Stegun 7.1.26 polynomial erf (|err| <= 1.5e-7): exact-GELU
    # (erf) semantics of nn.GELU() with a guaranteed clean Mosaic lowering.
    a1, a2, a3, a4, a5 = (0.254829592, -0.284496736, 1.421413741,
                          -1.453152027, 1.061405429)
    p = 0.3275911
    ax = jnp.abs(x)
    t = 1.0 / (1.0 + p * ax)
    poly = ((((a5 * t + a4) * t + a3) * t + a2) * t + a1) * t
    y = 1.0 - poly * jnp.exp(-ax * ax)
    return jnp.where(x < 0, -y, y)


def _gelu_exact(x):
    return 0.5 * x * (1.0 + _erf_poly(x * 0.7071067811865475))


# ---------------------------------------------------------------------------
# Kernels
# ---------------------------------------------------------------------------

def _ln_qkv_kernel(x_ref, g_ref, b_ref, wq_ref, wk_ref, wv_ref,
                   q_ref, k_ref, v_ref, *, eps, scale):
    # x: (tm, dim); g/b: (1, dim); wq/wk/wv: (dim, inner); q/k/v out: (tm, inner)
    x = x_ref[...].astype(jnp.float32)
    h = _layer_norm_f32(x, g_ref[...].astype(jnp.float32),
                        b_ref[...].astype(jnp.float32), eps)
    h = h.astype(wq_ref.dtype)            # no-op for f32; native bf16 MXU path otherwise
    q = jnp.dot(h, wq_ref[...], preferred_element_type=jnp.float32)
    q_ref[...] = (q * scale).astype(q_ref.dtype)   # fold softmax scale into q
    k_ref[...] = jnp.dot(h, wk_ref[...],
                         preferred_element_type=jnp.float32).astype(k_ref.dtype)
    v_ref[...] = jnp.dot(h, wv_ref[...],
                         preferred_element_type=jnp.float32).astype(v_ref.dtype)


def _attention_kernel(q_ref, k_ref, v_ref, o_ref, *, n_heads, dim_head):
    # q/k/v/o refs: (1, N, n_heads*dim_head) -- one (batch, head-group) per step.
    # Output is written directly in 'b n (h d)' layout (no wrapper transpose).
    q = q_ref[0]
    k = k_ref[0]
    v = v_ref[0]
    outs = []
    for h in range(n_heads):              # static loop over heads in this group
        sl = slice(h * dim_head, (h + 1) * dim_head)
        s = jax.lax.dot_general(q[:, sl], k[:, sl], (((1,), (1,)), ((), ())),
                                preferred_element_type=jnp.float32)
        m = jnp.max(s, axis=-1, keepdims=True)
        p = jnp.exp(s - m)
        l = jnp.sum(p, axis=-1, keepdims=True)
        acc = jnp.dot(p.astype(v_ref.dtype), v[:, sl],
                      preferred_element_type=jnp.float32)
        # scale the small (N, dim_head) result instead of dividing the (N,N) matrix
        outs.append(acc * (1.0 / l))
    o = outs[0] if n_heads == 1 else jnp.concatenate(outs, axis=-1)
    o_ref[0] = o.astype(o_ref.dtype)


def _proj_mlp_residual_kernel(a_ref, x_ref, wo_ref, bo_ref, g_ref, b_ref,
                              w1_ref, b1_ref, w2_ref, b2_ref, o_ref,
                              *, eps, hidden_chunk):
    # a: (tm, inner); x: (tm, dim); wo: (inner, dim); w1: (dim, hidden);
    # w2: (hidden, dim); biases (1, -1); o: (tm, dim)
    # 1) attention out-projection + bias + residual
    a = a_ref[...].astype(wo_ref.dtype)
    x1 = jnp.dot(a, wo_ref[...], preferred_element_type=jnp.float32)
    x1 = x1 + bo_ref[...].astype(jnp.float32) + x_ref[...].astype(jnp.float32)
    # 2) PreNorm + MLP (hidden-chunked) + residual, all in this kernel
    h = _layer_norm_f32(x1, g_ref[...].astype(jnp.float32),
                        b_ref[...].astype(jnp.float32), eps)
    h = h.astype(w1_ref.dtype)
    hidden = w1_ref.shape[1]
    y = x1 + b2_ref[...].astype(jnp.float32)
    for c0 in range(0, hidden, hidden_chunk):     # static loop, VMEM-friendly chunks
        sl = slice(c0, c0 + hidden_chunk)
        u = jnp.dot(h, w1_ref[:, sl], preferred_element_type=jnp.float32)
        u = _gelu_exact(u + b1_ref[:, sl].astype(jnp.float32))
        y = y + jnp.dot(u.astype(w2_ref.dtype), w2_ref[sl, :],
                        preferred_element_type=jnp.float32)
    o_ref[...] = y.astype(o_ref.dtype)


# ---------------------------------------------------------------------------
# Tiling helpers
# ---------------------------------------------------------------------------

def _round_up(n, m):
    return ((n + m - 1) // m) * m


def _choose_tm(M, tm_max):
    """Prefer a row tile that divides M (no pad / slice HBM copies)."""
    cap = min(tm_max, M)
    for cand in range(cap - cap % 8, 0, -8):
        if M % cand == 0:
            return cand, M
    tm = min(_round_up(tm_max, 8), _round_up(M, 8))
    return tm, pl.cdiv(M, tm) * tm


def _choose_head_group(heads, dim_head):
    """Smallest head group with a 128-multiple lane width (lane-dense stores);
    fall back to all heads (block == full inner dim)."""
    for g in range(1, heads + 1):
        if heads % g == 0 and (g * dim_head) % 128 == 0:
            return g
    return heads


def _choose_hidden_chunk(hidden, max_chunk=512):
    if hidden <= max_chunk:
        return hidden
    for c in range(max_chunk, 127, -128):
        if hidden % c == 0:
            return c
    return hidden


def _row_tiled_call(kernel, row_inputs, const_inputs, out_dims, out_dtype,
                    *, tm_max=256, vmem_limit_bytes=None):
    """Tile the leading row axis; const_inputs stay VMEM-resident (constant
    index_map). `out_dims` may be an int or a tuple of ints."""
    M = row_inputs[0].shape[0]
    tm, Mp = _choose_tm(M, tm_max)
    if Mp != M:   # only hit when no 8-aligned divisor of M exists
        row_inputs = [jnp.pad(a, ((0, Mp - M), (0, 0))) for a in row_inputs]

    in_specs = [pl.BlockSpec((tm, a.shape[1]), lambda i: (i, 0))
                for a in row_inputs]
    in_specs += [pl.BlockSpec(c.shape, lambda i: (0, 0)) for c in const_inputs]

    multi = isinstance(out_dims, (tuple, list))
    dims = tuple(out_dims) if multi else (out_dims,)
    out_shape = tuple(jax.ShapeDtypeStruct((Mp, d), out_dtype) for d in dims)
    out_specs = tuple(pl.BlockSpec((tm, d), lambda i: (i, 0)) for d in dims)

    outs = pl.pallas_call(
        kernel,
        out_shape=out_shape if multi else out_shape[0],
        grid_spec=pltpu.PrefetchScalarGridSpec(
            num_scalar_prefetch=0,
            grid=(Mp // tm,),
            in_specs=in_specs,
            out_specs=out_specs if multi else out_specs[0],
        ),
        compiler_params=pltpu.CompilerParams(
            dimension_semantics=("parallel",),
            vmem_limit_bytes=vmem_limit_bytes),
    )(*row_inputs, *const_inputs)

    if not multi:
        outs = (outs,)
    outs = tuple(o[:M] if Mp != M else o for o in outs)
    return outs if multi else outs[0]


# ---------------------------------------------------------------------------
# Parameter preparation (done ONCE, outside the forward pass)
# ---------------------------------------------------------------------------

def prepare_params(params):
    """Convert nn.Linear-layout (out_features, in_features) weights and 1-D
    LayerNorm params into kernel layout (pre-transposed, q/k/v pre-split,
    biases as (1, -1)).  Call once; avoids per-forward XLA transpose copies."""
    out = []
    for p in params:
        wqkv_t = p["w_qkv"].T                     # (dim, 3*inner)
        inner = wqkv_t.shape[1] // 3
        out.append(dict(
            ln1_g=p["ln1_g"].reshape(1, -1), ln1_b=p["ln1_b"].reshape(1, -1),
            wq=wqkv_t[:, :inner], wk=wqkv_t[:, inner:2 * inner],
            wv=wqkv_t[:, 2 * inner:],
            wo=p["w_out"].T, bo=p["b_out"].reshape(1, -1),
            ln2_g=p["ln2_g"].reshape(1, -1), ln2_b=p["ln2_b"].reshape(1, -1),
            w1=p["w1"].T, b1=p["b1"].reshape(1, -1),
            w2=p["w2"].T, b2=p["b2"].reshape(1, -1),
        ))
    return out


# ---------------------------------------------------------------------------
# Transformer forward
# ---------------------------------------------------------------------------

def transformer_forward(x, kparams, *, heads, dim_head, eps=1e-5,
                        tm_max=256, vmem_limit_bytes=None):
    """x: (B, N, dim); kparams: output of prepare_params (one dict per layer)."""
    B, N, dim = x.shape
    M = B * N
    inner = heads * dim_head
    scale = dim_head ** (-0.5)

    G = _choose_head_group(heads, dim_head)       # heads per attention step
    gw = G * dim_head                             # lane width per attention block
    n_groups = heads // G

    # TODO(synk): project_out=False (heads==1 and dim_head==dim -> Identity) and
    # return_intermediate_outputs are not exercised here; dropout (p=0) is a no-op.

    xr = x.reshape(M, dim)
    for p in kparams:
        # ---- PreNorm + QKV projection (scale folded into q) --------------
        hidden = p["w1"].shape[1]
        q, k, v = _row_tiled_call(
            functools.partial(_ln_qkv_kernel, eps=eps, scale=scale),
            row_inputs=[xr],
            const_inputs=[p["ln1_g"], p["ln1_b"], p["wq"], p["wk"], p["wv"]],
            out_dims=(inner, inner, inner), out_dtype=xr.dtype,
            tm_max=tm_max, vmem_limit_bytes=vmem_limit_bytes)

        # ---- Attention: 2-D (batch, head-group) grid, output in b n (h d) -
        qb = q.reshape(B, N, inner)
        kb = k.reshape(B, N, inner)
        vb = v.reshape(B, N, inner)
        attn = pl.pallas_call(
            functools.partial(_attention_kernel, n_heads=G, dim_head=dim_head),
            out_shape=jax.ShapeDtypeStruct((B, N, inner), x.dtype),
            grid_spec=pltpu.PrefetchScalarGridSpec(
                num_scalar_prefetch=0,
                grid=(B, n_groups),
                in_specs=[pl.BlockSpec((1, N, gw), lambda b, g: (b, 0, g)),
                          pl.BlockSpec((1, N, gw), lambda b, g: (b, 0, g)),
                          pl.BlockSpec((1, N, gw), lambda b, g: (b, 0, g))],
                out_specs=pl.BlockSpec((1, N, gw), lambda b, g: (b, 0, g)),
            ),
            compiler_params=pltpu.CompilerParams(
                dimension_semantics=("parallel", "parallel"),
                vmem_limit_bytes=vmem_limit_bytes),
        )(qb, kb, vb)
        attn = attn.reshape(M, inner)             # contiguous reshape (free)

        # ---- Fused: out-proj + bias + residual + PreNorm + MLP + residual -
        xr = _row_tiled_call(
            functools.partial(_proj_mlp_residual_kernel, eps=eps,
                              hidden_chunk=_choose_hidden_chunk(hidden)),
            row_inputs=[attn, xr],
            const_inputs=[p["wo"], p["bo"], p["ln2_g"], p["ln2_b"],
                          p["w1"], p["b1"], p["w2"], p["b2"]],
            out_dims=dim, out_dtype=xr.dtype,
            tm_max=tm_max, vmem_limit_bytes=vmem_limit_bytes)

    return xr.reshape(B, N, dim)


# ---------------------------------------------------------------------------
# Pure-JAX reference (matches the PyTorch module in eval mode)
# ---------------------------------------------------------------------------

def _reference_transformer(x, params, heads, dim_head, eps=1e-5):
    def ln(y, g, b):
        m = jnp.mean(y, -1, keepdims=True)
        v = jnp.mean((y - m) ** 2, -1, keepdims=True)
        return (y - m) / jnp.sqrt(v + eps) * g + b

    scale = dim_head ** (-0.5)
    B, N, dim = x.shape
    for p in params:
        h = ln(x, p["ln1_g"], p["ln1_b"])
        qkv = h @ p["w_qkv"].T
        qkv = qkv.reshape(B, N, 3, heads, dim_head)
        q, k, v = (jnp.transpose(qkv[:, :, i], (0, 2, 1, 3)) for i in range(3))
        s = jnp.einsum("bhqd,bhkd->bhqk", q, k) * scale
        a = jax.nn.softmax(s, axis=-1)
        o = jnp.einsum("bhqk,bhkd->bhqd", a, v)
        o = jnp.transpose(o, (0, 2, 1, 3)).reshape(B, N, heads * dim_head)
        x = o @ p["w_out"].T + p["b_out"] + x
        h = ln(x, p["ln2_g"], p["ln2_b"])
        u = jax.nn.gelu(h @ p["w1"].T + p["b1"], approximate=False)
        x = u @ p["w2"].T + p["b2"] + x
    return x


# ---------------------------------------------------------------------------
# Self-test
# ---------------------------------------------------------------------------

def _init_linear(key, out_f, in_f, bias=True):
    kw, kb = jax.random.split(key)
    bound = 1.0 / (in_f ** 0.5)
    w = jax.random.uniform(kw, (out_f, in_f), jnp.float32, -bound, bound)
    b = (jax.random.uniform(kb, (out_f,), jnp.float32, -bound, bound)
         if bias else None)
    return w, b


if __name__ == "__main__":
    # Small shapes consistent with the module:
    #   batch=2, num_patches=8, dim=32, heads=4, dim_head=8, mlp_dim=64, depth=2
    B, N, dim = 2, 8, 32
    heads, dim_head, mlp_dim, depth = 4, 8, 64, 2
    inner = heads * dim_head

    key = jax.random.PRNGKey(0)
    key, kx = jax.random.split(key)
    x = jax.random.normal(kx, (B, N, dim), jnp.float32)

    params = []
    for _ in range(depth):
        key, k1, k2, k3, k4, k5, k6, k7, k8 = jax.random.split(key, 9)
        w_qkv, _ = _init_linear(k1, 3 * inner, dim, bias=False)
        w_out, b_out = _init_linear(k2, dim, inner)
        w1, b1 = _init_linear(k3, mlp_dim, dim)
        w2, b2 = _init_linear(k4, dim, mlp_dim)
        params.append(dict(
            ln1_g=1.0 + 0.05 * jax.random.normal(k5, (dim,), jnp.float32),
            ln1_b=0.05 * jax.random.normal(k6, (dim,), jnp.float32),
            w_qkv=w_qkv, w_out=w_out, b_out=b_out,
            ln2_g=1.0 + 0.05 * jax.random.normal(k7, (dim,), jnp.float32),
            ln2_b=0.05 * jax.random.normal(k8, (dim,), jnp.float32),
            w1=w1, b1=b1, w2=w2, b2=b2,
        ))

    kparams = prepare_params(params)              # one-time layout conversion

    fwd = jax.jit(functools.partial(transformer_forward,
                                    heads=heads, dim_head=dim_head))
    out = jax.block_until_ready(fwd(x, kparams))

    ref = _reference_transformer(x, params, heads, dim_head)
    assert out.shape == (B, N, dim)
    max_err = float(jnp.max(jnp.abs(out - ref)))
    assert jnp.allclose(out, ref, atol=1e-3, rtol=1e-3), f"max_err={max_err}"
    print("KERNEL_OK")
</pallas_src>

<mosaic_0001>
module attributes {stable_mosaic.version = 11 : i64} {
  func.func @_ln_qkv_kernel(%arg0: i32, %arg1: memref<16x32xf32, #tpu.memory_space<vmem>>, %arg2: memref<1x32xf32, #tpu.memory_space<vmem>>, %arg3: memref<1x32xf32, #tpu.memory_space<vmem>>, %arg4: memref<32x32xf32, #tpu.memory_space<vmem>>, %arg5: memref<32x32xf32, #tpu.memory_space<vmem>>, %arg6: memref<32x32xf32, #tpu.memory_space<vmem>>, %arg7: memref<16x32xf32, #tpu.memory_space<vmem>>, %arg8: memref<16x32xf32, #tpu.memory_space<vmem>>, %arg9: memref<16x32xf32, #tpu.memory_space<vmem>>) attributes {dimension_semantics = [#tpu.dimension_semantics<parallel>], iteration_bounds = array<i64: 1>, scalar_prefetch = 0 : i64, scratch_operands = 0 : i64, tpu.core_type = #tpu.core_type<tc>, window_params = [{transform_indices = @transform_0, window_bounds = array<i64: 16, 32>}, {pipeline_mode = #tpu.pipeline_mode<synchronous>, transform_indices = @transform_1, window_bounds = array<i64: 1, 32>}, {pipeline_mode = #tpu.pipeline_mode<synchronous>, transform_indices = @transform_2, window_bounds = array<i64: 1, 32>}, {pipeline_mode = #tpu.pipeline_mode<synchronous>, transform_indices = @transform_3, window_bounds = array<i64: 32, 32>}, {pipeline_mode = #tpu.pipeline_mode<synchronous>, transform_indices = @transform_4, window_bounds = array<i64: 32, 32>}, {pipeline_mode = #tpu.pipeline_mode<synchronous>, transform_indices = @transform_5, window_bounds = array<i64: 32, 32>}, {transform_indices = @transform_6, window_bounds = array<i64: 16, 32>}, {transform_indices = @transform_7, window_bounds = array<i64: 16, 32>}, {transform_indices = @transform_8, window_bounds = array<i64: 16, 32>}]} {
    %c0 = arith.constant 0 : index
    %c0_0 = arith.constant 0 : index
    %0 = vector.load %arg1[%c0, %c0_0] : memref<16x32xf32, #tpu.memory_space<vmem>>, vector<16x32xf32>
    %c0_1 = arith.constant 0 : index
    %c0_2 = arith.constant 0 : index
    %1 = vector.load %arg2[%c0_1, %c0_2] : memref<1x32xf32, #tpu.memory_space<vmem>>, vector<1x32xf32>
    %c0_3 = arith.constant 0 : index
    %c0_4 = arith.constant 0 : index
    %2 = vector.load %arg3[%c0_3, %c0_4] : memref<1x32xf32, #tpu.memory_space<vmem>>, vector<1x32xf32>
    %cst = arith.constant dense<0.000000e+00> : vector<16xf32>
    %3 = vector.multi_reduction <add>, %0, %cst [1] : vector<16x32xf32> to vector<16xf32>
    %4 = vector.shape_cast %3 : vector<16xf32> to vector<16x1xf32>
    %cst_5 = arith.constant 3.200000e+01 : f32
    %5 = vector.broadcast %cst_5 : f32 to vector<16x1xf32>
    %6 = arith.divf %4, %5 : vector<16x1xf32>
    %7 = vector.broadcast %6 : vector<16x1xf32> to vector<16x32xf32>
    %8 = arith.subf %0, %7 : vector<16x32xf32>
    %9 = arith.mulf %8, %8 : vector<16x32xf32>
    %cst_6 = arith.constant dense<0.000000e+00> : vector<16xf32>
    %10 = vector.multi_reduction <add>, %9, %cst_6 [1] : vector<16x32xf32> to vector<16xf32>
    %11 = vector.shape_cast %10 : vector<16xf32> to vector<16x1xf32>
    %cst_7 = arith.constant 3.200000e+01 : f32
    %12 = vector.broadcast %cst_7 : f32 to vector<16x1xf32>
    %13 = arith.divf %11, %12 : vector<16x1xf32>
    %14 = vector.broadcast %6 : vector<16x1xf32> to vector<16x32xf32>
    %15 = arith.subf %0, %14 : vector<16x32xf32>
    %cst_8 = arith.constant 9.99999974E-6 : f32
    %16 = vector.broadcast %cst_8 : f32 to vector<16x1xf32>
    %17 = arith.addf %13, %16 : vector<16x1xf32>
    %18 = math.rsqrt %17 : vector<16x1xf32>
    %19 = vector.broadcast %18 : vector<16x1xf32> to vector<16x32xf32>
    %20 = arith.mulf %15, %19 : vector<16x32xf32>
    %21 = vector.broadcast %1 : vector<1x32xf32> to vector<16x32xf32>
    %22 = arith.mulf %20, %21 : vector<16x32xf32>
    %23 = vector.broadcast %2 : vector<1x32xf32> to vector<16x32xf32>
    %24 = arith.addf %22, %23 : vector<16x32xf32>
    %c0_9 = arith.constant 0 : index
    %c0_10 = arith.constant 0 : index
    %25 = vector.load %arg4[%c0_9, %c0_10] : memref<32x32xf32, #tpu.memory_space<vmem>>, vector<32x32xf32>
    %cst_11 = arith.constant dense<0.000000e+00> : vector<16x32xf32>
    %26 = tpu.matmul %24, %25, %cst_11 {dimension_numbers = #tpu.dot_dimension_numbers<[1], [0], [0], [1], [0, 0, 1, 1], [], []>} : vector<16x32xf32>, vector<32x32xf32>, vector<16x32xf32> -> vector<16x32xf32>
    %cst_12 = arith.constant 0.353553385 : f32
    %27 = vector.broadcast %cst_12 : f32 to vector<16x32xf32>
    %28 = arith.mulf %26, %27 : vector<16x32xf32>
    %c0_13 = arith.constant 0 : index
    %c0_14 = arith.constant 0 : index
    %29 = vector.load %arg7[%c0_13, %c0_14] : memref<16x32xf32, #tpu.memory_space<vmem>>, vector<16x32xf32>
    tpu.vector_store %arg7[%c0_13, %c0_14], %28 {strides = array<i32>} : memref<16x32xf32, #tpu.memory_space<vmem>>, vector<16x32xf32>,
    %c0_15 = arith.constant 0 : index
    %c0_16 = arith.constant 0 : index
    %30 = vector.load %arg5[%c0_15, %c0_16] : memref<32x32xf32, #tpu.memory_space<vmem>>, vector<32x32xf32>
    %cst_17 = arith.constant dense<0.000000e+00> : vector<16x32xf32>
    %31 = tpu.matmul %24, %30, %cst_17 {dimension_numbers = #tpu.dot_dimension_numbers<[1], [0], [0], [1], [0, 0, 1, 1], [], []>} : vector<16x32xf32>, vector<32x32xf32>, vector<16x32xf32> -> vector<16x32xf32>
    %c0_18 = arith.constant 0 : index
    %c0_19 = arith.constant 0 : index
    %32 = vector.load %arg8[%c0_18, %c0_19] : memref<16x32xf32, #tpu.memory_space<vmem>>, vector<16x32xf32>
    tpu.vector_store %arg8[%c0_18, %c0_19], %31 {strides = array<i32>} : memref<16x32xf32, #tpu.memory_space<vmem>>, vector<16x32xf32>,
    %c0_20 = arith.constant 0 : index
    %c0_21 = arith.constant 0 : index
    %33 = vector.load %arg6[%c0_20, %c0_21] : memref<32x32xf32, #tpu.memory_space<vmem>>, vector<32x32xf32>
    %cst_22 = arith.constant dense<0.000000e+00> : vector<16x32xf32>
    %34 = tpu.matmul %24, %33, %cst_22 {dimension_numbers = #tpu.dot_dimension_numbers<[1], [0], [0], [1], [0, 0, 1, 1], [], []>} : vector<16x32xf32>, vector<32x32xf32>, vector<16x32xf32> -> vector<16x32xf32>
    %c0_23 = arith.constant 0 : index
    %c0_24 = arith.constant 0 : index
    %35 = vector.load %arg9[%c0_23, %c0_24] : memref<16x32xf32, #tpu.memory_space<vmem>>, vector<16x32xf32>
    tpu.vector_store %arg9[%c0_23, %c0_24], %34 {strides = array<i32>} : memref<16x32xf32, #tpu.memory_space<vmem>>, vector<16x32xf32>,
    return
  }
  func.func @transform_0(%arg0: i32) -> (i32, i32) {
    %c0_i32 = arith.constant 0 : i32
    %c0_i32_0 = arith.constant 0 : i32
    return %arg0, %c0_i32 : i32, i32
  }
  func.func @transform_1(%arg0: i32) -> (i32, i32) {
    %c0_i32 = arith.constant 0 : i32
    %c0_i32_0 = arith.constant 0 : i32
    %c0_i32_1 = arith.constant 0 : i32
    return %c0_i32, %c0_i32_0 : i32, i32
  }
  func.func @transform_2(%arg0: i32) -> (i32, i32) {
    %c0_i32 = arith.constant 0 : i32
    %c0_i32_0 = arith.constant 0 : i32
    %c0_i32_1 = arith.constant 0 : i32
    return %c0_i32, %c0_i32_0 : i32, i32
  }
  func.func @transform_3(%arg0: i32) -> (i32, i32) {
    %c0_i32 = arith.constant 0 : i32
    %c0_i32_0 = arith.constant 0 : i32
    %c0_i32_1 = arith.constant 0 : i32
    return %c0_i32, %c0_i32_0 : i32, i32
  }
  func.func @transform_4(%arg0: i32) -> (i32, i32) {
    %c0_i32 = arith.constant 0 : i32
    %c0_i32_0 = arith.constant 0 : i32
    %c0_i32_1 = arith.constant 0 : i32
    return %c0_i32, %c0_i32_0 : i32, i32
  }
  func.func @transform_5(%arg0: i32) -> (i32, i32) {
    %c0_i32 = arith.constant 0 : i32
    %c0_i32_0 = arith.constant 0 : i32
    %c0_i32_1 = arith.constant 0 : i32
    return %c0_i32, %c0_i32_0 : i32, i32
  }
  func.func @transform_6(%arg0: i32) -> (i32, i32) {
    %c0_i32 = arith.constant 0 : i32
    %c0_i32_0 = arith.constant 0 : i32
    return %arg0, %c0_i32 : i32, i32
  }
  func.func @transform_7(%arg0: i32) -> (i32, i32) {
    %c0_i32 = arith.constant 0 : i32
    %c0_i32_0 = arith.constant 0 : i32
    return %arg0, %c0_i32 : i32, i32
  }
  func.func @transform_8(%arg0: i32) -> (i32, i32) {
    %c0_i32 = arith.constant 0 : i32
    %c0_i32_0 = arith.constant 0 : i32
    return %arg0, %c0_i32 : i32, i32
  }
}

module attributes {stable_mosaic.version = 11 : i64} {
  func.func @_attention_kernel(%arg0: i32, %arg1: i32, %arg2: memref<1x8x32xf32, #tpu.memory_space<vmem>>, %arg3: memref<1x8x32xf32, #tpu.memory_space<vmem>>, %arg4: memref<1x8x32xf32, #tpu.memory_space<vmem>>, %arg5: memref<1x8x32xf32, #tpu.memory_space<vmem>>) attributes {dimension_semantics = [#tpu.dimension_semantics<parallel>, #tpu.dimension_semantics<parallel>], iteration_bounds = array<i64: 2, 1>, scalar_prefetch = 0 : i64, scratch_operands = 0 : i64, tpu.core_type = #tpu.core_type<tc>, window_params = [{transform_indices = @transform_0, window_bounds = array<i64: 1, 8, 32>}, {transform_indices = @transform_1, window_bounds = array<i64: 1, 8, 32>}, {transform_indices = @transform_2, window_bounds = array<i64: 1, 8, 32>}, {transform_indices = @transform_3, window_bounds = array<i64: 1, 8, 32>}]} {
    %c0 = arith.constant 0 : index
    %c0_0 = arith.constant 0 : index
    %c0_1 = arith.constant 0 : index
    %0 = vector.load %arg2[%c0, %c0_0, %c0_1] : memref<1x8x32xf32, #tpu.memory_space<vmem>>, vector<1x8x32xf32>
    %1 = vector.shape_cast %0 : vector<1x8x32xf32> to vector<8x32xf32>
    %c0_2 = arith.constant 0 : index
    %c0_3 = arith.constant 0 : index
    %c0_4 = arith.constant 0 : index
    %2 = vector.load %arg3[%c0_2, %c0_3, %c0_4] : memref<1x8x32xf32, #tpu.memory_space<vmem>>, vector<1x8x32xf32>
    %3 = vector.shape_cast %2 : vector<1x8x32xf32> to vector<8x32xf32>
    %c0_5 = arith.constant 0 : index
    %c0_6 = arith.constant 0 : index
    %c0_7 = arith.constant 0 : index
    %4 = vector.load %arg4[%c0_5, %c0_6, %c0_7] : memref<1x8x32xf32, #tpu.memory_space<vmem>>, vector<1x8x32xf32>
    %5 = vector.shape_cast %4 : vector<1x8x32xf32> to vector<8x32xf32>
    %6 = vector.extract_strided_slice %1 {offsets = [0, 0], sizes = [8, 8], strides = [1, 1]} : vector<8x32xf32> to vector<8x8xf32>
    %7 = vector.extract_strided_slice %3 {offsets = [0, 0], sizes = [8, 8], strides = [1, 1]} : vector<8x32xf32> to vector<8x8xf32>
    %cst = arith.constant dense<0.000000e+00> : vector<8x8xf32>
    %8 = tpu.matmul %6, %7, %cst {dimension_numbers = #tpu.dot_dimension_numbers<[1], [1], [0], [0], [0, 0, 1, 0], [], []>} : vector<8x8xf32>, vector<8x8xf32>, vector<8x8xf32> -> vector<8x8xf32>
    %cst_8 = arith.constant dense<0xFF800000> : vector<8xf32>
    %9 = vector.multi_reduction <maximumf>, %8, %cst_8 [1] : vector<8x8xf32> to vector<8xf32>
    %10 = vector.shape_cast %9 : vector<8xf32> to vector<8x1xf32>
    %11 = vector.broadcast %10 : vector<8x1xf32> to vector<8x8xf32>
    %12 = arith.subf %8, %11 : vector<8x8xf32>
    %13 = math.exp %12 : vector<8x8xf32>
    %cst_9 = arith.constant dense<0.000000e+00> : vector<8xf32>
    %14 = vector.multi_reduction <add>, %13, %cst_9 [1] : vector<8x8xf32> to vector<8xf32>
    %15 = vector.shape_cast %14 : vector<8xf32> to vector<8x1xf32>
    %16 = vector.extract_strided_slice %5 {offsets = [0, 0], sizes = [8, 8], strides = [1, 1]} : vector<8x32xf32> to vector<8x8xf32>
    %cst_10 = arith.constant dense<0.000000e+00> : vector<8x8xf32>
    %17 = tpu.matmul %13, %16, %cst_10 {dimension_numbers = #tpu.dot_dimension_numbers<[1], [0], [0], [1], [0, 0, 1, 1], [], []>} : vector<8x8xf32>, vector<8x8xf32>, vector<8x8xf32> -> vector<8x8xf32>
    %cst_11 = arith.constant 1.000000e+00 : f32
    %18 = vector.broadcast %cst_11 : f32 to vector<8x1xf32>
    %19 = arith.divf %18, %15 : vector<8x1xf32>
    %20 = vector.broadcast %19 : vector<8x1xf32> to vector<8x8xf32>
    %21 = arith.mulf %17, %20 : vector<8x8xf32>
    %22 = vector.extract_strided_slice %1 {offsets = [0, 8], sizes = [8, 8], strides = [1, 1]} : vector<8x32xf32> to vector<8x8xf32>
    %23 = vector.extract_strided_slice %3 {offsets = [0, 8], sizes = [8, 8], strides = [1, 1]} : vector<8x32xf32> to vector<8x8xf32>
    %cst_12 = arith.constant dense<0.000000e+00> : vector<8x8xf32>
    %24 = tpu.matmul %22, %23, %cst_12 {dimension_numbers = #tpu.dot_dimension_numbers<[1], [1], [0], [0], [0, 0, 1, 0], [], []>} : vector<8x8xf32>, vector<8x8xf32>, vector<8x8xf32> -> vector<8x8xf32>
    %cst_13 = arith.constant dense<0xFF800000> : vector<8xf32>
    %25 = vector.multi_reduction <maximumf>, %24, %cst_13 [1] : vector<8x8xf32> to vector<8xf32>
    %26 = vector.shape_cast %25 : vector<8xf32> to vector<8x1xf32>
    %27 = vector.broadcast %26 : vector<8x1xf32> to vector<8x8xf32>
    %28 = arith.subf %24, %27 : vector<8x8xf32>
    %29 = math.exp %28 : vector<8x8xf32>
    %cst_14 = arith.constant dense<0.000000e+00> : vector<8xf32>
    %30 = vector.multi_reduction <add>, %29, %cst_14 [1] : vector<8x8xf32> to vector<8xf32>
    %31 = vector.shape_cast %30 : vector<8xf32> to vector<8x1xf32>
    %32 = vector.extract_strided_slice %5 {offsets = [0, 8], sizes = [8, 8], strides = [1, 1]} : vector<8x32xf32> to vector<8x8xf32>
    %cst_15 = arith.constant dense<0.000000e+00> : vector<8x8xf32>
    %33 = tpu.matmul %29, %32, %cst_15 {dimension_numbers = #tpu.dot_dimension_numbers<[1], [0], [0], [1], [0, 0, 1, 1], [], []>} : vector<8x8xf32>, vector<8x8xf32>, vector<8x8xf32> -> vector<8x8xf32>
    %cst_16 = arith.constant 1.000000e+00 : f32
    %34 = vector.broadcast %cst_16 : f32 to vector<8x1xf32>
    %35 = arith.divf %34, %31 : vector<8x1xf32>
    %36 = vector.broadcast %35 : vector<8x1xf32> to vector<8x8xf32>
    %37 = arith.mulf %33, %36 : vector<8x8xf32>
    %38 = vector.extract_strided_slice %1 {offsets = [0, 16], sizes = [8, 8], strides = [1, 1]} : vector<8x32xf32> to vector<8x8xf32>
    %39 = vector.extract_strided_slice %3 {offsets = [0, 16], sizes = [8, 8], strides = [1, 1]} : vector<8x32xf32> to vector<8x8xf32>
    %cst_17 = arith.constant dense<0.000000e+00> : vector<8x8xf32>
    %40 = tpu.matmul %38, %39, %cst_17 {dimension_numbers = #tpu.dot_dimension_numbers<[1], [1], [0], [0], [0, 0, 1, 0], [], []>} : vector<8x8xf32>, vector<8x8xf32>, vector<8x8xf32> -> vector<8x8xf32>
    %cst_18 = arith.constant dense<0xFF800000> : vector<8xf32>
    %41 = vector.multi_reduction <maximumf>, %40, %cst_18 [1] : vector<8x8xf32> to vector<8xf32>
    %42 = vector.shape_cast %41 : vector<8xf32> to vector<8x1xf32>
    %43 = vector.broadcast %42 : vector<8x1xf32> to vector<8x8xf32>
    %44 = arith.subf %40, %43 : vector<8x8xf32>
    %45 = math.exp %44 : vector<8x8xf32>
    %cst_19 = arith.constant dense<0.000000e+00> : vector<8xf32>
    %46 = vector.multi_reduction <add>, %45, %cst_19 [1] : vector<8x8xf32> to vector<8xf32>
    %47 = vector.shape_cast %46 : vector<8xf32> to vector<8x1xf32>
    %48 = vector.extract_strided_slice %5 {offsets = [0, 16], sizes = [8, 8], strides = [1, 1]} : vector<8x32xf32> to vector<8x8xf32>
    %cst_20 = arith.constant dense<0.000000e+00> : vector<8x8xf32>
    %49 = tpu.matmul %45, %48, %cst_20 {dimension_numbers = #tpu.dot_dimension_numbers<[1], [0], [0], [1], [0, 0, 1, 1], [], []>} : vector<8x8xf32>, vector<8x8xf32>, vector<8x8xf32> -> vector<8x8xf32>
    %cst_21 = arith.constant 1.000000e+00 : f32
    %50 = vector.broadcast %cst_21 : f32 to vector<8x1xf32>
    %51 = arith.divf %50, %47 : vector<8x1xf32>
    %52 = vector.broadcast %51 : vector<8x1xf32> to vector<8x8xf32>
    %53 = arith.mulf %49, %52 : vector<8x8xf32>
    %54 = vector.extract_strided_slice %1 {offsets = [0, 24], sizes = [8, 8], strides = [1, 1]} : vector<8x32xf32> to vector<8x8xf32>
    %55 = vector.extract_strided_slice %3 {offsets = [0, 24], sizes = [8, 8], strides = [1, 1]} : vector<8x32xf32> to vector<8x8xf32>
    %cst_22 = arith.constant dense<0.000000e+00> : vector<8x8xf32>
    %56 = tpu.matmul %54, %55, %cst_22 {dimension_numbers = #tpu.dot_dimension_numbers<[1], [1], [0], [0], [0, 0, 1, 0], [], []>} : vector<8x8xf32>, vector<8x8xf32>, vector<8x8xf32> -> vector<8x8xf32>
    %cst_23 = arith.constant dense<0xFF800000> : vector<8xf32>
    %57 = vector.multi_reduction <maximumf>, %56, %cst_23 [1] : vector<8x8xf32> to vector<8xf32>
    %58 = vector.shape_cast %57 : vector<8xf32> to vector<8x1xf32>
    %59 = vector.broadcast %58 : vector<8x1xf32> to vector<8x8xf32>
    %60 = arith.subf %56, %59 : vector<8x8xf32>
    %61 = math.exp %60 : vector<8x8xf32>
    %cst_24 = arith.constant dense<0.000000e+00> : vector<8xf32>
    %62 = vector.multi_reduction <add>, %61, %cst_24 [1] : vector<8x8xf32> to vector<8xf32>
    %63 = vector.shape_cast %62 : vector<8xf32> to vector<8x1xf32>
    %64 = vector.extract_strided_slice %5 {offsets = [0, 24], sizes = [8, 8], strides = [1, 1]} : vector<8x32xf32> to vector<8x8xf32>
    %cst_25 = arith.constant dense<0.000000e+00> : vector<8x8xf32>
    %65 = tpu.matmul %61, %64, %cst_25 {dimension_numbers = #tpu.dot_dimension_numbers<[1], [0], [0], [1], [0, 0, 1, 1], [], []>} : vector<8x8xf32>, vector<8x8xf32>, vector<8x8xf32> -> vector<8x8xf32>
    %cst_26 = arith.constant 1.000000e+00 : f32
    %66 = vector.broadcast %cst_26 : f32 to vector<8x1xf32>
    %67 = arith.divf %66, %63 : vector<8x1xf32>
    %68 = vector.broadcast %67 : vector<8x1xf32> to vector<8x8xf32>
    %69 = arith.mulf %65, %68 : vector<8x8xf32>
    %70 = tpu.concatenate %21, %37, %53, %69 in 1 : vector<8x8xf32>, vector<8x8xf32>, vector<8x8xf32>, vector<8x8xf32> -> vector<8x32xf32>
    %c0_27 = arith.constant 0 : index
    %c0_28 = arith.constant 0 : index
    %c0_29 = arith.constant 0 : index
    %71 = vector.load %arg5[%c0_27, %c0_28, %c0_29] : memref<1x8x32xf32, #tpu.memory_space<vmem>>, vector<1x8x32xf32>
    %72 = vector.shape_cast %71 : vector<1x8x32xf32> to vector<8x32xf32>
    %73 = vector.shape_cast %70 : vector<8x32xf32> to vector<1x8x32xf32>
    tpu.vector_store %arg5[%c0_27, %c0_28, %c0_29], %73 {strides = array<i32>} : memref<1x8x32xf32, #tpu.memory_space<vmem>>, vector<1x8x32xf32>,
    return
  }
  func.func @transform_0(%arg0: i32, %arg1: i32) -> (i32, i32, i32) {
    %c0_i32 = arith.constant 0 : i32
    %c0_i32_0 = arith.constant 0 : i32
    return %arg0, %c0_i32, %arg1 : i32, i32, i32
  }
  func.func @transform_1(%arg0: i32, %arg1: i32) -> (i32, i32, i32) {
    %c0_i32 = arith.constant 0 : i32
    %c0_i32_0 = arith.constant 0 : i32
    return %arg0, %c0_i32, %arg1 : i32, i32, i32
  }
  func.func @transform_2(%arg0: i32, %arg1: i32) -> (i32, i32, i32) {
    %c0_i32 = arith.constant 0 : i32
    %c0_i32_0 = arith.constant 0 : i32
    return %arg0, %c0_i32, %arg1 : i32, i32, i32
  }
  func.func @transform_3(%arg0: i32, %arg1: i32) -> (i32, i32, i32) {
    %c0_i32 = arith.constant 0 : i32
    %c0_i32_0 = arith.constant 0 : i32
    return %arg0, %c0_i32, %arg1 : i32, i32, i32
  }
}

module attributes {stable_mosaic.version = 11 : i64} {
  func.func @_proj_mlp_residual_kernel(%arg0: i32, %arg1: memref<16x32xf32, #tpu.memory_space<vmem>>, %arg2: memref<16x32xf32, #tpu.memory_space<vmem>>, %arg3: memref<32x32xf32, #tpu.memory_space<vmem>>, %arg4: memref<1x32xf32, #tpu.memory_space<vmem>>, %arg5: memref<1x32xf32, #tpu.memory_space<vmem>>, %arg6: memref<1x32xf32, #tpu.memory_space<vmem>>, %arg7: memref<32x64xf32, #tpu.memory_space<vmem>>, %arg8: memref<1x64xf32, #tpu.memory_space<vmem>>, %arg9: memref<64x32xf32, #tpu.memory_space<vmem>>, %arg10: memref<1x32xf32, #tpu.memory_space<vmem>>, %arg11: memref<16x32xf32, #tpu.memory_space<vmem>>) attributes {dimension_semantics = [#tpu.dimension_semantics<parallel>], iteration_bounds = array<i64: 1>, scalar_prefetch = 0 : i64, scratch_operands = 0 : i64, tpu.core_type = #tpu.core_type<tc>, window_params = [{transform_indices = @transform_0, window_bounds = array<i64: 16, 32>}, {transform_indices = @transform_1, window_bounds = array<i64: 16, 32>}, {pipeline_mode = #tpu.pipeline_mode<synchronous>, transform_indices = @transform_2, window_bounds = array<i64: 32, 32>}, {pipeline_mode = #tpu.pipeline_mode<synchronous>, transform_indices = @transform_3, window_bounds = array<i64: 1, 32>}, {pipeline_mode = #tpu.pipeline_mode<synchronous>, transform_indices = @transform_4, window_bounds = array<i64: 1, 32>}, {pipeline_mode = #tpu.pipeline_mode<synchronous>, transform_indices = @transform_5, window_bounds = array<i64: 1, 32>}, {pipeline_mode = #tpu.pipeline_mode<synchronous>, transform_indices = @transform_6, window_bounds = array<i64: 32, 64>}, {pipeline_mode = #tpu.pipeline_mode<synchronous>, transform_indices = @transform_7, window_bounds = array<i64: 1, 64>}, {pipeline_mode = #tpu.pipeline_mode<synchronous>, transform_indices = @transform_8, window_bounds = array<i64: 64, 32>}, {pipeline_mode = #tpu.pipeline_mode<synchronous>, transform_indices = @transform_9, window_bounds = array<i64: 1, 32>}, {transform_indices = @transform_10, window_bounds = array<i64: 16, 32>}]} {
    %c0 = arith.constant 0 : index
    %c0_0 = arith.constant 0 : index
    %0 = vector.load %arg1[%c0, %c0_0] : memref<16x32xf32, #tpu.memory_space<vmem>>, vector<16x32xf32>
    %c0_1 = arith.constant 0 : index
    %c0_2 = arith.constant 0 : index
    %1 = vector.load %arg3[%c0_1, %c0_2] : memref<32x32xf32, #tpu.memory_space<vmem>>, vector<32x32xf32>
    %cst = arith.constant dense<0.000000e+00> : vector<16x32xf32>
    %2 = tpu.matmul %0, %1, %cst {dimension_numbers = #tpu.dot_dimension_numbers<[1], [0], [0], [1], [0, 0, 1, 1], [], []>} : vector<16x32xf32>, vector<32x32xf32>, vector<16x32xf32> -> vector<16x32xf32>
    %c0_3 = arith.constant 0 : index
    %c0_4 = arith.constant 0 : index
    %3 = vector.load %arg4[%c0_3, %c0_4] : memref<1x32xf32, #tpu.memory_space<vmem>>, vector<1x32xf32>
    %4 = vector.broadcast %3 : vector<1x32xf32> to vector<16x32xf32>
    %5 = arith.addf %2, %4 : vector<16x32xf32>
    %c0_5 = arith.constant 0 : index
    %c0_6 = arith.constant 0 : index
    %6 = vector.load %arg2[%c0_5, %c0_6] : memref<16x32xf32, #tpu.memory_space<vmem>>, vector<16x32xf32>
    %7 = arith.addf %5, %6 : vector<16x32xf32>
    %c0_7 = arith.constant 0 : index
    %c0_8 = arith.constant 0 : index
    %8 = vector.load %arg5[%c0_7, %c0_8] : memref<1x32xf32, #tpu.memory_space<vmem>>, vector<1x32xf32>
    %c0_9 = arith.constant 0 : index
    %c0_10 = arith.constant 0 : index
    %9 = vector.load %arg6[%c0_9, %c0_10] : memref<1x32xf32, #tpu.memory_space<vmem>>, vector<1x32xf32>
    %cst_11 = arith.constant dense<0.000000e+00> : vector<16xf32>
    %10 = vector.multi_reduction <add>, %7, %cst_11 [1] : vector<16x32xf32> to vector<16xf32>
    %11 = vector.shape_cast %10 : vector<16xf32> to vector<16x1xf32>
    %cst_12 = arith.constant 3.200000e+01 : f32
    %12 = vector.broadcast %cst_12 : f32 to vector<16x1xf32>
    %13 = arith.divf %11, %12 : vector<16x1xf32>
    %14 = vector.broadcast %13 : vector<16x1xf32> to vector<16x32xf32>
    %15 = arith.subf %7, %14 : vector<16x32xf32>
    %16 = arith.mulf %15, %15 : vector<16x32xf32>
    %cst_13 = arith.constant dense<0.000000e+00> : vector<16xf32>
    %17 = vector.multi_reduction <add>, %16, %cst_13 [1] : vector<16x32xf32> to vector<16xf32>
    %18 = vector.shape_cast %17 : vector<16xf32> to vector<16x1xf32>
    %cst_14 = arith.constant 3.200000e+01 : f32
    %19 = vector.broadcast %cst_14 : f32 to vector<16x1xf32>
    %20 = arith.divf %18, %19 : vector<16x1xf32>
    %21 = vector.broadcast %13 : vector<16x1xf32> to vector<16x32xf32>
    %22 = arith.subf %7, %21 : vector<16x32xf32>
    %cst_15 = arith.constant 9.99999974E-6 : f32
    %23 = vector.broadcast %cst_15 : f32 to vector<16x1xf32>
    %24 = arith.addf %20, %23 : vector<16x1xf32>
    %25 = math.rsqrt %24 : vector<16x1xf32>
    %26 = vector.broadcast %25 : vector<16x1xf32> to vector<16x32xf32>
    %27 = arith.mulf %22, %26 : vector<16x32xf32>
    %28 = vector.broadcast %8 : vector<1x32xf32> to vector<16x32xf32>
    %29 = arith.mulf %27, %28 : vector<16x32xf32>
    %30 = vector.broadcast %9 : vector<1x32xf32> to vector<16x32xf32>
    %31 = arith.addf %29, %30 : vector<16x32xf32>
    %c0_16 = arith.constant 0 : index
    %c0_17 = arith.constant 0 : index
    %32 = vector.load %arg10[%c0_16, %c0_17] : memref<1x32xf32, #tpu.memory_space<vmem>>, vector<1x32xf32>
    %33 = vector.broadcast %32 : vector<1x32xf32> to vector<16x32xf32>
    %34 = arith.addf %7, %33 : vector<16x32xf32>
    %c0_18 = arith.constant 0 : index
    %c0_19 = arith.constant 0 : index
    %35 = vector.load %arg7[%c0_18, %c0_19] : memref<32x64xf32, #tpu.memory_space<vmem>>, vector<32x64xf32>
    %cst_20 = arith.constant dense<0.000000e+00> : vector<16x64xf32>
    %36 = tpu.matmul %31, %35, %cst_20 {dimension_numbers = #tpu.dot_dimension_numbers<[1], [0], [0], [1], [0, 0, 1, 1], [], []>} : vector<16x32xf32>, vector<32x64xf32>, vector<16x64xf32> -> vector<16x64xf32>
    %c0_21 = arith.constant 0 : index
    %c0_22 = arith.constant 0 : index
    %37 = vector.load %arg8[%c0_21, %c0_22] : memref<1x64xf32, #tpu.memory_space<vmem>>, vector<1x64xf32>
    %38 = vector.broadcast %37 : vector<1x64xf32> to vector<16x64xf32>
    %39 = arith.addf %36, %38 : vector<16x64xf32>
    %cst_23 = arith.constant 5.000000e-01 : f32
    %40 = vector.broadcast %cst_23 : f32 to vector<16x64xf32>
    %41 = arith.mulf %40, %39 : vector<16x64xf32>
    %cst_24 = arith.constant 0.707106769 : f32
    %42 = vector.broadcast %cst_24 : f32 to vector<16x64xf32>
    %43 = arith.mulf %39, %42 : vector<16x64xf32>
    %44 = math.absf %43 : vector<16x64xf32>
    %cst_25 = arith.constant 0.327591091 : f32
    %45 = vector.broadcast %cst_25 : f32 to vector<16x64xf32>
    %46 = arith.mulf %45, %44 : vector<16x64xf32>
    %cst_26 = arith.constant 1.000000e+00 : f32
    %47 = vector.broadcast %cst_26 : f32 to vector<16x64xf32>
    %48 = arith.addf %47, %46 : vector<16x64xf32>
    %cst_27 = arith.constant 1.000000e+00 : f32
    %49 = vector.broadcast %cst_27 : f32 to vector<16x64xf32>
    %50 = arith.divf %49, %48 : vector<16x64xf32>
    %cst_28 = arith.constant 1.06140542 : f32
    %51 = vector.broadcast %cst_28 : f32 to vector<16x64xf32>
    %52 = arith.mulf %51, %50 : vector<16x64xf32>
    %cst_29 = arith.constant -1.45315206 : f32
    %53 = vector.broadcast %cst_29 : f32 to vector<16x64xf32>
    %54 = arith.addf %52, %53 : vector<16x64xf32>
    %55 = arith.mulf %54, %50 : vector<16x64xf32>
    %cst_30 = arith.constant 1.42141378 : f32
    %56 = vector.broadcast %cst_30 : f32 to vector<16x64xf32>
    %57 = arith.addf %55, %56 : vector<16x64xf32>
    %58 = arith.mulf %57, %50 : vector<16x64xf32>
    %cst_31 = arith.constant -0.284496725 : f32
    %59 = vector.broadcast %cst_31 : f32 to vector<16x64xf32>
    %60 = arith.addf %58, %59 : vector<16x64xf32>
    %61 = arith.mulf %60, %50 : vector<16x64xf32>
    %cst_32 = arith.constant 0.254829586 : f32
    %62 = vector.broadcast %cst_32 : f32 to vector<16x64xf32>
    %63 = arith.addf %61, %62 : vector<16x64xf32>
    %64 = arith.mulf %63, %50 : vector<16x64xf32>
    %cst_33 = arith.constant 0.000000e+00 : f32
    %65 = vector.broadcast %cst_33 : f32 to vector<16x64xf32>
    %66 = arith.subf %65, %44 : vector<16x64xf32>
    %67 = arith.mulf %66, %44 : vector<16x64xf32>
    %68 = math.exp %67 : vector<16x64xf32>
    %69 = arith.mulf %64, %68 : vector<16x64xf32>
    %cst_34 = arith.constant 1.000000e+00 : f32
    %70 = vector.broadcast %cst_34 : f32 to vector<16x64xf32>
    %71 = arith.subf %70, %69 : vector<16x64xf32>
    %cst_35 = arith.constant 0.000000e+00 : f32
    %72 = vector.broadcast %cst_35 : f32 to vector<16x64xf32>
    %73 = arith.cmpf olt, %43, %72 : vector<16x64xf32>
    %cst_36 = arith.constant 0.000000e+00 : f32
    %74 = vector.broadcast %cst_36 : f32 to vector<16x64xf32>
    %75 = arith.subf %74, %71 : vector<16x64xf32>
    %76 = arith.select %73, %75, %71 : vector<16x64xi1>, vector<16x64xf32>
    %cst_37 = arith.constant 1.000000e+00 : f32
    %77 = vector.broadcast %cst_37 : f32 to vector<16x64xf32>
    %78 = arith.addf %77, %76 : vector<16x64xf32>
    %79 = arith.mulf %41, %78 : vector<16x64xf32>
    %c0_38 = arith.constant 0 : index
    %c0_39 = arith.constant 0 : index
    %80 = vector.load %arg9[%c0_38, %c0_39] : memref<64x32xf32, #tpu.memory_space<vmem>>, vector<64x32xf32>
    %cst_40 = arith.constant dense<0.000000e+00> : vector<16x32xf32>
    %81 = tpu.matmul %79, %80, %cst_40 {dimension_numbers = #tpu.dot_dimension_numbers<[1], [0], [0], [1], [0, 0, 1, 1], [], []>} : vector<16x64xf32>, vector<64x32xf32>, vector<16x32xf32> -> vector<16x32xf32>
    %82 = arith.addf %34, %81 : vector<16x32xf32>
    %c0_41 = arith.constant 0 : index
    %c0_42 = arith.constant 0 : index
    %83 = vector.load %arg11[%c0_41, %c0_42] : memref<16x32xf32, #tpu.memory_space<vmem>>, vector<16x32xf32>
    tpu.vector_store %arg11[%c0_41, %c0_42], %82 {strides = array<i32>} : memref<16x32xf32, #tpu.memory_space<vmem>>, vector<16x32xf32>,
    return
  }
  func.func @transform_0(%arg0: i32) -> (i32, i32) {
    %c0_i32 = arith.constant 0 : i32
    %c0_i32_0 = arith.constant 0 : i32
    return %arg0, %c0_i32 : i32, i32
  }
  func.func @transform_1(%arg0: i32) -> (i32, i32) {
    %c0_i32 = arith.constant 0 : i32
    %c0_i32_0 = arith.constant 0 : i32
    return %arg0, %c0_i32 : i32, i32
  }
  func.func @transform_2(%arg0: i32) -> (i32, i32) {
    %c0_i32 = arith.constant 0 : i32
    %c0_i32_0 = arith.constant 0 : i32
    %c0_i32_1 = arith.constant 0 : i32
    return %c0_i32, %c0_i32_0 : i32, i32
  }
  func.func @transform_3(%arg0: i32) -> (i32, i32) {
    %c0_i32 = arith.constant 0 : i32
    %c0_i32_0 = arith.constant 0 : i32
    %c0_i32_1 = arith.constant 0 : i32
    return %c0_i32, %c0_i32_0 : i32, i32
  }
  func.func @transform_4(%arg0: i32) -> (i32, i32) {
    %c0_i32 = arith.constant 0 : i32
    %c0_i32_0 = arith.constant 0 : i32
    %c0_i32_1 = arith.constant 0 : i32
    return %c0_i32, %c0_i32_0 : i32, i32
  }
  func.func @transform_5(%arg0: i32) -> (i32, i32) {
    %c0_i32 = arith.constant 0 : i32
    %c0_i32_0 = arith.constant 0 : i32
    %c0_i32_1 = arith.constant 0 : i32
    return %c0_i32, %c0_i32_0 : i32, i32
  }
  func.func @transform_6(%arg0: i32) -> (i32, i32) {
    %c0_i32 = arith.constant 0 : i32
    %c0_i32_0 = arith.constant 0 : i32
    %c0_i32_1 = arith.constant 0 : i32
    return %c0_i32, %c0_i32_0 : i32, i32
  }
  func.func @transform_7(%arg0: i32) -> (i32, i32) {
    %c0_i32 = arith.constant 0 : i32
    %c0_i32_0 = arith.constant 0 : i32
    %c0_i32_1 = arith.constant 0 : i32
    return %c0_i32, %c0_i32_0 : i32, i32
  }
  func.func @transform_8(%arg0: i32) -> (i32, i32) {
    %c0_i32 = arith.constant 0 : i32
    %c0_i32_0 = arith.constant 0 : i32
    %c0_i32_1 = arith.constant 0 : i32
    return %c0_i32, %c0_i32_0 : i32, i32
  }
  func.func @transform_9(%arg0: i32) -> (i32, i32) {
    %c0_i32 = arith.constant 0 : i32
    %c0_i32_0 = arith.constant 0 : i32
    %c0_i32_1 = arith.constant 0 : i32
    return %c0_i32, %c0_i32_0 : i32, i32
  }
  func.func @transform_10(%arg0: i32) -> (i32, i32) {
    %c0_i32 = arith.constant 0 : i32
    %c0_i32_0 = arith.constant 0 : i32
    return %arg0, %c0_i32 : i32, i32
  }
}

module attributes {stable_mosaic.version = 11 : i64} {
  func.func @_ln_qkv_kernel(%arg0: i32, %arg1: memref<16x32xf32, #tpu.memory_space<vmem>>, %arg2: memref<1x32xf32, #tpu.memory_space<vmem>>, %arg3: memref<1x32xf32, #tpu.memory_space<vmem>>, %arg4: memref<32x32xf32, #tpu.memory_space<vmem>>, %arg5: memref<32x32xf32, #tpu.memory_space<vmem>>, %arg6: memref<32x32xf32, #tpu.memory_space<vmem>>, %arg7: memref<16x32xf32, #tpu.memory_space<vmem>>, %arg8: memref<16x32xf32, #tpu.memory_space<vmem>>, %arg9: memref<16x32xf32, #tpu.memory_space<vmem>>) attributes {dimension_semantics = [#tpu.dimension_semantics<parallel>], iteration_bounds = array<i64: 1>, scalar_prefetch = 0 : i64, scratch_operands = 0 : i64, tpu.core_type = #tpu.core_type<tc>, window_params = [{transform_indices = @transform_0, window_bounds = array<i64: 16, 32>}, {pipeline_mode = #tpu.pipeline_mode<synchronous>, transform_indices = @transform_1, window_bounds = array<i64: 1, 32>}, {pipeline_mode = #tpu.pipeline_mode<synchronous>, transform_indices = @transform_2, window_bounds = array<i64: 1, 32>}, {pipeline_mode = #tpu.pipeline_mode<synchronous>, transform_indices = @transform_3, window_bounds = array<i64: 32, 32>}, {pipeline_mode = #tpu.pipeline_mode<synchronous>, transform_indices = @transform_4, window_bounds = array<i64: 32, 32>}, {pipeline_mode = #tpu.pipeline_mode<synchronous>, transform_indices = @transform_5, window_bounds = array<i64: 32, 32>}, {transform_indices = @transform_6, window_bounds = array<i64: 16, 32>}, {transform_indices = @transform_7, window_bounds = array<i64: 16, 32>}, {transform_indices = @transform_8, window_bounds = array<i64: 16, 32>}]} {
    %c0 = arith.constant 0 : index
    %c0_0 = arith.constant 0 : index
    %0 = vector.load %arg1[%c0, %c0_0] : memref<16x32xf32, #tpu.memory_space<vmem>>, vector<16x32xf32>
    %c0_1 = arith.constant 0 : index
    %c0_2 = arith.constant 0 : index
    %1 = vector.load %arg2[%c0_1, %c0_2] : memref<1x32xf32, #tpu.memory_space<vmem>>, vector<1x32xf32>
    %c0_3 = arith.constant 0 : index
    %c0_4 = arith.constant 0 : index
    %2 = vector.load %arg3[%c0_3, %c0_4] : memref<1x32xf32, #tpu.memory_space<vmem>>, vector<1x32xf32>
    %cst = arith.constant dense<0.000000e+00> : vector<16xf32>
    %3 = vector.multi_reduction <add>, %0, %cst [1] : vector<16x32xf32> to vector<16xf32>
    %4 = vector.shape_cast %3 : vector<16xf32> to vector<16x1xf32>
    %cst_5 = arith.constant 3.200000e+01 : f32
    %5 = vector.broadcast %cst_5 : f32 to vector<16x1xf32>
    %6 = arith.divf %4, %5 : vector<16x1xf32>
    %7 = vector.broadcast %6 : vector<16x1xf32> to vector<16x32xf32>
    %8 = arith.subf %0, %7 : vector<16x32xf32>
    %9 = arith.mulf %8, %8 : vector<16x32xf32>
    %cst_6 = arith.constant dense<0.000000e+00> : vector<16xf32>
    %10 = vector.multi_reduction <add>, %9, %cst_6 [1] : vector<16x32xf32> to vector<16xf32>
    %11 = vector.shape_cast %10 : vector<16xf32> to vector<16x1xf32>
    %cst_7 = arith.constant 3.200000e+01 : f32
    %12 = vector.broadcast %cst_7 : f32 to vector<16x1xf32>
    %13 = arith.divf %11, %12 : vector<16x1xf32>
    %14 = vector.broadcast %6 : vector<16x1xf32> to vector<16x32xf32>
    %15 = arith.subf %0, %14 : vector<16x32xf32>
    %cst_8 = arith.constant 9.99999974E-6 : f32
    %16 = vector.broadcast %cst_8 : f32 to vector<16x1xf32>
    %17 = arith.addf %13, %16 : vector<16x1xf32>
    %18 = math.rsqrt %17 : vector<16x1xf32>
    %19 = vector.broadcast %18 : vector<16x1xf32> to vector<16x32xf32>
    %20 = arith.mulf %15, %19 : vector<16x32xf32>
    %21 = vector.broadcast %1 : vector<1x32xf32> to vector<16x32xf32>
    %22 = arith.mulf %20, %21 : vector<16x32xf32>
    %23 = vector.broadcast %2 : vector<1x32xf32> to vector<16x32xf32>
    %24 = arith.addf %22, %23 : vector<16x32xf32>
    %c0_9 = arith.constant 0 : index
    %c0_10 = arith.constant 0 : index
    %25 = vector.load %arg4[%c0_9, %c0_10] : memref<32x32xf32, #tpu.memory_space<vmem>>, vector<32x32xf32>
    %cst_11 = arith.constant dense<0.000000e+00> : vector<16x32xf32>
    %26 = tpu.matmul %24, %25, %cst_11 {dimension_numbers = #tpu.dot_dimension_numbers<[1], [0], [0], [1], [0, 0, 1, 1], [], []>} : vector<16x32xf32>, vector<32x32xf32>, vector<16x32xf32> -> vector<16x32xf32>
    %cst_12 = arith.constant 0.353553385 : f32
    %27 = vector.broadcast %cst_12 : f32 to vector<16x32xf32>
    %28 = arith.mulf %26, %27 : vector<16x32xf32>
    %c0_13 = arith.constant 0 : index
    %c0_14 = arith.constant 0 : index
    %29 = vector.load %arg7[%c0_13, %c0_14] : memref<16x32xf32, #tpu.memory_space<vmem>>, vector<16x32xf32>
    tpu.vector_store %arg7[%c0_13, %c0_14], %28 {strides = array<i32>} : memref<16x32xf32, #tpu.memory_space<vmem>>, vector<16x32xf32>,
    %c0_15 = arith.constant 0 : index
    %c0_16 = arith.constant 0 : index
    %30 = vector.load %arg5[%c0_15, %c0_16] : memref<32x32xf32, #tpu.memory_space<vmem>>, vector<32x32xf32>
    %cst_17 = arith.constant dense<0.000000e+00> : vector<16x32xf32>
    %31 = tpu.matmul %24, %30, %cst_17 {dimension_numbers = #tpu.dot_dimension_numbers<[1], [0], [0], [1], [0, 0, 1, 1], [], []>} : vector<16x32xf32>, vector<32x32xf32>, vector<16x32xf32> -> vector<16x32xf32>
    %c0_18 = arith.constant 0 : index
    %c0_19 = arith.constant 0 : index
    %32 = vector.load %arg8[%c0_18, %c0_19] : memref<16x32xf32, #tpu.memory_space<vmem>>, vector<16x32xf32>
    tpu.vector_store %arg8[%c0_18, %c0_19], %31 {strides = array<i32>} : memref<16x32xf32, #tpu.memory_space<vmem>>, vector<16x32xf32>,
    %c0_20 = arith.constant 0 : index
    %c0_21 = arith.constant 0 : index
    %33 = vector.load %arg6[%c0_20, %c0_21] : memref<32x32xf32, #tpu.memory_space<vmem>>, vector<32x32xf32>
    %cst_22 = arith.constant dense<0.000000e+00> : vector<16x32xf32>
    %34 = tpu.matmul %24, %33, %cst_22 {dimension_numbers = #tpu.dot_dimension_numbers<[1], [0], [0], [1], [0, 0, 1, 1], [], []>} : vector<16x32xf32>, vector<32x32xf32>, vector<16x32xf32> -> vector<16x32xf32>
    %c0_23 = arith.constant 0 : index
    %c0_24 = arith.constant 0 : index
    %35 = vector.load %arg9[%c0_23, %c0_24] : memref<16x32xf32, #tpu.memory_space<vmem>>, vector<16x32xf32>
    tpu.vector_store %arg9[%c0_23, %c0_24], %34 {strides = array<i32>} : memref<16x32xf32, #tpu.memory_space<vmem>>, vector<16x32xf32>,
    return
  }
  func.func @transform_0(%arg0: i32) -> (i32, i32) {
    %c0_i32 = arith.constant 0 : i32
    %c0_i32_0 = arith.constant 0 : i32
    return %arg0, %c0_i32 : i32, i32
  }
  func.func @transform_1(%arg0: i32) -> (i32, i32) {
    %c0_i32 = arith.constant 0 : i32
    %c0_i32_0 = arith.constant 0 : i32
    %c0_i32_1 = arith.constant 0 : i32
    return %c0_i32, %c0_i32_0 : i32, i32
  }
  func.func @transform_2(%arg0: i32) -> (i32, i32) {
    %c0_i32 = arith.constant 0 : i32
    %c0_i32_0 = arith.constant 0 : i32
    %c0_i32_1 = arith.constant 0 : i32
    return %c0_i32, %c0_i32_0 : i32, i32
  }
  func.func @transform_3(%arg0: i32) -> (i32, i32) {
    %c0_i32 = arith.constant 0 : i32
    %c0_i32_0 = arith.constant 0 : i32
    %c0_i32_1 = arith.constant 0 : i32
    return %c0_i32, %c0_i32_0 : i32, i32
  }
  func.func @transform_4(%arg0: i32) -> (i32, i32) {
    %c0_i32 = arith.constant 0 : i32
    %c0_i32_0 = arith.constant 0 : i32
    %c0_i32_1 = arith.constant 0 : i32
    return %c0_i32, %c0_i32_0 : i32, i32
  }
  func.func @transform_5(%arg0: i32) -> (i32, i32) {
    %c0_i32 = arith.constant 0 : i32
    %c0_i32_0 = arith.constant 0 : i32
    %c0_i32_1 = arith.constant 0 : i32
    return %c0_i32, %c0_i32_0 : i32, i32
  }
  func.func @transform_6(%arg0: i32) -> (i32, i32) {
    %c0_i32 = arith.constant 0 : i32
    %c0_i32_0 = arith.constant 0 : i32
    return %arg0, %c0_i32 : i32, i32
  }
  func.func @transform_7(%arg0: i32) -> (i32, i32) {
    %c0_i32 = arith.constant 0 : i32
    %c0_i32_0 = arith.constant 0 : i32
    return %arg0, %c0_i32 : i32, i32
  }
  func.func @transform_8(%arg0: i32) -> (i32, i32) {
    %c0_i32 = arith.constant 0 : i32
    %c0_i32_0 = arith.constant 0 : i32
    return %arg0, %c0_i32 : i32, i32
  }
}

module attributes {stable_mosaic.version = 11 : i64} {
  func.func @_proj_mlp_residual_kernel(%arg0: i32, %arg1: memref<16x32xf32, #tpu.memory_space<vmem>>, %arg2: memref<16x32xf32, #tpu.memory_space<vmem>>, %arg3: memref<32x32xf32, #tpu.memory_space<vmem>>, %arg4: memref<1x32xf32, #tpu.memory_space<vmem>>, %arg5: memref<1x32xf32, #tpu.memory_space<vmem>>, %arg6: memref<1x32xf32, #tpu.memory_space<vmem>>, %arg7: memref<32x64xf32, #tpu.memory_space<vmem>>, %arg8: memref<1x64xf32, #tpu.memory_space<vmem>>, %arg9: memref<64x32xf32, #tpu.memory_space<vmem>>, %arg10: memref<1x32xf32, #tpu.memory_space<vmem>>, %arg11: memref<16x32xf32, #tpu.memory_space<vmem>>) attributes {dimension_semantics = [#tpu.dimension_semantics<parallel>], iteration_bounds = array<i64: 1>, scalar_prefetch = 0 : i64, scratch_operands = 0 : i64, tpu.core_type = #tpu.core_type<tc>, window_params = [{transform_indices = @transform_0, window_bounds = array<i64: 16, 32>}, {transform_indices = @transform_1, window_bounds = array<i64: 16, 32>}, {pipeline_mode = #tpu.pipeline_mode<synchronous>, transform_indices = @transform_2, window_bounds = array<i64: 32, 32>}, {pipeline_mode = #tpu.pipeline_mode<synchronous>, transform_indices = @transform_3, window_bounds = array<i64: 1, 32>}, {pipeline_mode = #tpu.pipeline_mode<synchronous>, transform_indices = @transform_4, window_bounds = array<i64: 1, 32>}, {pipeline_mode = #tpu.pipeline_mode<synchronous>, transform_indices = @transform_5, window_bounds = array<i64: 1, 32>}, {pipeline_mode = #tpu.pipeline_mode<synchronous>, transform_indices = @transform_6, window_bounds = array<i64: 32, 64>}, {pipeline_mode = #tpu.pipeline_mode<synchronous>, transform_indices = @transform_7, window_bounds = array<i64: 1, 64>}, {pipeline_mode = #tpu.pipeline_mode<synchronous>, transform_indices = @transform_8, window_bounds = array<i64: 64, 32>}, {pipeline_mode = #tpu.pipeline_mode<synchronous>, transform_indices = @transform_9, window_bounds = array<i64: 1, 32>}, {transform_indices = @transform_10, window_bounds = array<i64: 16, 32>}]} {
    %c0 = arith.constant 0 : index
    %c0_0 = arith.constant 0 : index
    %0 = vector.load %arg1[%c0, %c0_0] : memref<16x32xf32, #tpu.memory_space<vmem>>, vector<16x32xf32>
    %c0_1 = arith.constant 0 : index
    %c0_2 = arith.constant 0 : index
    %1 = vector.load %arg3[%c0_1, %c0_2] : memref<32x32xf32, #tpu.memory_space<vmem>>, vector<32x32xf32>
    %cst = arith.constant dense<0.000000e+00> : vector<16x32xf32>
    %2 = tpu.matmul %0, %1, %cst {dimension_numbers = #tpu.dot_dimension_numbers<[1], [0], [0], [1], [0, 0, 1, 1], [], []>} : vector<16x32xf32>, vector<32x32xf32>, vector<16x32xf32> -> vector<16x32xf32>
    %c0_3 = arith.constant 0 : index
    %c0_4 = arith.constant 0 : index
    %3 = vector.load %arg4[%c0_3, %c0_4] : memref<1x32xf32, #tpu.memory_space<vmem>>, vector<1x32xf32>
    %4 = vector.broadcast %3 : vector<1x32xf32> to vector<16x32xf32>
    %5 = arith.addf %2, %4 : vector<16x32xf32>
    %c0_5 = arith.constant 0 : index
    %c0_6 = arith.constant 0 : index
    %6 = vector.load %arg2[%c0_5, %c0_6] : memref<16x32xf32, #tpu.memory_space<vmem>>, vector<16x32xf32>
    %7 = arith.addf %5, %6 : vector<16x32xf32>
    %c0_7 = arith.constant 0 : index
    %c0_8 = arith.constant 0 : index
    %8 = vector.load %arg5[%c0_7, %c0_8] : memref<1x32xf32, #tpu.memory_space<vmem>>, vector<1x32xf32>
    %c0_9 = arith.constant 0 : index
    %c0_10 = arith.constant 0 : index
    %9 = vector.load %arg6[%c0_9, %c0_10] : memref<1x32xf32, #tpu.memory_space<vmem>>, vector<1x32xf32>
    %cst_11 = arith.constant dense<0.000000e+00> : vector<16xf32>
    %10 = vector.multi_reduction <add>, %7, %cst_11 [1] : vector<16x32xf32> to vector<16xf32>
    %11 = vector.shape_cast %10 : vector<16xf32> to vector<16x1xf32>
    %cst_12 = arith.constant 3.200000e+01 : f32
    %12 = vector.broadcast %cst_12 : f32 to vector<16x1xf32>
    %13 = arith.divf %11, %12 : vector<16x1xf32>
    %14 = vector.broadcast %13 : vector<16x1xf32> to vector<16x32xf32>
    %15 = arith.subf %7, %14 : vector<16x32xf32>
    %16 = arith.mulf %15, %15 : vector<16x32xf32>
    %cst_13 = arith.constant dense<0.000000e+00> : vector<16xf32>
    %17 = vector.multi_reduction <add>, %16, %cst_13 [1] : vector<16x32xf32> to vector<16xf32>
    %18 = vector.shape_cast %17 : vector<16xf32> to vector<16x1xf32>
    %cst_14 = arith.constant 3.200000e+01 : f32
    %19 = vector.broadcast %cst_14 : f32 to vector<16x1xf32>
    %20 = arith.divf %18, %19 : vector<16x1xf32>
    %21 = vector.broadcast %13 : vector<16x1xf32> to vector<16x32xf32>
    %22 = arith.subf %7, %21 : vector<16x32xf32>
    %cst_15 = arith.constant 9.99999974E-6 : f32
    %23 = vector.broadcast %cst_15 : f32 to vector<16x1xf32>
    %24 = arith.addf %20, %23 : vector<16x1xf32>
    %25 = math.rsqrt %24 : vector<16x1xf32>
    %26 = vector.broadcast %25 : vector<16x1xf32> to vector<16x32xf32>
    %27 = arith.mulf %22, %26 : vector<16x32xf32>
    %28 = vector.broadcast %8 : vector<1x32xf32> to vector<16x32xf32>
    %29 = arith.mulf %27, %28 : vector<16x32xf32>
    %30 = vector.broadcast %9 : vector<1x32xf32> to vector<16x32xf32>
    %31 = arith.addf %29, %30 : vector<16x32xf32>
    %c0_16 = arith.constant 0 : index
    %c0_17 = arith.constant 0 : index
    %32 = vector.load %arg10[%c0_16, %c0_17] : memref<1x32xf32, #tpu.memory_space<vmem>>, vector<1x32xf32>
    %33 = vector.broadcast %32 : vector<1x32xf32> to vector<16x32xf32>
    %34 = arith.addf %7, %33 : vector<16x32xf32>
    %c0_18 = arith.constant 0 : index
    %c0_19 = arith.constant 0 : index
    %35 = vector.load %arg7[%c0_18, %c0_19] : memref<32x64xf32, #tpu.memory_space<vmem>>, vector<32x64xf32>
    %cst_20 = arith.constant dense<0.000000e+00> : vector<16x64xf32>
    %36 = tpu.matmul %31, %35, %cst_20 {dimension_numbers = #tpu.dot_dimension_numbers<[1], [0], [0], [1], [0, 0, 1, 1], [], []>} : vector<16x32xf32>, vector<32x64xf32>, vector<16x64xf32> -> vector<16x64xf32>
    %c0_21 = arith.constant 0 : index
    %c0_22 = arith.constant 0 : index
    %37 = vector.load %arg8[%c0_21, %c0_22] : memref<1x64xf32, #tpu.memory_space<vmem>>, vector<1x64xf32>
    %38 = vector.broadcast %37 : vector<1x64xf32> to vector<16x64xf32>
    %39 = arith.addf %36, %38 : vector<16x64xf32>
    %cst_23 = arith.constant 5.000000e-01 : f32
    %40 = vector.broadcast %cst_23 : f32 to vector<16x64xf32>
    %41 = arith.mulf %40, %39 : vector<16x64xf32>
    %cst_24 = arith.constant 0.707106769 : f32
    %42 = vector.broadcast %cst_24 : f32 to vector<16x64xf32>
    %43 = arith.mulf %39, %42 : vector<16x64xf32>
    %44 = math.absf %43 : vector<16x64xf32>
    %cst_25 = arith.constant 0.327591091 : f32
    %45 = vector.broadcast %cst_25 : f32 to vector<16x64xf32>
    %46 = arith.mulf %45, %44 : vector<16x64xf32>
    %cst_26 = arith.constant 1.000000e+00 : f32
    %47 = vector.broadcast %cst_26 : f32 to vector<16x64xf32>
    %48 = arith.addf %47, %46 : vector<16x64xf32>
    %cst_27 = arith.constant 1.000000e+00 : f32
    %49 = vector.broadcast %cst_27 : f32 to vector<16x64xf32>
    %50 = arith.divf %49, %48 : vector<16x64xf32>
    %cst_28 = arith.constant 1.06140542 : f32
    %51 = vector.broadcast %cst_28 : f32 to vector<16x64xf32>
    %52 = arith.mulf %51, %50 : vector<16x64xf32>
    %cst_29 = arith.constant -1.45315206 : f32
    %53 = vector.broadcast %cst_29 : f32 to vector<16x64xf32>
    %54 = arith.addf %52, %53 : vector<16x64xf32>
    %55 = arith.mulf %54, %50 : vector<16x64xf32>
    %cst_30 = arith.constant 1.42141378 : f32
    %56 = vector.broadcast %cst_30 : f32 to vector<16x64xf32>
    %57 = arith.addf %55, %56 : vector<16x64xf32>
    %58 = arith.mulf %57, %50 : vector<16x64xf32>
    %cst_31 = arith.constant -0.284496725 : f32
    %59 = vector.broadcast %cst_31 : f32 to vector<16x64xf32>
    %60 = arith.addf %58, %59 : vector<16x64xf32>
    %61 = arith.mulf %60, %50 : vector<16x64xf32>
    %cst_32 = arith.constant 0.254829586 : f32
    %62 = vector.broadcast %cst_32 : f32 to vector<16x64xf32>
    %63 = arith.addf %61, %62 : vector<16x64xf32>
    %64 = arith.mulf %63, %50 : vector<16x64xf32>
    %cst_33 = arith.constant 0.000000e+00 : f32
    %65 = vector.broadcast %cst_33 : f32 to vector<16x64xf32>
    %66 = arith.subf %65, %44 : vector<16x64xf32>
    %67 = arith.mulf %66, %44 : vector<16x64xf32>
    %68 = math.exp %67 : vector<16x64xf32>
    %69 = arith.mulf %64, %68 : vector<16x64xf32>
    %cst_34 = arith.constant 1.000000e+00 : f32
    %70 = vector.broadcast %cst_34 : f32 to vector<16x64xf32>
    %71 = arith.subf %70, %69 : vector<16x64xf32>
    %cst_35 = arith.constant 0.000000e+00 : f32
    %72 = vector.broadcast %cst_35 : f32 to vector<16x64xf32>
    %73 = arith.cmpf olt, %43, %72 : vector<16x64xf32>
    %cst_36 = arith.constant 0.000000e+00 : f32
    %74 = vector.broadcast %cst_36 : f32 to vector<16x64xf32>
    %75 = arith.subf %74, %71 : vector<16x64xf32>
    %76 = arith.select %73, %75, %71 : vector<16x64xi1>, vector<16x64xf32>
    %cst_37 = arith.constant 1.000000e+00 : f32
    %77 = vector.broadcast %cst_37 : f32 to vector<16x64xf32>
    %78 = arith.addf %77, %76 : vector<16x64xf32>
    %79 = arith.mulf %41, %78 : vector<16x64xf32>
    %c0_38 = arith.constant 0 : index
    %c0_39 = arith.constant 0 : index
    %80 = vector.load %arg9[%c0_38, %c0_39] : memref<64x32xf32, #tpu.memory_space<vmem>>, vector<64x32xf32>
    %cst_40 = arith.constant dense<0.000000e+00> : vector<16x32xf32>
    %81 = tpu.matmul %79, %80, %cst_40 {dimension_numbers = #tpu.dot_dimension_numbers<[1], [0], [0], [1], [0, 0, 1, 1], [], []>} : vector<16x64xf32>, vector<64x32xf32>, vector<16x32xf32> -> vector<16x32xf32>
    %82 = arith.addf %34, %81 : vector<16x32xf32>
    %c0_41 = arith.constant 0 : index
    %c0_42 = arith.constant 0 : index
    %83 = vector.load %arg11[%c0_41, %c0_42] : memref<16x32xf32, #tpu.memory_space<vmem>>, vector<16x32xf32>
    tpu.vector_store %arg11[%c0_41, %c0_42], %82 {strides = array<i32>} : memref<16x32xf32, #tpu.memory_space<vmem>>, vector<16x32xf32>,
    return
  }
  func.func @transform_0(%arg0: i32) -> (i32, i32) {
    %c0_i32 = arith.constant 0 : i32
    %c0_i32_0 = arith.constant 0 : i32
    return %arg0, %c0_i32 : i32, i32
  }
  func.func @transform_1(%arg0: i32) -> (i32, i32) {
    %c0_i32 = arith.constant 0 : i32
    %c0_i32_0 = arith.constant 0 : i32
    return %arg0, %c0_i32 : i32, i32
  }
  func.func @transform_2(%arg0: i32) -> (i32, i32) {
    %c0_i32 = arith.constant 0 : i32
    %c0_i32_0 = arith.constant 0 : i32
    %c0_i32_1 = arith.constant 0 : i32
    return %c0_i32, %c0_i32_0 : i32, i32
  }
  func.func @transform_3(%arg0: i32) -> (i32, i32) {
    %c0_i32 = arith.constant 0 : i32
    %c0_i32_0 = arith.constant 0 : i32
    %c0_i32_1 = arith.constant 0 : i32
    return %c0_i32, %c0_i32_0 : i32, i32
  }
  func.func @transform_4(%arg0: i32) -> (i32, i32) {
    %c0_i32 = arith.constant 0 : i32
    %c0_i32_0 = arith.constant 0 : i32
    %c0_i32_1 = arith.constant 0 : i32
    return %c0_i32, %c0_i32_0 : i32, i32
  }
  func.func @transform_5(%arg0: i32) -> (i32, i32) {
    %c0_i32 = arith.constant 0 : i32
    %c0_i32_0 = arith.constant 0 : i32
    %c0_i32_1 = arith.constant 0 : i32
    return %c0_i32, %c0_i32_0 : i32, i32
  }
  func.func @transform_6(%arg0: i32) -> (i32, i32) {
    %c0_i32 = arith.constant 0 : i32
    %c0_i32_0 = arith.constant 0 : i32
    %c0_i32_1 = arith.constant 0 : i32
    return %c0_i32, %c0_i32_0 : i32, i32
  }
  func.func @transform_7(%arg0: i32) -> (i32, i32) {
    %c0_i32 = arith.constant 0 : i32
    %c0_i32_0 = arith.constant 0 : i32
    %c0_i32_1 = arith.constant 0 : i32
    return %c0_i32, %c0_i32_0 : i32, i32
  }
  func.func @transform_8(%arg0: i32) -> (i32, i32) {
    %c0_i32 = arith.constant 0 : i32
    %c0_i32_0 = arith.constant 0 : i32
    %c0_i32_1 = arith.constant 0 : i32
    return %c0_i32, %c0_i32_0 : i32, i32
  }
  func.func @transform_9(%arg0: i32) -> (i32, i32) {
    %c0_i32 = arith.constant 0 : i32
    %c0_i32_0 = arith.constant 0 : i32
    %c0_i32_1 = arith.constant 0 : i32
    return %c0_i32, %c0_i32_0 : i32, i32
  }
  func.func @transform_10(%arg0: i32) -> (i32, i32) {
    %c0_i32 = arith.constant 0 : i32
    %c0_i32_0 = arith.constant 0 : i32
    return %arg0, %c0_i32 : i32, i32
  }
}

</mosaic_0001>

<llo_original>
// kernel: transformer_forward.6
$region0: #{transformer_forward.6}
  #allocation0 [shape = 'u32[]', space=smem, size = 0x4, offset = 0x4, fixed_abs, tag = 'smem constant byte address 0x4 - core index']
  #allocation1 [shape = 'u32[72,128]{1,0:T(1,128)}', space=vmem, size = 0x9000, scoped, tag = 'internal scratch']
  %s0 = inlined_call_operand.hbm [shape: f32[16,32], index: 0, kind: input, shape index: {}]
  %s1 = inlined_call_operand.hbm [shape: f32[1,32], index: 1, kind: input, shape index: {}]
  %s2 = inlined_call_operand.hbm [shape: f32[1,32], index: 2, kind: input, shape index: {}]
  %s3 = inlined_call_operand.hbm [shape: f32[32,32], index: 3, kind: input, shape index: {}]
  %s4 = inlined_call_operand.hbm [shape: f32[32,32], index: 4, kind: input, shape index: {}]
  %s5 = inlined_call_operand.hbm [shape: f32[32,32], index: 5, kind: input, shape index: {}]
  %s6 = inlined_call_operand.vmem [shape: f32[16,32], index: 6, kind: output, shape index: {0}]
  %s7 = inlined_call_operand.vmem [shape: f32[16,32], index: 7, kind: output, shape index: {1}]
  %s8 = inlined_call_operand.vmem [shape: f32[16,32], index: 8, kind: output, shape index: {2}]
  %9 = xla_tuple %s6, %s7, %s8
  %s10 = sld [smem:[#allocation0]]
  $region74: #{transformer_forward.6} parent=0
    _
  %s12 = ssub.s32 1, %s10
  %s13 = scalar_select 0, %s12, %s10
  $region1: #{transformer_forward.6} parent=0
    #allocation2 [shape = 'u8[8192]{0}', space=vmem, size = 0x2000, scoped, tag = 'input window, operand 0, single buffered']
    #allocation3 [shape = 's32[1]{0}', space=sflag, size = 0x4, scoped, tag = 'scoped memory for transformer_forward.6']
    #allocation4 [shape = 'u8[512]{0}', space=vmem, size = 0x400, scoped, tag = 'input window, operand 1, single buffered']
    #allocation5 [shape = 's32[1]{0}', space=sflag, size = 0x4, scoped, tag = 'scoped memory for transformer_forward.6']
    #allocation6 [shape = 'u8[512]{0}', space=vmem, size = 0x400, scoped, tag = 'input window, operand 2, single buffered']
    #allocation7 [shape = 'u8[16384]{0}', space=vmem, size = 0x4000, scoped, tag = 'input window, operand 3, single buffered']
    #allocation8 [shape = 's32[1]{0}', space=sflag, size = 0x4, scoped, tag = 'scoped memory for transformer_forward.6']
    #allocation9 [shape = 'u8[16384]{0}', space=vmem, size = 0x4000, scoped, tag = 'input window, operand 4, single buffered']
    #allocation10 [shape = 'u8[16384]{0}', space=vmem, size = 0x4000, scoped, tag = 'input window, operand 5, single buffered']
    #allocation11 [shape = 's32[1]{0}', space=sflag, size = 0x4, scoped, tag = 'scoped memory for transformer_forward.6']
    %14 = vsyncpa [#allocation3], 0
    %15 = vsyncpa [#allocation5], 0
    %16 = vsyncpa [#allocation8], 0
    %17 = vsyncpa [#allocation11], 0
    // Predicated region
    $region2: #{transformer_forward.6} parent=1 // pred_check
      _
    $region3: #{transformer_forward.6} parent=1 // pred_check_branch
      %19 = sbr.rel (0) target = $region5
    $region4: #{transformer_forward.6} parent=1 // pred_region
      %21 = vsyncadd [#allocation3], 0
      %s22 = sshll.u32 %s0, 4
      %s23 = int_to_ptr.hbm [resolvable:$true] %s22
      %s24 = sshll.u32 [#allocation2], 4
      %s25 = int_to_ptr.vmem [resolvable:$true] %s24
      %30 = dma.hbm_to_vmem [thread:$0]  %s23, 256, %s25, [#allocation3], 128, 128, 8
    $region5: #{transformer_forward.6} parent=1 // pred_fallthru
      _
    // Predicated region
    $region6: #{transformer_forward.6} parent=1 // pred_check
      _
    $region7: #{transformer_forward.6} parent=1 // pred_check_branch
      %32 = sbr.rel (0) target = $region9
    $region8: #{transformer_forward.6} parent=1 // pred_region
      %34 = vsyncadd [#allocation5], 0
      %s36 = sshll.u32 %s1, 4
      %s37 = int_to_ptr.hbm [resolvable:$true] %s36
      %s38 = sshll.u32 [#allocation4], 4
      %s39 = int_to_ptr.vmem [resolvable:$true] %s38
      %41 = dma.hbm_to_vmem [thread:$0]  %s37, 16, %s39, [#allocation5]
    $region9: #{transformer_forward.6} parent=1 // pred_fallthru
      _
    // Predicated region
    $region10: #{transformer_forward.6} parent=1 // pred_check
      _
    $region11: #{transformer_forward.6} parent=1 // pred_check_branch
      %43 = sbr.rel (0) target = $region13
    $region12: #{transformer_forward.6} parent=1 // pred_region
      %45 = vsyncadd [#allocation5], 0
      %s47 = sshll.u32 %s2, 4
      %s48 = int_to_ptr.hbm [resolvable:$true] %s47
      %s49 = sshll.u32 [#allocation6], 4
      %s50 = int_to_ptr.vmem [resolvable:$true] %s49
      %52 = dma.hbm_to_vmem [thread:$0]  %s48, 16, %s50, [#allocation5]
    $region13: #{transformer_forward.6} parent=1 // pred_fallthru
      _
    // Predicated region
    $region14: #{transformer_forward.6} parent=1 // pred_check
      _
    $region15: #{transformer_forward.6} parent=1 // pred_check_branch
      %54 = sbr.rel (0) target = $region17
    $region16: #{transformer_forward.6} parent=1 // pred_region
      %56 = vsyncadd [#allocation8], 0
      %s57 = sshll.u32 %s3, 4
      %s58 = int_to_ptr.hbm [resolvable:$true] %s57
      %s59 = sshll.u32 [#allocation7], 4
      %s60 = int_to_ptr.vmem [resolvable:$true] %s59
      %65 = dma.hbm_to_vmem [thread:$0]  %s58, 512, %s60, [#allocation8], 128, 128, 8
    $region17: #{transformer_forward.6} parent=1 // pred_fallthru
      _
    // Predicated region
    $region18: #{transformer_forward.6} parent=1 // pred_check
      _
    $region19: #{transformer_forward.6} parent=1 // pred_check_branch
      %67 = sbr.rel (0) target = $region21
    $region20: #{transformer_forward.6} parent=1 // pred_region
      %69 = vsyncadd [#allocation8], 0
      %s70 = sshll.u32 %s4, 4
      %s71 = int_to_ptr.hbm [resolvable:$true] %s70
      %s72 = sshll.u32 [#allocation9], 4
      %s73 = int_to_ptr.vmem [resolvable:$true] %s72
      %78 = dma.hbm_to_vmem [thread:$0]  %s71, 512, %s73, [#allocation8], 128, 128, 8
    $region21: #{transformer_forward.6} parent=1 // pred_fallthru
      _
    // Predicated region
    $region22: #{transformer_forward.6} parent=1 // pred_check
      _
    $region23: #{transformer_forward.6} parent=1 // pred_check_branch
      %80 = sbr.rel (0) target = $region25
    $region24: #{transformer_forward.6} parent=1 // pred_region
      %82 = vsyncadd [#allocation11], 0
      %s83 = sshll.u32 %s5, 4
      %s84 = int_to_ptr.hbm [resolvable:$true] %s83
      %s85 = sshll.u32 [#allocation10], 4
      %s86 = int_to_ptr.vmem [resolvable:$true] %s85
      %91 = dma.hbm_to_vmem [thread:$0]  %s84, 512, %s86, [#allocation11], 128, 128, 8
    $region25: #{transformer_forward.6} parent=1 // pred_fallthru
      _
    // Predicated region
    $region26: #{transformer_forward.6} parent=1 // pred_check
      _
    $region27: #{transformer_forward.6} parent=1 // pred_check_branch
      %93 = sbr.rel (0) target = $region29
    $region28: #{transformer_forward.6} parent=1 // pred_region
      %95 = dma.done [#allocation3], 256
    $region29: #{transformer_forward.6} parent=1 // pred_fallthru
      _
    // Predicated region
    $region30: #{transformer_forward.6} parent=1 // pred_check
      _
    $region31: #{transformer_forward.6} parent=1 // pred_check_branch
      %97 = sbr.rel (0) target = $region33
    $region32: #{transformer_forward.6} parent=1 // pred_region
      %99 = dma.done [#allocation5], 16
    $region33: #{transformer_forward.6} parent=1 // pred_fallthru
      _
    // Predicated region
    $region34: #{transformer_forward.6} parent=1 // pred_check
      _
    $region35: #{transformer_forward.6} parent=1 // pred_check_branch
      %101 = sbr.rel (0) target = $region37
    $region36: #{transformer_forward.6} parent=1 // pred_region
      %103 = dma.done [#allocation5], 16
    $region37: #{transformer_forward.6} parent=1 // pred_fallthru
      _
    // Predicated region
    $region38: #{transformer_forward.6} parent=1 // pred_check
      _
    $region39: #{transformer_forward.6} parent=1 // pred_check_branch
      %105 = sbr.rel (0) target = $region41
    $region40: #{transformer_forward.6} parent=1 // pred_region
      %107 = dma.done [#allocation8], 512
    $region41: #{transformer_forward.6} parent=1 // pred_fallthru
      _
    // Predicated region
    $region42: #{transformer_forward.6} parent=1 // pred_check
      _
    $region43: #{transformer_forward.6} parent=1 // pred_check_branch
      %109 = sbr.rel (0) target = $region45
    $region44: #{transformer_forward.6} parent=1 // pred_region
      %111 = dma.done [#allocation8], 512
    $region45: #{transformer_forward.6} parent=1 // pred_fallthru
      _
    // Predicated region
    $region46: #{transformer_forward.6} parent=1 // pred_check
      _
    $region47: #{transformer_forward.6} parent=1 // pred_check_branch
      %113 = sbr.rel (0) target = $region49
    $region48: #{transformer_forward.6} parent=1 // pred_region
      %115 = dma.done [#allocation11], 512
    $region49: #{transformer_forward.6} parent=1 // pred_fallthru
      _
    %v116 = vld [vmem:[#allocation2] sm:$0xff]
    %v117 = vld [vmem:[#allocation2 + $0x8] sm:$0xff]
    %v118 = vld [vmem:[#allocation4] sm:$0x1]
    %v119 = vld [vmem:[#allocation6] sm:$0x1]
    %vm120 = vcmask 261120
    %v121 = vsel %vm120, %v116, 0.0
    %122 = vadd.xlane.f32.xlu0 %v121
    %v123 = vpop.xlane.xlu0 %122
    %v124 = vsel %vm120, %v117, 0.0
    %125 = vadd.xlane.f32.xlu0 %v124
    %v126 = vpop.xlane.xlu0 %125
    %v127 = vrcp.pop 32.0
    %v128 = vmul.f32 32.0, %v127
    %v129 = vsub.f32 1.0, %v128
    %v130 = vmul.f32 %v127, %v129
    %v131 = vadd.f32 %v127, %v130
    %vm132 = vweird.f32 %v127
    %v133 = vsel %vm132, %v127, %v131
    %v134 = vmul.f32 %v123, %v133
    %v135 = vmul.f32 %v126, %v133
    %v136 = vsub.f32 %v116, %v134
    %v137 = vsub.f32 %v117, %v135
    %v138 = vmul.f32 %v136, %v136
    %v139 = vmul.f32 %v137, %v137
    %v140 = vsel %vm120, %v138, 0.0
    %141 = vadd.xlane.f32.xlu0 %v140
    %v142 = vpop.xlane.xlu0 %141
    %v143 = vsel %vm120, %v139, 0.0
    %144 = vadd.xlane.f32.xlu0 %v143
    %v145 = vpop.xlane.xlu0 %144
    %v146 = vmul.f32 %v142, %v133
    %v147 = vmul.f32 %v145, %v133
    %v148 = vadd.f32 %v146, 1e-05
    %v149 = vadd.f32 %v147, 1e-05
    %v150 = vrsqrt.pop %v148
    %v151 = vmul.f32 %v150, %v148
    %v152 = vmul.f32 %v151, %v150
    %v153 = vmul.f32 0.5, %v152
    %v154 = vsub.f32 1.5, %v153
    %v155 = vmul.f32 %v150, %v154
    %vm156 = vweird.f32 %v148
    %vm157 = vweird.f32 %v150
    %vm158 = vmor %vm156, %vm157
    %v159 = vsel %vm158, %v150, %v155
    %v160 = vrsqrt.pop %v149
    %v161 = vmul.f32 %v160, %v149
    %v162 = vmul.f32 %v161, %v160
    %v163 = vmul.f32 0.5, %v162
    %v164 = vsub.f32 1.5, %v163
    %v165 = vmul.f32 %v160, %v164
    %vm166 = vweird.f32 %v149
    %vm167 = vweird.f32 %v160
    %vm168 = vmor %vm166, %vm167
    %v169 = vsel %vm168, %v160, %v165
    %v170 = vmul.f32 %v136, %v159
    %v171 = vmul.f32 %v137, %v169
    %v173 = vperm.slane %v118, 0
    %v175 = vmul.f32 %v170, %v173
    %v176 = vmul.f32 %v171, %v173
    %v178 = vperm.slane %v119, 0
    %v180 = vadd.f32 %v175, %v178
    %v181 = vadd.f32 %v176, %v178
    %v182 = vld [vmem:[#allocation7] sm:$0xff]
    %v183 = vld [vmem:[#allocation7 + $0x8] sm:$0xff]
    %v184 = vld [vmem:[#allocation7 + $0x10] sm:$0xff]
    %v185 = vld [vmem:[#allocation7 + $0x18] sm:$0xff]
    %v187 = vsel %vm120, %v180, 0
    %v190 = vsel %vm120, %v181, 0
    %192 = vmatpush.msra.mxu0 0.0
    %193 = vmatpush.msra.mxu0 0.0
    %194 = vmatpush.msra.mxu0 0.0
    %195 = vmatpush.msra.mxu0 0.0
    %196 = vmatpush.msra.mxu0 0.0
    %197 = vmatpush.msra.mxu0 0.0
    %198 = vmatpush.msra.mxu0 0.0
    %199 = vmatpush.msra.mxu0 0.0
    %200 = vmatpush.msra.mxu0 0.0
    %201 = vmatpush.msra.mxu0 0.0
    %202 = vmatpush.msra.mxu0 0.0
    %203 = vmatpush.msra.mxu0 0.0
    %204 = vmatpush.msra.mxu0 %v185
    %205 = vmatpush.msra.mxu0 %v184
    %206 = vmatpush.msra.mxu0 %v183
    %207 = vmatpush.msra.mxu0 %v182
    %208 = vmatmul.f32.gmra.mxu0 %v187
    %v209 = vpop.f32.mrf.mxu0
    %v210 = vadd.f32 0.0, %v209
    %211 = vmatmul.f32.gmra.mxu0 %v190
    %v212 = vpop.f32.mrf.mxu0
    %v213 = vadd.f32 0.0, %v212
    %214 = vdwg.mxu0
    %v215 = vmul.f32 %v210, 0.35355338
    %v216 = vmul.f32 %v213, 0.35355338
    %217 = vst.msk [vmem:[%s6] sm:$0xff] %vm120, %v215
    %218 = vst.msk [vmem:[%s6 + $0x8] sm:$0xff] %vm120, %v216
    %v219 = vld [vmem:[#allocation9] sm:$0xff]
    %v220 = vld [vmem:[#allocation9 + $0x8] sm:$0xff]
    %v221 = vld [vmem:[#allocation9 + $0x10] sm:$0xff]
    %v222 = vld [vmem:[#allocation9 + $0x18] sm:$0xff]
    %223 = vmatpush.msra.mxu0 0.0
    %224 = vmatpush.msra.mxu0 0.0
    %225 = vmatpush.msra.mxu0 0.0
    %226 = vmatpush.msra.mxu0 0.0
    %227 = vmatpush.msra.mxu0 0.0
    %228 = vmatpush.msra.mxu0 0.0
    %229 = vmatpush.msra.mxu0 0.0
    %230 = vmatpush.msra.mxu0 0.0
    %231 = vmatpush.msra.mxu0 0.0
    %232 = vmatpush.msra.mxu0 0.0
    %233 = vmatpush.msra.mxu0 0.0
    %234 = vmatpush.msra.mxu0 0.0
    %235 = vmatpush.msra.mxu0 %v222
    %236 = vmatpush.msra.mxu0 %v221
    %237 = vmatpush.msra.mxu0 %v220
    %238 = vmatpush.msra.mxu0 %v219
    %239 = vmatmul.f32.gmra.mxu0 %v187
    %v240 = vpop.f32.mrf.mxu0
    %v241 = vadd.f32 0.0, %v240
    %242 = vmatmul.f32.gmra.mxu0 %v190
    %v243 = vpop.f32.mrf.mxu0
    %v244 = vadd.f32 0.0, %v243
    %245 = vdwg.mxu0
    %246 = vst.msk [vmem:[%s7] sm:$0xff] %vm120, %v241
    %247 = vst.msk [vmem:[%s7 + $0x8] sm:$0xff] %vm120, %v244
    %v248 = vld [vmem:[#allocation10] sm:$0xff]
    %v249 = vld [vmem:[#allocation10 + $0x8] sm:$0xff]
    %v250 = vld [vmem:[#allocation10 + $0x10] sm:$0xff]
    %v251 = vld [vmem:[#allocation10 + $0x18] sm:$0xff]
    %252 = vmatpush.msra.mxu0 0.0
    %253 = vmatpush.msra.mxu0 0.0
    %254 = vmatpush.msra.mxu0 0.0
    %255 = vmatpush.msra.mxu0 0.0
    %256 = vmatpush.msra.mxu0 0.0
    %257 = vmatpush.msra.mxu0 0.0
    %258 = vmatpush.msra.mxu0 0.0
    %259 = vmatpush.msra.mxu0 0.0
    %260 = vmatpush.msra.mxu0 0.0
    %261 = vmatpush.msra.mxu0 0.0
    %262 = vmatpush.msra.mxu0 0.0
    %263 = vmatpush.msra.mxu0 0.0
    %264 = vmatpush.msra.mxu0 %v251
    %265 = vmatpush.msra.mxu0 %v250
    %266 = vmatpush.msra.mxu0 %v249
    %267 = vmatpush.msra.mxu0 %v248
    %268 = vmatmul.f32.gmra.mxu0 %v187
    %v269 = vpop.f32.mrf.mxu0
    %v270 = vadd.f32 0.0, %v269
    %271 = vmatmul.f32.gmra.mxu0 %v190
    %v272 = vpop.f32.mrf.mxu0
    %v273 = vadd.f32 0.0, %v272
    %274 = vdwg.mxu0
    %275 = vst.msk [vmem:[%s8] sm:$0xff] %vm120, %v270
    %276 = vst.msk [vmem:[%s8 + $0x8] sm:$0xff] %vm120, %v273
    // Predicated region
    $region50: #{transformer_forward.6} parent=1 // pred_check
      _
    $region51: #{transformer_forward.6} parent=1 // pred_check_branch
      %278 = sbr.rel (0) target = $region53
    $region52: #{transformer_forward.6} parent=1 // pred_region
      _
    $region53: #{transformer_forward.6} parent=1 // pred_fallthru
      _
    // Predicated region
    $region54: #{transformer_forward.6} parent=1 // pred_check
      _
    $region55: #{transformer_forward.6} parent=1 // pred_check_branch
      %280 = sbr.rel (0) target = $region57
    $region56: #{transformer_forward.6} parent=1 // pred_region
      _
    $region57: #{transformer_forward.6} parent=1 // pred_fallthru
      _
    // Predicated region
    $region58: #{transformer_forward.6} parent=1 // pred_check
      _
    $region59: #{transformer_forward.6} parent=1 // pred_check_branch
      %282 = sbr.rel (0) target = $region61
    $region60: #{transformer_forward.6} parent=1 // pred_region
      _
    $region61: #{transformer_forward.6} parent=1 // pred_fallthru
      _
    // Predicated region
    $region62: #{transformer_forward.6} parent=1 // pred_check
      _
    $region63: #{transformer_forward.6} parent=1 // pred_check_branch
      %284 = sbr.rel (0) target = $region65
    $region64: #{transformer_forward.6} parent=1 // pred_region
      _
    $region65: #{transformer_forward.6} parent=1 // pred_fallthru
      _
    // Predicated region
    $region66: #{transformer_forward.6} parent=1 // pred_check
      _
    $region67: #{transformer_forward.6} parent=1 // pred_check_branch
      %286 = sbr.rel (0) target = $region69
    $region68: #{transformer_forward.6} parent=1 // pred_region
      _
    $region69: #{transformer_forward.6} parent=1 // pred_fallthru
      _
    // Predicated region
    $region70: #{transformer_forward.6} parent=1 // pred_check
      _
    $region71: #{transformer_forward.6} parent=1 // pred_check_branch
      %288 = sbr.rel (0) target = $region73
    $region72: #{transformer_forward.6} parent=1 // pred_region
      _
    $region73: #{transformer_forward.6} parent=1 // pred_fallthru
      _
    %289 = vsyncpa [#allocation3], 1
    %290 = vsyncpa [#allocation5], 1
    %291 = vsyncpa [#allocation8], 1
    %292 = vsyncpa [#allocation11], 1

// kernel: transformer_forward.7
$region0: #{transformer_forward.7}
  #allocation0 [shape = 'u32[]', space=smem, size = 0x4, offset = 0x4, fixed_abs, tag = 'smem constant byte address 0x4 - core index']
  #allocation1 [shape = 'u32[72,128]{1,0:T(1,128)}', space=vmem, size = 0x9000, scoped, tag = 'internal scratch']
  %s0 = inlined_call_operand.vmem [shape: f32[2,8,32], index: 0, kind: input, shape index: {}]
  %s1 = inlined_call_operand.vmem [shape: f32[2,8,32], index: 1, kind: input, shape index: {}]
  %s2 = inlined_call_operand.vmem [shape: f32[2,8,32], index: 2, kind: input, shape index: {}]
  %s3 = inlined_call_operand.vmem [shape: f32[2,8,32], index: 3, kind: output, shape index: {}]
  %s4 = sld [smem:[#allocation0]]
  $region45: #{transformer_forward.7} parent=0
    _
  %s6 = ssub.s32 1, %s4
  %s7 = scalar_select 0, %s6, %s4
  loop: start=0, step=1, limit=4
  $region2: #{transformer_forward.7} parent=0 // loop_pre_header
    _
  $region3: #{transformer_forward.7} parent=0 // loop_header
    %s9 = sphi 0, %s13
    %p10 = scmp.ge.s32.totalorder %s9, 4
    %s16 = sphi 0, %s28
    %s17 = sphi 0, %s24
    %s18 = sphi 0, %s16
    %s19 = sphi 0, %s17
    %s20 = sphi 0, %s18
    %s21 = sphi 0, %s19
    %s33 = sphi 0, %s35
    %s36 = sphi 0, %s33
    %s37 = sphi 0, %s36
    %s53 = sphi 0, %s37
    %s61 = sphi 0, %s63
    %s64 = sphi 0, %s61
    %s65 = sphi 0, %s64
    %s81 = sphi 0, %s65
    %s89 = sphi 0, %s91
    %s92 = sphi 0, %s89
    %s93 = sphi 0, %s92
    %s109 = sphi 0, %s93
    %s117 = sphi 0, %s119
    %s120 = sphi 0, %s117
    %s121 = sphi 0, %s120
    %s137 = sphi 0, %s121
  $region4: #{transformer_forward.7} parent=0 // loop_header_branch
    %12 = sbr.rel (%p10) target = $region8
  $region5: #{transformer_forward.7} parent=0 // loop_body
    %s14 = ssub.s32 %s9, 1
    %s15 = ssub.s32 %s9, 2
    %s22 = sadd.s32 1, %s17
    %p23 = scmp.ge.s32.totalorder %s22, 1
    %s24 = scalar_select %p23, 0, %s22
    %s25 = sadd.s32 1, %s16
    %s26 = scalar_select %p23, %s25, %s16
    %p27 = scmp.ge.s32.totalorder %s26, 2
    %s28 = scalar_select %p27, 0, %s26
    %s29 = ssub.s32 %s16, %s28
    %s30 = ssub.s32 %s17, %s24
    %s31 = sor.u32 %s29, %s30
    %p32 = scmp.eq.s32.totalorder %s31, 0
    %s34 = sadd.s32 %s33, 1
    %s35 = scalar_select %p32, %s33, %s34
    %p38 = pneg %p32
    %p39 = scmp.eq.s32.totalorder %s9, 1
    %p40 = por %p38, %p39
    %p41 = scmp.ne.s32.totalorder %s33, %s36
    %p42 = scmp.eq.s32.totalorder %s9, 0
    %p43 = por %p41, %p42
    %p44 = scmp.ne.s32.totalorder %s33, %s36
    %p45 = scmp.eq.s32.totalorder %s14, 1
    %p46 = por %p44, %p45
    %p47 = scmp.ne.s32.totalorder %s36, %s37
    %p48 = scmp.eq.s32.totalorder %s14, 0
    %p49 = por %p47, %p48
    %p50 = scmp.ne.s32.totalorder %s36, %s37
    %p51 = scmp.eq.s32.totalorder %s15, 1
    %p52 = por %p50, %p51
    %p54 = scmp.ne.s32.totalorder %s37, %s53
    %p55 = scmp.eq.s32.totalorder %s15, 0
    %p56 = por %p54, %p55
    %s57 = ssub.s32 %s16, %s28
    %s58 = ssub.s32 %s17, %s24
    %s59 = sor.u32 %s57, %s58
    %p60 = scmp.eq.s32.totalorder %s59, 0
    %s62 = sadd.s32 %s61, 1
    %s63 = scalar_select %p60, %s61, %s62
    %p66 = pneg %p60
    %p67 = scmp.eq.s32.totalorder %s9, 1
    %p68 = por %p66, %p67
    %p69 = scmp.ne.s32.totalorder %s61, %s64
    %p70 = scmp.eq.s32.totalorder %s9, 0
    %p71 = por %p69, %p70
    %p72 = scmp.ne.s32.totalorder %s61, %s64
    %p73 = scmp.eq.s32.totalorder %s14, 1
    %p74 = por %p72, %p73
    %p75 = scmp.ne.s32.totalorder %s64, %s65
    %p76 = scmp.eq.s32.totalorder %s14, 0
    %p77 = por %p75, %p76
    %p78 = scmp.ne.s32.totalorder %s64, %s65
    %p79 = scmp.eq.s32.totalorder %s15, 1
    %p80 = por %p78, %p79
    %p82 = scmp.ne.s32.totalorder %s65, %s81
    %p83 = scmp.eq.s32.totalorder %s15, 0
    %p84 = por %p82, %p83
    %s85 = ssub.s32 %s16, %s28
    %s86 = ssub.s32 %s17, %s24
    %s87 = sor.u32 %s85, %s86
    %p88 = scmp.eq.s32.totalorder %s87, 0
    %s90 = sadd.s32 %s89, 1
    %s91 = scalar_select %p88, %s89, %s90
    %p94 = pneg %p88
    %p95 = scmp.eq.s32.totalorder %s9, 1
    %p96 = por %p94, %p95
    %p97 = scmp.ne.s32.totalorder %s89, %s92
    %p98 = scmp.eq.s32.totalorder %s9, 0
    %p99 = por %p97, %p98
    %p100 = scmp.ne.s32.totalorder %s89, %s92
    %p101 = scmp.eq.s32.totalorder %s14, 1
    %p102 = por %p100, %p101
    %p103 = scmp.ne.s32.totalorder %s92, %s93
    %p104 = scmp.eq.s32.totalorder %s14, 0
    %p105 = por %p103, %p104
    %p106 = scmp.ne.s32.totalorder %s92, %s93
    %p107 = scmp.eq.s32.totalorder %s15, 1
    %p108 = por %p106, %p107
    %p110 = scmp.ne.s32.totalorder %s93, %s109
    %p111 = scmp.eq.s32.totalorder %s15, 0
    %p112 = por %p110, %p111
    %s113 = ssub.s32 %s16, %s28
    %s114 = ssub.s32 %s17, %s24
    %s115 = sor.u32 %s113, %s114
    %p116 = scmp.eq.s32.totalorder %s115, 0
    %s118 = sadd.s32 %s117, 1
    %s119 = scalar_select %p116, %s117, %s118
    %p122 = pneg %p116
    %p123 = scmp.eq.s32.totalorder %s9, 1
    %p124 = por %p122, %p123
    %p125 = scmp.ne.s32.totalorder %s117, %s120
    %p126 = scmp.eq.s32.totalorder %s9, 0
    %p127 = por %p125, %p126
    %p128 = scmp.ne.s32.totalorder %s117, %s120
    %p129 = scmp.eq.s32.totalorder %s14, 1
    %p130 = por %p128, %p129
    %p131 = scmp.ne.s32.totalorder %s120, %s121
    %p132 = scmp.eq.s32.totalorder %s14, 0
    %p133 = por %p131, %p132
    %p134 = scmp.ne.s32.totalorder %s120, %s121
    %p135 = scmp.eq.s32.totalorder %s15, 1
    %p136 = por %p134, %p135
    %p138 = scmp.ne.s32.totalorder %s121, %s137
    %p139 = scmp.eq.s32.totalorder %s15, 0
    %p140 = por %p138, %p139
    %p141 = scmp.le.s32.totalorder 1, %s9
    %p142 = scmp.lt.s32.totalorder %s9, 3
    %p143 = pnand %p141, %p142
    %p144 = pneg %p143
    // Predicated region
    $region9: #{transformer_forward.7} parent=5 // pred_check
      _
    $region10: #{transformer_forward.7} parent=5 // pred_check_branch
      %146 = sbr.rel (%p143) target = $region12
    $region11: #{transformer_forward.7} parent=5 // pred_region
      %s147 = ssub.s32 %s9, 1
    $region12: #{transformer_forward.7} parent=5 // pred_fallthru
      _
    %p148 = scmp.lt.s32.totalorder %s9, 2
    // Predicated region
    $region13: #{transformer_forward.7} parent=5 // pred_check
      %p149 = pneg %p148
    $region14: #{transformer_forward.7} parent=5 // pred_check_branch
      %151 = sbr.rel (%p149) target = $region16
    $region15: #{transformer_forward.7} parent=5 // pred_region
      // Predicated region
      $region17: #{transformer_forward.7} parent=15 // pred_check
        %p152 = pneg %p43
      $region18: #{transformer_forward.7} parent=15 // pred_check_branch
        %154 = sbr.rel (%p152) target = $region20
      $region19: #{transformer_forward.7} parent=15 // pred_region
        %p155 = scmp.lt.s32.totalorder %s16, 1
        %s156 = scalar_select %p155, %s16, 1
        %p157 = scmp.lt.s32.totalorder %s17, 0
        %s158 = scalar_select %p157, %s17, 0
        %s159 = sadd.s32 %s158, %s156
        %s160 = smul.addr %s159, 8
        %s161 = scalar_lea.vmem %s0, %s160
      $region20: #{transformer_forward.7} parent=15 // pred_fallthru
        _
      // Predicated region
      $region21: #{transformer_forward.7} parent=15 // pred_check
        %p162 = pneg %p71
      $region22: #{transformer_forward.7} parent=15 // pred_check_branch
        %164 = sbr.rel (%p162) target = $region24
      $region23: #{transformer_forward.7} parent=15 // pred_region
        %p165 = scmp.lt.s32.totalorder %s16, 1
        %s166 = scalar_select %p165, %s16, 1
        %p167 = scmp.lt.s32.totalorder %s17, 0
        %s168 = scalar_select %p167, %s17, 0
        %s169 = sadd.s32 %s168, %s166
        %s170 = smul.addr %s169, 8
        %s171 = scalar_lea.vmem %s1, %s170
      $region24: #{transformer_forward.7} parent=15 // pred_fallthru
        _
      // Predicated region
      $region25: #{transformer_forward.7} parent=15 // pred_check
        %p172 = pneg %p99
      $region26: #{transformer_forward.7} parent=15 // pred_check_branch
        %174 = sbr.rel (%p172) target = $region28
      $region27: #{transformer_forward.7} parent=15 // pred_region
        %p175 = scmp.lt.s32.totalorder %s16, 1
        %s176 = scalar_select %p175, %s16, 1
        %p177 = scmp.lt.s32.totalorder %s17, 0
        %s178 = scalar_select %p177, %s17, 0
        %s179 = sadd.s32 %s178, %s176
        %s180 = smul.addr %s179, 8
        %s181 = scalar_lea.vmem %s2, %s180
      $region28: #{transformer_forward.7} parent=15 // pred_fallthru
        _
    $region16: #{transformer_forward.7} parent=5 // pred_fallthru
      _
    %p182 = scmp.le.s32.totalorder 1, %s9
    %p183 = scmp.lt.s32.totalorder %s9, 3
    %p184 = pnand %p182, %p183
    %p185 = pneg %p184
    // Predicated region
    $region29: #{transformer_forward.7} parent=5 // pred_check
      _
    $region30: #{transformer_forward.7} parent=5 // pred_check_branch
      %187 = sbr.rel (%p184) target = $region32
    $region31: #{transformer_forward.7} parent=5 // pred_region
      %s188 = ssub.s32 %s9, 1
      %p189 = scmp.lt.s32.totalorder %s18, 1
      %s190 = scalar_select %p189, %s18, 1
      %p191 = scmp.lt.s32.totalorder %s19, 0
      %s192 = scalar_select %p191, %s19, 0
      %s193 = sadd.s32 %s192, %s190
      %s194 = smul.addr %s193, 8
      %s195 = scalar_lea.vmem %s0, %s194
      %p196 = pneg %p49
      %p197 = pneg %p46
      %p198 = scmp.lt.s32.totalorder %s18, 1
      %s199 = scalar_select %p198, %s18, 1
      %p200 = scmp.lt.s32.totalorder %s19, 0
      %s201 = scalar_select %p200, %s19, 0
      %s202 = sadd.s32 %s201, %s199
      %s203 = smul.addr %s202, 8
      %s204 = scalar_lea.vmem %s1, %s203
      %p205 = pneg %p77
      %p206 = pneg %p74
      %p207 = scmp.lt.s32.totalorder %s18, 1
      %s208 = scalar_select %p207, %s18, 1
      %p209 = scmp.lt.s32.totalorder %s19, 0
      %s210 = scalar_select %p209, %s19, 0
      %s211 = sadd.s32 %s210, %s208
      %s212 = smul.addr %s211, 8
      %s213 = scalar_lea.vmem %s2, %s212
      %p214 = pneg %p105
      %p215 = pneg %p102
      %p216 = pneg %p133
      %p217 = pneg %p130
      %p218 = scmp.lt.s32.totalorder %s18, 1
      %s219 = scalar_select %p218, %s18, 1
      %p220 = scmp.lt.s32.totalorder %s19, 0
      %s221 = scalar_select %p220, %s19, 0
      %s222 = sadd.s32 %s221, %s219
      %s223 = smul.addr %s222, 8
      %s224 = scalar_lea.vmem %s3, %s223
      %p225 = scmp.lt.s32.totalorder %s18, 1
      %s226 = scalar_select %p225, %s18, 1
      %p227 = scmp.lt.s32.totalorder %s19, 0
      %s228 = scalar_select %p227, %s19, 0
      %s229 = sadd.s32 %s228, %s226
      %s230 = smul.addr %s229, 8
      %s231 = scalar_lea.vmem %s0, %s230
      %p232 = scmp.lt.s32.totalorder %s18, 1
      %s233 = scalar_select %p232, %s18, 1
      %p234 = scmp.lt.s32.totalorder %s19, 0
      %s235 = scalar_select %p234, %s19, 0
      %s236 = sadd.s32 %s235, %s233
      %s237 = smul.addr %s236, 8
      %s238 = scalar_lea.vmem %s1, %s237
      %p239 = scmp.lt.s32.totalorder %s18, 1
      %s240 = scalar_select %p239, %s18, 1
      %p241 = scmp.lt.s32.totalorder %s19, 0
      %s242 = scalar_select %p241, %s19, 0
      %s243 = sadd.s32 %s242, %s240
      %s244 = smul.addr %s243, 8
      %s245 = scalar_lea.vmem %s2, %s244
      %p246 = scmp.lt.s32.totalorder %s18, 1
      %s247 = scalar_select %p246, %s18, 1
      %p248 = scmp.lt.s32.totalorder %s19, 0
      %s249 = scalar_select %p248, %s19, 0
      %s250 = sadd.s32 %s249, %s247
      %s251 = smul.addr %s250, 8
      %s252 = scalar_lea.vmem %s3, %s251
      %v253 = vld [vmem:[%s231] sm:$0xff]
      %v254 = vld [vmem:[%s238] sm:$0xff]
      %v255 = vld [vmem:[%s245] sm:$0xff]
      %vm256 = vcmask 64512
      %v258 = vsel %vm256, %v253, 0
      %v261 = vsel %vm256, %v254, 0
      %263 = vmatpush.xpose.msra.mxu0 0.0
      %264 = vmatpush.xpose.msra.mxu0 0.0
      %265 = vmatpush.xpose.msra.mxu0 0.0
      %266 = vmatpush.xpose.msra.mxu0 0.0
      %267 = vmatpush.xpose.msra.mxu0 0.0
      %268 = vmatpush.xpose.msra.mxu0 0.0
      %269 = vmatpush.xpose.msra.mxu0 0.0
      %270 = vmatpush.xpose.msra.mxu0 0.0
      %271 = vmatpush.xpose.msra.mxu0 0.0
      %272 = vmatpush.xpose.msra.mxu0 0.0
      %273 = vmatpush.xpose.msra.mxu0 0.0
      %274 = vmatpush.xpose.msra.mxu0 0.0
      %275 = vmatpush.xpose.msra.mxu0 0.0
      %276 = vmatpush.xpose.msra.mxu0 0.0
      %277 = vmatpush.xpose.msra.mxu0 0.0
      %278 = vmatpush.xpose.msra.mxu0 %v261
      %279 = vmatmul.f32.gmra.mxu0 %v258
      %v280 = vpop.f32.mrf.mxu0
      %v281 = vadd.f32 0.0, %v280
      %282 = vdwg.mxu0
      %v283 = vsel %vm256, %v281, -inf
      %284 = vmax.xlane.f32.xlu0 %v283
      %v285 = vpop.xlane.xlu0 %284
      %v286 = vsub.f32 %v281, %v285
      %v287 = vmul.f32 %v286, 1.442695
      %v288 = vpow.pop %v287
      %v289 = vsel %vm256, %v288, 0.0
      %290 = vadd.xlane.f32.xlu0 %v289
      %v291 = vpop.xlane.xlu0 %290
      %v293 = vsel %vm256, %v288, 0
      %295 = vmatpush.msra.mxu0 0.0
      %296 = vmatpush.msra.mxu0 0.0
      %297 = vmatpush.msra.mxu0 0.0
      %298 = vmatpush.msra.mxu0 0.0
      %299 = vmatpush.msra.mxu0 0.0
      %300 = vmatpush.msra.mxu0 0.0
      %301 = vmatpush.msra.mxu0 0.0
      %302 = vmatpush.msra.mxu0 0.0
      %303 = vmatpush.msra.mxu0 0.0
      %304 = vmatpush.msra.mxu0 0.0
      %305 = vmatpush.msra.mxu0 0.0
      %306 = vmatpush.msra.mxu0 0.0
      %307 = vmatpush.msra.mxu0 0.0
      %308 = vmatpush.msra.mxu0 0.0
      %309 = vmatpush.msra.mxu0 0.0
      %310 = vmatpush.msra.mxu0 %v255
      %311 = vmatmul.f32.gmra.mxu0 %v293
      %v312 = vpop.f32.mrf.mxu0
      %v313 = vadd.f32 0.0, %v312
      %314 = vdwg.mxu0
      %v315 = vrcp.pop %v291
      %v316 = vmul.f32 %v291, %v315
      %v317 = vsub.f32 1.0, %v316
      %v318 = vmul.f32 %v315, %v317
      %v319 = vadd.f32 %v315, %v318
      %vm320 = vweird.f32 %v291
      %vm321 = vweird.f32 %v315
      %vm322 = vmor %vm320, %vm321
      %v323 = vsel %vm322, %v315, %v319
      %v324 = vand.u32 2147483647, %v291
      %vm325 = vcmp.eq.f32.partialorder %v324, 8.507059e+37
      %v326 = vand.u32 %v291, 2147483648
      %v327 = vor.u32 1.1754944e-38, %v326
      %v328 = vsel %vm325, %v327, %v323
      %v329 = vmul.f32 1.0, %v328
      %v330 = vmul.f32 %v313, %v329
      %331 = vrot.lane.b32.xlu0 %v253, 120
      %v332 = vpop.permute.xlu0 %331
      %333 = vrot.lane.b32.xlu0 %v254, 120
      %v334 = vpop.permute.xlu0 %333
      %v335 = vsel %vm256, %v332, 0
      %v337 = vsel %vm256, %v334, 0
      %339 = vmatpush.xpose.msra.mxu0 0.0
      %340 = vmatpush.xpose.msra.mxu0 0.0
      %341 = vmatpush.xpose.msra.mxu0 0.0
      %342 = vmatpush.xpose.msra.mxu0 0.0
      %343 = vmatpush.xpose.msra.mxu0 0.0
      %344 = vmatpush.xpose.msra.mxu0 0.0
      %345 = vmatpush.xpose.msra.mxu0 0.0
      %346 = vmatpush.xpose.msra.mxu0 0.0
      %347 = vmatpush.xpose.msra.mxu0 0.0
      %348 = vmatpush.xpose.msra.mxu0 0.0
      %349 = vmatpush.xpose.msra.mxu0 0.0
      %350 = vmatpush.xpose.msra.mxu0 0.0
      %351 = vmatpush.xpose.msra.mxu0 0.0
      %352 = vmatpush.xpose.msra.mxu0 0.0
      %353 = vmatpush.xpose.msra.mxu0 0.0
      %354 = vmatpush.xpose.msra.mxu0 %v337
      %355 = vmatmul.f32.gmra.mxu0 %v335
      %v356 = vpop.f32.mrf.mxu0
      %v357 = vadd.f32 0.0, %v356
      %358 = vdwg.mxu0
      %v359 = vsel %vm256, %v357, -inf
      %360 = vmax.xlane.f32.xlu0 %v359
      %v361 = vpop.xlane.xlu0 %360
      %v362 = vsub.f32 %v357, %v361
      %v363 = vmul.f32 %v362, 1.442695
      %v364 = vpow.pop %v363
      %v365 = vsel %vm256, %v364, 0.0
      %366 = vadd.xlane.f32.xlu0 %v365
      %v367 = vpop.xlane.xlu0 %366
      %369 = vrot.lane.b32.xlu0 %v255, 120
      %v370 = vpop.permute.xlu0 %369
      %v373 = vsel %vm256, %v364, 0
      %375 = vmatpush.msra.mxu0 0.0
      %376 = vmatpush.msra.mxu0 0.0
      %377 = vmatpush.msra.mxu0 0.0
      %378 = vmatpush.msra.mxu0 0.0
      %379 = vmatpush.msra.mxu0 0.0
      %380 = vmatpush.msra.mxu0 0.0
      %381 = vmatpush.msra.mxu0 0.0
      %382 = vmatpush.msra.mxu0 0.0
      %383 = vmatpush.msra.mxu0 0.0
      %384 = vmatpush.msra.mxu0 0.0
      %385 = vmatpush.msra.mxu0 0.0
      %386 = vmatpush.msra.mxu0 0.0
      %387 = vmatpush.msra.mxu0 0.0
      %388 = vmatpush.msra.mxu0 0.0
      %389 = vmatpush.msra.mxu0 0.0
      %390 = vmatpush.msra.mxu0 %v370
      %391 = vmatmul.f32.gmra.mxu0 %v373
      %v392 = vpop.f32.mrf.mxu0
      %v393 = vadd.f32 0.0, %v392
      %394 = vdwg.mxu0
      %v395 = vrcp.pop %v367
      %v396 = vmul.f32 %v367, %v395
      %v397 = vsub.f32 1.0, %v396
      %v398 = vmul.f32 %v395, %v397
      %v399 = vadd.f32 %v395, %v398
      %vm400 = vweird.f32 %v367
      %vm401 = vweird.f32 %v395
      %vm402 = vmor %vm400, %vm401
      %v403 = vsel %vm402, %v395, %v399
      %v404 = vand.u32 2147483647, %v367
      %vm405 = vcmp.eq.f32.partialorder %v404, 8.507059e+37
      %v406 = vand.u32 %v367, 2147483648
      %v407 = vor.u32 1.1754944e-38, %v406
      %v408 = vsel %vm405, %v407, %v403
      %v409 = vmul.f32 1.0, %v408
      %v410 = vmul.f32 %v393, %v409
      %411 = vrot.lane.b32.xlu0 %v253, 112
      %v412 = vpop.permute.xlu0 %411
      %413 = vrot.lane.b32.xlu0 %v254, 112
      %v414 = vpop.permute.xlu0 %413
      %v415 = vsel %vm256, %v412, 0
      %v417 = vsel %vm256, %v414, 0
      %419 = vmatpush.xpose.msra.mxu0 0.0
      %420 = vmatpush.xpose.msra.mxu0 0.0
      %421 = vmatpush.xpose.msra.mxu0 0.0
      %422 = vmatpush.xpose.msra.mxu0 0.0
      %423 = vmatpush.xpose.msra.mxu0 0.0
      %424 = vmatpush.xpose.msra.mxu0 0.0
      %425 = vmatpush.xpose.msra.mxu0 0.0
      %426 = vmatpush.xpose.msra.mxu0 0.0
      %427 = vmatpush.xpose.msra.mxu0 0.0
      %428 = vmatpush.xpose.msra.mxu0 0.0
      %429 = vmatpush.xpose.msra.mxu0 0.0
      %430 = vmatpush.xpose.msra.mxu0 0.0
      %431 = vmatpush.xpose.msra.mxu0 0.0
      %432 = vmatpush.xpose.msra.mxu0 0.0
      %433 = vmatpush.xpose.msra.mxu0 0.0
      %434 = vmatpush.xpose.msra.mxu0 %v417
      %435 = vmatmul.f32.gmra.mxu0 %v415
      %v436 = vpop.f32.mrf.mxu0
      %v437 = vadd.f32 0.0, %v436
      %438 = vdwg.mxu0
      %v439 = vsel %vm256, %v437, -inf
      %440 = vmax.xlane.f32.xlu0 %v439
      %v441 = vpop.xlane.xlu0 %440
      %v442 = vsub.f32 %v437, %v441
      %v443 = vmul.f32 %v442, 1.442695
      %v444 = vpow.pop %v443
      %v445 = vsel %vm256, %v444, 0.0
      %446 = vadd.xlane.f32.xlu0 %v445
      %v447 = vpop.xlane.xlu0 %446
      %448 = vrot.lane.b32.xlu0 %v255, 112
      %v449 = vpop.permute.xlu0 %448
      %v452 = vsel %vm256, %v444, 0
      %454 = vmatpush.msra.mxu0 0.0
      %455 = vmatpush.msra.mxu0 0.0
      %456 = vmatpush.msra.mxu0 0.0
      %457 = vmatpush.msra.mxu0 0.0
      %458 = vmatpush.msra.mxu0 0.0
      %459 = vmatpush.msra.mxu0 0.0
      %460 = vmatpush.msra.mxu0 0.0
      %461 = vmatpush.msra.mxu0 0.0
      %462 = vmatpush.msra.mxu0 0.0
      %463 = vmatpush.msra.mxu0 0.0
      %464 = vmatpush.msra.mxu0 0.0
      %465 = vmatpush.msra.mxu0 0.0
      %466 = vmatpush.msra.mxu0 0.0
      %467 = vmatpush.msra.mxu0 0.0
      %468 = vmatpush.msra.mxu0 0.0
      %469 = vmatpush.msra.mxu0 %v449
      %470 = vmatmul.f32.gmra.mxu0 %v452
      %v471 = vpop.f32.mrf.mxu0
      %v472 = vadd.f32 0.0, %v471
      %473 = vdwg.mxu0
      %v474 = vrcp.pop %v447
      %v475 = vmul.f32 %v447, %v474
      %v476 = vsub.f32 1.0, %v475
      %v477 = vmul.f32 %v474, %v476
      %v478 = vadd.f32 %v474, %v477
      %vm479 = vweird.f32 %v447
      %vm480 = vweird.f32 %v474
      %vm481 = vmor %vm479, %vm480
      %v482 = vsel %vm481, %v474, %v478
      %v483 = vand.u32 2147483647, %v447
      %vm484 = vcmp.eq.f32.partialorder %v483, 8.507059e+37
      %v485 = vand.u32 %v447, 2147483648
      %v486 = vor.u32 1.1754944e-38, %v485
      %v487 = vsel %vm484, %v486, %v482
      %v488 = vmul.f32 1.0, %v487
      %v489 = vmul.f32 %v472, %v488
      %490 = vrot.lane.b32.xlu0 %v253, 104
      %v491 = vpop.permute.xlu0 %490
      %492 = vrot.lane.b32.xlu0 %v254, 104
      %v493 = vpop.permute.xlu0 %492
      %v494 = vsel %vm256, %v491, 0
      %v496 = vsel %vm256, %v493, 0
      %498 = vmatpush.xpose.msra.mxu0 0.0
      %499 = vmatpush.xpose.msra.mxu0 0.0
      %500 = vmatpush.xpose.msra.mxu0 0.0
      %501 = vmatpush.xpose.msra.mxu0 0.0
      %502 = vmatpush.xpose.msra.mxu0 0.0
      %503 = vmatpush.xpose.msra.mxu0 0.0
      %504 = vmatpush.xpose.msra.mxu0 0.0
      %505 = vmatpush.xpose.msra.mxu0 0.0
      %506 = vmatpush.xpose.msra.mxu0 0.0
      %507 = vmatpush.xpose.msra.mxu0 0.0
      %508 = vmatpush.xpose.msra.mxu0 0.0
      %509 = vmatpush.xpose.msra.mxu0 0.0
      %510 = vmatpush.xpose.msra.mxu0 0.0
      %511 = vmatpush.xpose.msra.mxu0 0.0
      %512 = vmatpush.xpose.msra.mxu0 0.0
      %513 = vmatpush.xpose.msra.mxu0 %v496
      %514 = vmatmul.f32.gmra.mxu0 %v494
      %v515 = vpop.f32.mrf.mxu0
      %v516 = vadd.f32 0.0, %v515
      %517 = vdwg.mxu0
      %v518 = vsel %vm256, %v516, -inf
      %519 = vmax.xlane.f32.xlu0 %v518
      %v520 = vpop.xlane.xlu0 %519
      %v521 = vsub.f32 %v516, %v520
      %v522 = vmul.f32 %v521, 1.442695
      %v523 = vpow.pop %v522
      %v524 = vsel %vm256, %v523, 0.0
      %525 = vadd.xlane.f32.xlu0 %v524
      %v526 = vpop.xlane.xlu0 %525
      %527 = vrot.lane.b32.xlu0 %v255, 104
      %v528 = vpop.permute.xlu0 %527
      %v531 = vsel %vm256, %v523, 0
      %533 = vmatpush.msra.mxu0 0.0
      %534 = vmatpush.msra.mxu0 0.0
      %535 = vmatpush.msra.mxu0 0.0
      %536 = vmatpush.msra.mxu0 0.0
      %537 = vmatpush.msra.mxu0 0.0
      %538 = vmatpush.msra.mxu0 0.0
      %539 = vmatpush.msra.mxu0 0.0
      %540 = vmatpush.msra.mxu0 0.0
      %541 = vmatpush.msra.mxu0 0.0
      %542 = vmatpush.msra.mxu0 0.0
      %543 = vmatpush.msra.mxu0 0.0
      %544 = vmatpush.msra.mxu0 0.0
      %545 = vmatpush.msra.mxu0 0.0
      %546 = vmatpush.msra.mxu0 0.0
      %547 = vmatpush.msra.mxu0 0.0
      %548 = vmatpush.msra.mxu0 %v528
      %549 = vmatmul.f32.gmra.mxu0 %v531
      %v550 = vpop.f32.mrf.mxu0
      %v551 = vadd.f32 0.0, %v550
      %552 = vdwg.mxu0
      %v553 = vrcp.pop %v526
      %v554 = vmul.f32 %v526, %v553
      %v555 = vsub.f32 1.0, %v554
      %v556 = vmul.f32 %v553, %v555
      %v557 = vadd.f32 %v553, %v556
      %vm558 = vweird.f32 %v526
      %vm559 = vweird.f32 %v553
      %vm560 = vmor %vm558, %vm559
      %v561 = vsel %vm560, %v553, %v557
      %v562 = vand.u32 2147483647, %v526
      %vm563 = vcmp.eq.f32.partialorder %v562, 8.507059e+37
      %v564 = vand.u32 %v526, 2147483648
      %v565 = vor.u32 1.1754944e-38, %v564
      %v566 = vsel %vm563, %v565, %v561
      %v567 = vmul.f32 1.0, %v566
      %v568 = vmul.f32 %v551, %v567
      %570 = vrot.lane.b32.xlu0 %v410, 8
      %v571 = vpop.permute.xlu0 %570
      %574 = vrot.lane.b32.xlu0 %v489, 16
      %v575 = vpop.permute.xlu0 %574
      %578 = vrot.lane.b32.xlu0 %v568, 24
      %v579 = vpop.permute.xlu0 %578
      %v581 = vsel %vm256, %v330, %v571
      %vm582 = vcmask 130048
      %v583 = vsel %vm582, %v581, %v575
      %vm584 = vcmask 195584
      %v585 = vsel %vm584, %v583, %v579
      %vm586 = vcmask 261120
      %587 = vst.msk [vmem:[%s252] sm:$0xff] %vm586, %v585
      %p588 = scmp.lt.s32.totalorder %s18, 1
      %s589 = scalar_select %p588, %s18, 1
      %p590 = scmp.lt.s32.totalorder %s19, 0
      %s591 = scalar_select %p590, %s19, 0
      %s592 = sadd.s32 %s591, %s589
      %s593 = smul.addr %s592, 8
      %s594 = scalar_lea.vmem %s3, %s593
      // Predicated region
      $region33: #{transformer_forward.7} parent=31 // pred_check
        %p595 = pneg %p130
      $region34: #{transformer_forward.7} parent=31 // pred_check_branch
        %597 = sbr.rel (%p595) target = $region36
      $region35: #{transformer_forward.7} parent=31 // pred_region
        _
      $region36: #{transformer_forward.7} parent=31 // pred_fallthru
        _
    $region32: #{transformer_forward.7} parent=5 // pred_fallthru
      _
    %p598 = scmp.le.s32.totalorder 2, %s9
    // Predicated region
    $region37: #{transformer_forward.7} parent=5 // pred_check
      %p599 = pneg %p598
    $region38: #{transformer_forward.7} parent=5 // pred_check_branch
      %601 = sbr.rel (%p599) target = $region40
    $region39: #{transformer_forward.7} parent=5 // pred_region
      %s602 = ssub.s32 %s9, 2
      // Predicated region
      $region41: #{transformer_forward.7} parent=39 // pred_check
        %p603 = pneg %p136
      $region42: #{transformer_forward.7} parent=39 // pred_check_branch
        %605 = sbr.rel (%p603) target = $region44
      $region43: #{transformer_forward.7} parent=39 // pred_region
        %p606 = scmp.lt.s32.totalorder %s20, 1
        %s607 = scalar_select %p606, %s20, 1
        %p608 = scmp.lt.s32.totalorder %s21, 0
        %s609 = scalar_select %p608, %s21, 0
        %s610 = sadd.s32 %s609, %s607
        %s611 = smul.addr %s610, 8
        %s612 = scalar_lea.vmem %s3, %s611
      $region44: #{transformer_forward.7} parent=39 // pred_fallthru
        _
    $region40: #{transformer_forward.7} parent=5 // pred_fallthru
      _
  $region6: #{transformer_forward.7} parent=0 // loop_footer
    %s13 = sadd.s32 1, %s9
  $region7: #{transformer_forward.7} parent=0 // loop_footer_branch
    %8 = sbr.rel target = $region3
  $region8: #{transformer_forward.7} parent=0 // loop_exit
    _

// kernel: transformer_forward.8
$region0: #{transformer_forward.8}
  #allocation0 [shape = 'u32[]', space=smem, size = 0x4, offset = 0x4, fixed_abs, tag = 'smem constant byte address 0x4 - core index']
  #allocation1 [shape = 'u32[72,128]{1,0:T(1,128)}', space=vmem, size = 0x9000, scoped, tag = 'internal scratch']
  %s0 = inlined_call_operand.vmem [shape: f32[16,32], index: 0, kind: input, shape index: {}]
  %s1 = inlined_call_operand.hbm [shape: f32[16,32], index: 1, kind: input, shape index: {}]
  %s2 = inlined_call_operand.vmem [shape: f32[32,32], index: 2, kind: input, shape index: {}]
  %s3 = inlined_call_operand.hbm [shape: f32[1,32], index: 3, kind: input, shape index: {}]
  %s4 = inlined_call_operand.hbm [shape: f32[1,32], index: 4, kind: input, shape index: {}]
  %s5 = inlined_call_operand.hbm [shape: f32[1,32], index: 5, kind: input, shape index: {}]
  %s6 = inlined_call_operand.vmem [shape: f32[32,64], index: 6, kind: input, shape index: {}]
  %s7 = inlined_call_operand.hbm [shape: f32[1,64], index: 7, kind: input, shape index: {}]
  %s8 = inlined_call_operand.vmem [shape: f32[64,32], index: 8, kind: input, shape index: {}]
  %s9 = inlined_call_operand.hbm [shape: f32[1,32], index: 9, kind: input, shape index: {}]
  %s10 = inlined_call_operand.vmem [shape: f32[16,32], index: 10, kind: output, shape index: {}]
  %s11 = sld [smem:[#allocation0]]
  $region74: #{transformer_forward.8} parent=0
    _
  %s13 = ssub.s32 1, %s11
  %s14 = scalar_select 0, %s13, %s11
  $region1: #{transformer_forward.8} parent=0
    #allocation2 [shape = 'u8[8192]{0}', space=vmem, size = 0x2000, scoped, tag = 'input window, operand 1, single buffered']
    #allocation3 [shape = 's32[1]{0}', space=sflag, size = 0x4, scoped, tag = 'scoped memory for transformer_forward.8']
    #allocation4 [shape = 'u8[512]{0}', space=vmem, size = 0x400, scoped, tag = 'input window, operand 3, single buffered']
    #allocation5 [shape = 's32[1]{0}', space=sflag, size = 0x4, scoped, tag = 'scoped memory for transformer_forward.8']
    #allocation6 [shape = 'u8[512]{0}', space=vmem, size = 0x400, scoped, tag = 'input window, operand 4, single buffered']
    #allocation7 [shape = 'u8[512]{0}', space=vmem, size = 0x400, scoped, tag = 'input window, operand 5, single buffered']
    #allocation8 [shape = 's32[1]{0}', space=sflag, size = 0x4, scoped, tag = 'scoped memory for transformer_forward.8']
    #allocation9 [shape = 'u8[512]{0}', space=vmem, size = 0x400, scoped, tag = 'input window, operand 7, single buffered']
    #allocation10 [shape = 'u8[512]{0}', space=vmem, size = 0x400, scoped, tag = 'input window, operand 9, single buffered']
    #allocation11 [shape = 's32[1]{0}', space=sflag, size = 0x4, scoped, tag = 'scoped memory for transformer_forward.8']
    %15 = vsyncpa [#allocation3], 0
    %16 = vsyncpa [#allocation5], 0
    %17 = vsyncpa [#allocation8], 0
    %18 = vsyncpa [#allocation11], 0
    // Predicated region
    $region2: #{transformer_forward.8} parent=1 // pred_check
      _
    $region3: #{transformer_forward.8} parent=1 // pred_check_branch
      %20 = sbr.rel (0) target = $region5
    $region4: #{transformer_forward.8} parent=1 // pred_region
      _
    $region5: #{transformer_forward.8} parent=1 // pred_fallthru
      _
    // Predicated region
    $region6: #{transformer_forward.8} parent=1 // pred_check
      _
    $region7: #{transformer_forward.8} parent=1 // pred_check_branch
      %22 = sbr.rel (0) target = $region9
    $region8: #{transformer_forward.8} parent=1 // pred_region
      %24 = vsyncadd [#allocation3], 0
      %s25 = sshll.u32 %s1, 4
      %s26 = int_to_ptr.hbm [resolvable:$true] %s25
      %s27 = sshll.u32 [#allocation2], 4
      %s28 = int_to_ptr.vmem [resolvable:$true] %s27
      %33 = dma.hbm_to_vmem [thread:$0]  %s26, 256, %s28, [#allocation3], 128, 128, 8
    $region9: #{transformer_forward.8} parent=1 // pred_fallthru
      _
    // Predicated region
    $region10: #{transformer_forward.8} parent=1 // pred_check
      _
    $region11: #{transformer_forward.8} parent=1 // pred_check_branch
      %35 = sbr.rel (0) target = $region13
    $region12: #{transformer_forward.8} parent=1 // pred_region
      _
    $region13: #{transformer_forward.8} parent=1 // pred_fallthru
      _
    // Predicated region
    $region14: #{transformer_forward.8} parent=1 // pred_check
      _
    $region15: #{transformer_forward.8} parent=1 // pred_check_branch
      %37 = sbr.rel (0) target = $region17
    $region16: #{transformer_forward.8} parent=1 // pred_region
      %39 = vsyncadd [#allocation5], 0
      %s41 = sshll.u32 %s3, 4
      %s42 = int_to_ptr.hbm [resolvable:$true] %s41
      %s43 = sshll.u32 [#allocation4], 4
      %s44 = int_to_ptr.vmem [resolvable:$true] %s43
      %46 = dma.hbm_to_vmem [thread:$0]  %s42, 16, %s44, [#allocation5]
    $region17: #{transformer_forward.8} parent=1 // pred_fallthru
      _
    // Predicated region
    $region18: #{transformer_forward.8} parent=1 // pred_check
      _
    $region19: #{transformer_forward.8} parent=1 // pred_check_branch
      %48 = sbr.rel (0) target = $region21
    $region20: #{transformer_forward.8} parent=1 // pred_region
      %50 = vsyncadd [#allocation5], 0
      %s52 = sshll.u32 %s4, 4
      %s53 = int_to_ptr.hbm [resolvable:$true] %s52
      %s54 = sshll.u32 [#allocation6], 4
      %s55 = int_to_ptr.vmem [resolvable:$true] %s54
      %57 = dma.hbm_to_vmem [thread:$0]  %s53, 16, %s55, [#allocation5]
    $region21: #{transformer_forward.8} parent=1 // pred_fallthru
      _
    // Predicated region
    $region22: #{transformer_forward.8} parent=1 // pred_check
      _
    $region23: #{transformer_forward.8} parent=1 // pred_check_branch
      %59 = sbr.rel (0) target = $region25
    $region24: #{transformer_forward.8} parent=1 // pred_region
      %61 = vsyncadd [#allocation8], 0
      %s63 = sshll.u32 %s5, 4
      %s64 = int_to_ptr.hbm [resolvable:$true] %s63
      %s65 = sshll.u32 [#allocation7], 4
      %s66 = int_to_ptr.vmem [resolvable:$true] %s65
      %68 = dma.hbm_to_vmem [thread:$0]  %s64, 16, %s66, [#allocation8]
    $region25: #{transformer_forward.8} parent=1 // pred_fallthru
      _
    // Predicated region
    $region26: #{transformer_forward.8} parent=1 // pred_check
      _
    $region27: #{transformer_forward.8} parent=1 // pred_check_branch
      %70 = sbr.rel (0) target = $region29
    $region28: #{transformer_forward.8} parent=1 // pred_region
      _
    $region29: #{transformer_forward.8} parent=1 // pred_fallthru
      _
    // Predicated region
    $region30: #{transformer_forward.8} parent=1 // pred_check
      _
    $region31: #{transformer_forward.8} parent=1 // pred_check_branch
      %72 = sbr.rel (0) target = $region33
    $region32: #{transformer_forward.8} parent=1 // pred_region
      %74 = vsyncadd [#allocation8], 0
      %s76 = sshll.u32 %s7, 4
      %s77 = int_to_ptr.hbm [resolvable:$true] %s76
      %s78 = sshll.u32 [#allocation9], 4
      %s79 = int_to_ptr.vmem [resolvable:$true] %s78
      %81 = dma.hbm_to_vmem [thread:$0]  %s77, 16, %s79, [#allocation8]
    $region33: #{transformer_forward.8} parent=1 // pred_fallthru
      _
    // Predicated region
    $region34: #{transformer_forward.8} parent=1 // pred_check
      _
    $region35: #{transformer_forward.8} parent=1 // pred_check_branch
      %83 = sbr.rel (0) target = $region37
    $region36: #{transformer_forward.8} parent=1 // pred_region
      _
    $region37: #{transformer_forward.8} parent=1 // pred_fallthru
      _
    // Predicated region
    $region38: #{transformer_forward.8} parent=1 // pred_check
      _
    $region39: #{transformer_forward.8} parent=1 // pred_check_branch
      %85 = sbr.rel (0) target = $region41
    $region40: #{transformer_forward.8} parent=1 // pred_region
      %87 = vsyncadd [#allocation11], 0
      %s89 = sshll.u32 %s9, 4
      %s90 = int_to_ptr.hbm [resolvable:$true] %s89
      %s91 = sshll.u32 [#allocation10], 4
      %s92 = int_to_ptr.vmem [resolvable:$true] %s91
      %94 = dma.hbm_to_vmem [thread:$0]  %s90, 16, %s92, [#allocation11]
    $region41: #{transformer_forward.8} parent=1 // pred_fallthru
      _
    // Predicated region
    $region42: #{transformer_forward.8} parent=1 // pred_check
      _
    $region43: #{transformer_forward.8} parent=1 // pred_check_branch
      %96 = sbr.rel (0) target = $region45
    $region44: #{transformer_forward.8} parent=1 // pred_region
      %98 = dma.done [#allocation3], 256
    $region45: #{transformer_forward.8} parent=1 // pred_fallthru
      _
    // Predicated region
    $region46: #{transformer_forward.8} parent=1 // pred_check
      _
    $region47: #{transformer_forward.8} parent=1 // pred_check_branch
      %100 = sbr.rel (0) target = $region49
    $region48: #{transformer_forward.8} parent=1 // pred_region
      %102 = dma.done [#allocation5], 16
    $region49: #{transformer_forward.8} parent=1 // pred_fallthru
      _
    // Predicated region
    $region50: #{transformer_forward.8} parent=1 // pred_check
      _
    $region51: #{transformer_forward.8} parent=1 // pred_check_branch
      %104 = sbr.rel (0) target = $region53
    $region52: #{transformer_forward.8} parent=1 // pred_region
      %106 = dma.done [#allocation5], 16
    $region53: #{transformer_forward.8} parent=1 // pred_fallthru
      _
    // Predicated region
    $region54: #{transformer_forward.8} parent=1 // pred_check
      _
    $region55: #{transformer_forward.8} parent=1 // pred_check_branch
      %108 = sbr.rel (0) target = $region57
    $region56: #{transformer_forward.8} parent=1 // pred_region
      %110 = dma.done [#allocation8], 16
    $region57: #{transformer_forward.8} parent=1 // pred_fallthru
      _
    // Predicated region
    $region58: #{transformer_forward.8} parent=1 // pred_check
      _
    $region59: #{transformer_forward.8} parent=1 // pred_check_branch
      %112 = sbr.rel (0) target = $region61
    $region60: #{transformer_forward.8} parent=1 // pred_region
      %114 = dma.done [#allocation8], 16
    $region61: #{transformer_forward.8} parent=1 // pred_fallthru
      _
    // Predicated region
    $region62: #{transformer_forward.8} parent=1 // pred_check
      _
    $region63: #{transformer_forward.8} parent=1 // pred_check_branch
      %116 = sbr.rel (0) target = $region65
    $region64: #{transformer_forward.8} parent=1 // pred_region
      %118 = dma.done [#allocation11], 16
    $region65: #{transformer_forward.8} parent=1 // pred_fallthru
      _
    %v119 = vld [vmem:[%s0] sm:$0xff]
    %v120 = vld [vmem:[%s0 + $0x8] sm:$0xff]
    %v121 = vld [vmem:[%s2] sm:$0xff]
    %v122 = vld [vmem:[%s2 + $0x8] sm:$0xff]
    %v123 = vld [vmem:[%s2 + $0x10] sm:$0xff]
    %v124 = vld [vmem:[%s2 + $0x18] sm:$0xff]
    %v125 = vld [vmem:[#allocation4] sm:$0x1]
    %v127 = vperm.slane %v125, 0
    %vm129 = vcmask 261120
    %v131 = vsel %vm129, %v119, 0
    %v134 = vsel %vm129, %v120, 0
    %136 = vmatpush.msra.mxu0 0.0
    %137 = vmatpush.msra.mxu0 0.0
    %138 = vmatpush.msra.mxu0 0.0
    %139 = vmatpush.msra.mxu0 0.0
    %140 = vmatpush.msra.mxu0 0.0
    %141 = vmatpush.msra.mxu0 0.0
    %142 = vmatpush.msra.mxu0 0.0
    %143 = vmatpush.msra.mxu0 0.0
    %144 = vmatpush.msra.mxu0 0.0
    %145 = vmatpush.msra.mxu0 0.0
    %146 = vmatpush.msra.mxu0 0.0
    %147 = vmatpush.msra.mxu0 0.0
    %148 = vmatpush.msra.mxu0 %v124
    %149 = vmatpush.msra.mxu0 %v123
    %150 = vmatpush.msra.mxu0 %v122
    %151 = vmatpush.msra.mxu0 %v121
    %152 = vmatmul.f32.gmra.mxu0 %v131
    %v153 = vpop.f32.mrf.mxu0
    %v154 = vadd.f32 %v127, %v153
    %155 = vmatmul.f32.gmra.mxu0 %v134
    %v156 = vpop.f32.mrf.mxu0
    %v157 = vadd.f32 %v127, %v156
    %158 = vdwg.mxu0
    %v159 = vld [vmem:[#allocation2] sm:$0xff]
    %v160 = vld [vmem:[#allocation2 + $0x8] sm:$0xff]
    %v161 = vadd.f32 %v154, %v159
    %v162 = vadd.f32 %v157, %v160
    %v163 = vld [vmem:[#allocation6] sm:$0x1]
    %v164 = vld [vmem:[#allocation7] sm:$0x1]
    %v165 = vsel %vm129, %v161, 0.0
    %166 = vadd.xlane.f32.xlu0 %v165
    %v167 = vpop.xlane.xlu0 %166
    %v168 = vsel %vm129, %v162, 0.0
    %169 = vadd.xlane.f32.xlu0 %v168
    %v170 = vpop.xlane.xlu0 %169
    %v171 = vrcp.pop 32.0
    %v172 = vmul.f32 32.0, %v171
    %v173 = vsub.f32 1.0, %v172
    %v174 = vmul.f32 %v171, %v173
    %v175 = vadd.f32 %v171, %v174
    %vm176 = vweird.f32 %v171
    %v177 = vsel %vm176, %v171, %v175
    %v178 = vmul.f32 %v167, %v177
    %v179 = vmul.f32 %v170, %v177
    %v180 = vsub.f32 %v161, %v178
    %v181 = vsub.f32 %v162, %v179
    %v182 = vmul.f32 %v180, %v180
    %v183 = vmul.f32 %v181, %v181
    %v184 = vsel %vm129, %v182, 0.0
    %185 = vadd.xlane.f32.xlu0 %v184
    %v186 = vpop.xlane.xlu0 %185
    %v187 = vsel %vm129, %v183, 0.0
    %188 = vadd.xlane.f32.xlu0 %v187
    %v189 = vpop.xlane.xlu0 %188
    %v190 = vmul.f32 %v186, %v177
    %v191 = vmul.f32 %v189, %v177
    %v192 = vadd.f32 %v190, 1e-05
    %v193 = vadd.f32 %v191, 1e-05
    %v194 = vrsqrt.pop %v192
    %v195 = vmul.f32 %v194, %v192
    %v196 = vmul.f32 %v195, %v194
    %v197 = vmul.f32 0.5, %v196
    %v198 = vsub.f32 1.5, %v197
    %v199 = vmul.f32 %v194, %v198
    %vm200 = vweird.f32 %v192
    %vm201 = vweird.f32 %v194
    %vm202 = vmor %vm200, %vm201
    %v203 = vsel %vm202, %v194, %v199
    %v204 = vrsqrt.pop %v193
    %v205 = vmul.f32 %v204, %v193
    %v206 = vmul.f32 %v205, %v204
    %v207 = vmul.f32 0.5, %v206
    %v208 = vsub.f32 1.5, %v207
    %v209 = vmul.f32 %v204, %v208
    %vm210 = vweird.f32 %v193
    %vm211 = vweird.f32 %v204
    %vm212 = vmor %vm210, %vm211
    %v213 = vsel %vm212, %v204, %v209
    %v214 = vmul.f32 %v180, %v203
    %v215 = vmul.f32 %v181, %v213
    %v217 = vperm.slane %v163, 0
    %v219 = vmul.f32 %v214, %v217
    %v220 = vmul.f32 %v215, %v217
    %v222 = vperm.slane %v164, 0
    %v224 = vadd.f32 %v219, %v222
    %v225 = vadd.f32 %v220, %v222
    %v226 = vld [vmem:[#allocation10] sm:$0x1]
    %v228 = vperm.slane %v226, 0
    %v230 = vadd.f32 %v161, %v228
    %v231 = vadd.f32 %v162, %v228
    %v232 = vld [vmem:[%s6] sm:$0xff]
    %v233 = vld [vmem:[%s6 + $0x8] sm:$0xff]
    %v234 = vld [vmem:[%s6 + $0x10] sm:$0xff]
    %v235 = vld [vmem:[%s6 + $0x18] sm:$0xff]
    %v236 = vld [vmem:[#allocation9] sm:$0x1]
    %v238 = vperm.slane %v236, 0
    %v241 = vsel %vm129, %v224, 0
    %v244 = vsel %vm129, %v225, 0
    %246 = vmatpush.msra.mxu0 0.0
    %247 = vmatpush.msra.mxu0 0.0
    %248 = vmatpush.msra.mxu0 0.0
    %249 = vmatpush.msra.mxu0 0.0
    %250 = vmatpush.msra.mxu0 0.0
    %251 = vmatpush.msra.mxu0 0.0
    %252 = vmatpush.msra.mxu0 0.0
    %253 = vmatpush.msra.mxu0 0.0
    %254 = vmatpush.msra.mxu0 0.0
    %255 = vmatpush.msra.mxu0 0.0
    %256 = vmatpush.msra.mxu0 0.0
    %257 = vmatpush.msra.mxu0 0.0
    %258 = vmatpush.msra.mxu0 %v235
    %259 = vmatpush.msra.mxu0 %v234
    %260 = vmatpush.msra.mxu0 %v233
    %261 = vmatpush.msra.mxu0 %v232
    %262 = vmatmul.f32.gmra.mxu0 %v241
    %v263 = vpop.f32.mrf.mxu0
    %v264 = vadd.f32 %v238, %v263
    %265 = vmatmul.f32.gmra.mxu0 %v244
    %v266 = vpop.f32.mrf.mxu0
    %v267 = vadd.f32 %v238, %v266
    %268 = vdwg.mxu0
    %v269 = vmul.f32 %v264, 0.5
    %v270 = vmul.f32 %v267, 0.5
    %v271 = vmul.f32 %v264, 0.70710677
    %v272 = vmul.f32 %v267, 0.70710677
    %v273 = vand.u32 2147483647, %v271
    %v274 = vand.u32 2147483647, %v272
    %v275 = vmul.f32 %v273, 0.3275911
    %v276 = vmul.f32 %v274, 0.3275911
    %v277 = vadd.f32 %v275, 1.0
    %v278 = vadd.f32 %v276, 1.0
    %v279 = vrcp.pop %v277
    %v280 = vmul.f32 %v277, %v279
    %v281 = vsub.f32 1.0, %v280
    %v282 = vmul.f32 %v279, %v281
    %v283 = vadd.f32 %v279, %v282
    %vm284 = vweird.f32 %v277
    %vm285 = vweird.f32 %v279
    %vm286 = vmor %vm284, %vm285
    %v287 = vsel %vm286, %v279, %v283
    %v288 = vand.u32 2147483647, %v277
    %vm289 = vcmp.eq.f32.partialorder %v288, 8.507059e+37
    %v290 = vand.u32 %v277, 2147483648
    %v291 = vor.u32 1.1754944e-38, %v290
    %v292 = vsel %vm289, %v291, %v287
    %v293 = vmul.f32 1.0, %v292
    %v294 = vrcp.pop %v278
    %v295 = vmul.f32 %v278, %v294
    %v296 = vsub.f32 1.0, %v295
    %v297 = vmul.f32 %v294, %v296
    %v298 = vadd.f32 %v294, %v297
    %vm299 = vweird.f32 %v278
    %vm300 = vweird.f32 %v294
    %vm301 = vmor %vm299, %vm300
    %v302 = vsel %vm301, %v294, %v298
    %v303 = vand.u32 2147483647, %v278
    %vm304 = vcmp.eq.f32.partialorder %v303, 8.507059e+37
    %v305 = vand.u32 %v278, 2147483648
    %v306 = vor.u32 1.1754944e-38, %v305
    %v307 = vsel %vm304, %v306, %v302
    %v308 = vmul.f32 1.0, %v307
    %v309 = vmul.f32 %v293, 1.0614054
    %v310 = vmul.f32 %v308, 1.0614054
    %v311 = vadd.f32 %v309, -1.4531521
    %v312 = vadd.f32 %v310, -1.4531521
    %v313 = vmul.f32 %v311, %v293
    %v314 = vmul.f32 %v312, %v308
    %v315 = vadd.f32 %v313, 1.4214138
    %v316 = vadd.f32 %v314, 1.4214138
    %v317 = vmul.f32 %v315, %v293
    %v318 = vmul.f32 %v316, %v308
    %v319 = vadd.f32 %v317, -0.28449672
    %v320 = vadd.f32 %v318, -0.28449672
    %v321 = vmul.f32 %v319, %v293
    %v322 = vmul.f32 %v320, %v308
    %v323 = vadd.f32 %v321, 0.2548296
    %v324 = vadd.f32 %v322, 0.2548296
    %v325 = vmul.f32 %v323, %v293
    %v326 = vmul.f32 %v324, %v308
    %v327 = vsub.f32 0.0, %v273
    %v328 = vsub.f32 0.0, %v274
    %v329 = vmul.f32 %v327, %v273
    %v330 = vmul.f32 %v328, %v274
    %v331 = vmul.f32 %v329, 1.442695
    %v332 = vpow.pop %v331
    %v333 = vmul.f32 %v330, 1.442695
    %v334 = vpow.pop %v333
    %v335 = vmul.f32 %v325, %v332
    %v336 = vmul.f32 %v326, %v334
    %v337 = vsub.f32 1.0, %v335
    %v338 = vsub.f32 1.0, %v336
    %vm339 = vcmp.lt.f32.partialorder %v271, 0.0
    %vm340 = vcmp.lt.f32.partialorder %v272, 0.0
    %v341 = vsub.f32 0.0, %v337
    %v342 = vsub.f32 0.0, %v338
    %v343 = vsel %vm339, %v341, %v337
    %v344 = vsel %vm340, %v342, %v338
    %v345 = vadd.f32 %v343, 1.0
    %v346 = vadd.f32 %v344, 1.0
    %v347 = vmul.f32 %v269, %v345
    %v348 = vmul.f32 %v270, %v346
    %v349 = vld [vmem:[%s8] sm:$0xff]
    %v350 = vld [vmem:[%s8 + $0x8] sm:$0xff]
    %v351 = vld [vmem:[%s8 + $0x10] sm:$0xff]
    %v352 = vld [vmem:[%s8 + $0x18] sm:$0xff]
    %v353 = vld [vmem:[%s8 + $0x20] sm:$0xff]
    %v354 = vld [vmem:[%s8 + $0x28] sm:$0xff]
    %v355 = vld [vmem:[%s8 + $0x30] sm:$0xff]
    %v356 = vld [vmem:[%s8 + $0x38] sm:$0xff]
    %vm357 = vcmask 523264
    %v359 = vsel %vm357, %v347, 0
    %v362 = vsel %vm357, %v348, 0
    %364 = vmatpush.msra.mxu0 0.0
    %365 = vmatpush.msra.mxu0 0.0
    %366 = vmatpush.msra.mxu0 0.0
    %367 = vmatpush.msra.mxu0 0.0
    %368 = vmatpush.msra.mxu0 0.0
    %369 = vmatpush.msra.mxu0 0.0
    %370 = vmatpush.msra.mxu0 0.0
    %371 = vmatpush.msra.mxu0 0.0
    %372 = vmatpush.msra.mxu0 %v356
    %373 = vmatpush.msra.mxu0 %v355
    %374 = vmatpush.msra.mxu0 %v354
    %375 = vmatpush.msra.mxu0 %v353
    %376 = vmatpush.msra.mxu0 %v352
    %377 = vmatpush.msra.mxu0 %v351
    %378 = vmatpush.msra.mxu0 %v350
    %379 = vmatpush.msra.mxu0 %v349
    %380 = vmatmul.f32.gmra.mxu0 %v359
    %v381 = vpop.f32.mrf.mxu0
    %v382 = vadd.f32 0.0, %v381
    %383 = vmatmul.f32.gmra.mxu0 %v362
    %v384 = vpop.f32.mrf.mxu0
    %v385 = vadd.f32 0.0, %v384
    %386 = vdwg.mxu0
    %v387 = vadd.f32 %v230, %v382
    %v388 = vadd.f32 %v231, %v385
    %389 = vst.msk [vmem:[%s10] sm:$0xff] %vm129, %v387
    %390 = vst.msk [vmem:[%s10 + $0x8] sm:$0xff] %vm129, %v388
    // Predicated region
    $region66: #{transformer_forward.8} parent=1 // pred_check
      _
    $region67: #{transformer_forward.8} parent=1 // pred_check_branch
      %392 = sbr.rel (0) target = $region69
    $region68: #{transformer_forward.8} parent=1 // pred_region
      _
    $region69: #{transformer_forward.8} parent=1 // pred_fallthru
      _
    // Predicated region
    $region70: #{transformer_forward.8} parent=1 // pred_check
      _
    $region71: #{transformer_forward.8} parent=1 // pred_check_branch
      %394 = sbr.rel (0) target = $region73
    $region72: #{transformer_forward.8} parent=1 // pred_region
      _
    $region73: #{transformer_forward.8} parent=1 // pred_fallthru
      _
    %395 = vsyncpa [#allocation3], 1
    %396 = vsyncpa [#allocation5], 1
    %397 = vsyncpa [#allocation8], 1
    %398 = vsyncpa [#allocation11], 1

// kernel: transformer_forward.9
$region0: #{transformer_forward.9}
  #allocation0 [shape = 'u32[]', space=smem, size = 0x4, offset = 0x4, fixed_abs, tag = 'smem constant byte address 0x4 - core index']
  #allocation1 [shape = 'u32[72,128]{1,0:T(1,128)}', space=vmem, size = 0x9000, scoped, tag = 'internal scratch']
  %s0 = inlined_call_operand.vmem [shape: f32[16,32], index: 0, kind: input, shape index: {}]
  %s1 = inlined_call_operand.hbm [shape: f32[1,32], index: 1, kind: input, shape index: {}]
  %s2 = inlined_call_operand.hbm [shape: f32[1,32], index: 2, kind: input, shape index: {}]
  %s3 = inlined_call_operand.vmem [shape: f32[32,32], index: 3, kind: input, shape index: {}]
  %s4 = inlined_call_operand.hbm [shape: f32[32,32], index: 4, kind: input, shape index: {}]
  %s5 = inlined_call_operand.hbm [shape: f32[32,32], index: 5, kind: input, shape index: {}]
  %s6 = inlined_call_operand.vmem [shape: f32[16,32], index: 6, kind: output, shape index: {0}]
  %s7 = inlined_call_operand.vmem [shape: f32[16,32], index: 7, kind: output, shape index: {1}]
  %s8 = inlined_call_operand.vmem [shape: f32[16,32], index: 8, kind: output, shape index: {2}]
  %9 = xla_tuple %s6, %s7, %s8
  %s10 = sld [smem:[#allocation0]]
  $region66: #{transformer_forward.9} parent=0
    _
  %s12 = ssub.s32 1, %s10
  %s13 = scalar_select 0, %s12, %s10
  $region1: #{transformer_forward.9} parent=0
    #allocation2 [shape = 'u8[512]{0}', space=vmem, size = 0x400, scoped, tag = 'input window, operand 1, single buffered']
    #allocation3 [shape = 's32[1]{0}', space=sflag, size = 0x4, scoped, tag = 'scoped memory for transformer_forward.9']
    #allocation4 [shape = 'u8[512]{0}', space=vmem, size = 0x400, scoped, tag = 'input window, operand 2, single buffered']
    #allocation5 [shape = 's32[1]{0}', space=sflag, size = 0x4, scoped, tag = 'scoped memory for transformer_forward.9']
    #allocation6 [shape = 'u8[16384]{0}', space=vmem, size = 0x4000, scoped, tag = 'input window, operand 4, single buffered']
    #allocation7 [shape = 'u8[16384]{0}', space=vmem, size = 0x4000, scoped, tag = 'input window, operand 5, single buffered']
    #allocation8 [shape = 's32[1]{0}', space=sflag, size = 0x4, scoped, tag = 'scoped memory for transformer_forward.9']
    %14 = vsyncpa [#allocation3], 0
    %15 = vsyncpa [#allocation5], 0
    %16 = vsyncpa [#allocation8], 0
    // Predicated region
    $region2: #{transformer_forward.9} parent=1 // pred_check
      _
    $region3: #{transformer_forward.9} parent=1 // pred_check_branch
      %18 = sbr.rel (0) target = $region5
    $region4: #{transformer_forward.9} parent=1 // pred_region
      _
    $region5: #{transformer_forward.9} parent=1 // pred_fallthru
      _
    // Predicated region
    $region6: #{transformer_forward.9} parent=1 // pred_check
      _
    $region7: #{transformer_forward.9} parent=1 // pred_check_branch
      %20 = sbr.rel (0) target = $region9
    $region8: #{transformer_forward.9} parent=1 // pred_region
      %22 = vsyncadd [#allocation3], 0
      %s24 = sshll.u32 %s1, 4
      %s25 = int_to_ptr.hbm [resolvable:$true] %s24
      %s26 = sshll.u32 [#allocation2], 4
      %s27 = int_to_ptr.vmem [resolvable:$true] %s26
      %29 = dma.hbm_to_vmem [thread:$0]  %s25, 16, %s27, [#allocation3]
    $region9: #{transformer_forward.9} parent=1 // pred_fallthru
      _
    // Predicated region
    $region10: #{transformer_forward.9} parent=1 // pred_check
      _
    $region11: #{transformer_forward.9} parent=1 // pred_check_branch
      %31 = sbr.rel (0) target = $region13
    $region12: #{transformer_forward.9} parent=1 // pred_region
      %33 = vsyncadd [#allocation5], 0
      %s35 = sshll.u32 %s2, 4
      %s36 = int_to_ptr.hbm [resolvable:$true] %s35
      %s37 = sshll.u32 [#allocation4], 4
      %s38 = int_to_ptr.vmem [resolvable:$true] %s37
      %40 = dma.hbm_to_vmem [thread:$0]  %s36, 16, %s38, [#allocation5]
    $region13: #{transformer_forward.9} parent=1 // pred_fallthru
      _
    // Predicated region
    $region14: #{transformer_forward.9} parent=1 // pred_check
      _
    $region15: #{transformer_forward.9} parent=1 // pred_check_branch
      %42 = sbr.rel (0) target = $region17
    $region16: #{transformer_forward.9} parent=1 // pred_region
      _
    $region17: #{transformer_forward.9} parent=1 // pred_fallthru
      _
    // Predicated region
    $region18: #{transformer_forward.9} parent=1 // pred_check
      _
    $region19: #{transformer_forward.9} parent=1 // pred_check_branch
      %44 = sbr.rel (0) target = $region21
    $region20: #{transformer_forward.9} parent=1 // pred_region
      %46 = vsyncadd [#allocation5], 0
      %s47 = sshll.u32 %s4, 4
      %s48 = int_to_ptr.hbm [resolvable:$true] %s47
      %s49 = sshll.u32 [#allocation6], 4
      %s50 = int_to_ptr.vmem [resolvable:$true] %s49
      %55 = dma.hbm_to_vmem [thread:$0]  %s48, 512, %s50, [#allocation5], 128, 128, 8
    $region21: #{transformer_forward.9} parent=1 // pred_fallthru
      _
    // Predicated region
    $region22: #{transformer_forward.9} parent=1 // pred_check
      _
    $region23: #{transformer_forward.9} parent=1 // pred_check_branch
      %57 = sbr.rel (0) target = $region25
    $region24: #{transformer_forward.9} parent=1 // pred_region
      %59 = vsyncadd [#allocation8], 0
      %s60 = sshll.u32 %s5, 4
      %s61 = int_to_ptr.hbm [resolvable:$true] %s60
      %s62 = sshll.u32 [#allocation7], 4
      %s63 = int_to_ptr.vmem [resolvable:$true] %s62
      %68 = dma.hbm_to_vmem [thread:$0]  %s61, 512, %s63, [#allocation8], 128, 128, 8
    $region25: #{transformer_forward.9} parent=1 // pred_fallthru
      _
    // Predicated region
    $region26: #{transformer_forward.9} parent=1 // pred_check
      _
    $region27: #{transformer_forward.9} parent=1 // pred_check_branch
      %70 = sbr.rel (0) target = $region29
    $region28: #{transformer_forward.9} parent=1 // pred_region
      %72 = dma.done [#allocation3], 16
    $region29: #{transformer_forward.9} parent=1 // pred_fallthru
      _
    // Predicated region
    $region30: #{transformer_forward.9} parent=1 // pred_check
      _
    $region31: #{transformer_forward.9} parent=1 // pred_check_branch
      %74 = sbr.rel (0) target = $region33
    $region32: #{transformer_forward.9} parent=1 // pred_region
      %76 = dma.done [#allocation5], 16
    $region33: #{transformer_forward.9} parent=1 // pred_fallthru
      _
    // Predicated region
    $region34: #{transformer_forward.9} parent=1 // pred_check
      _
    $region35: #{transformer_forward.9} parent=1 // pred_check_branch
      %78 = sbr.rel (0) target = $region37
    $region36: #{transformer_forward.9} parent=1 // pred_region
      %80 = dma.done [#allocation5], 512
    $region37: #{transformer_forward.9} parent=1 // pred_fallthru
      _
    // Predicated region
    $region38: #{transformer_forward.9} parent=1 // pred_check
      _
    $region39: #{transformer_forward.9} parent=1 // pred_check_branch
      %82 = sbr.rel (0) target = $region41
    $region40: #{transformer_forward.9} parent=1 // pred_region
      %84 = dma.done [#allocation8], 512
    $region41: #{transformer_forward.9} parent=1 // pred_fallthru
      _
    %v85 = vld [vmem:[%s0] sm:$0xff]
    %v86 = vld [vmem:[%s0 + $0x8] sm:$0xff]
    %v87 = vld [vmem:[#allocation2] sm:$0x1]
    %v88 = vld [vmem:[#allocation4] sm:$0x1]
    %vm89 = vcmask 261120
    %v90 = vsel %vm89, %v85, 0.0
    %91 = vadd.xlane.f32.xlu0 %v90
    %v92 = vpop.xlane.xlu0 %91
    %v93 = vsel %vm89, %v86, 0.0
    %94 = vadd.xlane.f32.xlu0 %v93
    %v95 = vpop.xlane.xlu0 %94
    %v96 = vrcp.pop 32.0
    %v97 = vmul.f32 32.0, %v96
    %v98 = vsub.f32 1.0, %v97
    %v99 = vmul.f32 %v96, %v98
    %v100 = vadd.f32 %v96, %v99
    %vm101 = vweird.f32 %v96
    %v102 = vsel %vm101, %v96, %v100
    %v103 = vmul.f32 %v92, %v102
    %v104 = vmul.f32 %v95, %v102
    %v105 = vsub.f32 %v85, %v103
    %v106 = vsub.f32 %v86, %v104
    %v107 = vmul.f32 %v105, %v105
    %v108 = vmul.f32 %v106, %v106
    %v109 = vsel %vm89, %v107, 0.0
    %110 = vadd.xlane.f32.xlu0 %v109
    %v111 = vpop.xlane.xlu0 %110
    %v112 = vsel %vm89, %v108, 0.0
    %113 = vadd.xlane.f32.xlu0 %v112
    %v114 = vpop.xlane.xlu0 %113
    %v115 = vmul.f32 %v111, %v102
    %v116 = vmul.f32 %v114, %v102
    %v117 = vadd.f32 %v115, 1e-05
    %v118 = vadd.f32 %v116, 1e-05
    %v119 = vrsqrt.pop %v117
    %v120 = vmul.f32 %v119, %v117
    %v121 = vmul.f32 %v120, %v119
    %v122 = vmul.f32 0.5, %v121
    %v123 = vsub.f32 1.5, %v122
    %v124 = vmul.f32 %v119, %v123
    %vm125 = vweird.f32 %v117
    %vm126 = vweird.f32 %v119
    %vm127 = vmor %vm125, %vm126
    %v128 = vsel %vm127, %v119, %v124
    %v129 = vrsqrt.pop %v118
    %v130 = vmul.f32 %v129, %v118
    %v131 = vmul.f32 %v130, %v129
    %v132 = vmul.f32 0.5, %v131
    %v133 = vsub.f32 1.5, %v132
    %v134 = vmul.f32 %v129, %v133
    %vm135 = vweird.f32 %v118
    %vm136 = vweird.f32 %v129
    %vm137 = vmor %vm135, %vm136
    %v138 = vsel %vm137, %v129, %v134
    %v139 = vmul.f32 %v105, %v128
    %v140 = vmul.f32 %v106, %v138
    %v142 = vperm.slane %v87, 0
    %v144 = vmul.f32 %v139, %v142
    %v145 = vmul.f32 %v140, %v142
    %v147 = vperm.slane %v88, 0
    %v149 = vadd.f32 %v144, %v147
    %v150 = vadd.f32 %v145, %v147
    %v151 = vld [vmem:[%s3] sm:$0xff]
    %v152 = vld [vmem:[%s3 + $0x8] sm:$0xff]
    %v153 = vld [vmem:[%s3 + $0x10] sm:$0xff]
    %v154 = vld [vmem:[%s3 + $0x18] sm:$0xff]
    %v156 = vsel %vm89, %v149, 0
    %v159 = vsel %vm89, %v150, 0
    %161 = vmatpush.msra.mxu0 0.0
    %162 = vmatpush.msra.mxu0 0.0
    %163 = vmatpush.msra.mxu0 0.0
    %164 = vmatpush.msra.mxu0 0.0
    %165 = vmatpush.msra.mxu0 0.0
    %166 = vmatpush.msra.mxu0 0.0
    %167 = vmatpush.msra.mxu0 0.0
    %168 = vmatpush.msra.mxu0 0.0
    %169 = vmatpush.msra.mxu0 0.0
    %170 = vmatpush.msra.mxu0 0.0
    %171 = vmatpush.msra.mxu0 0.0
    %172 = vmatpush.msra.mxu0 0.0
    %173 = vmatpush.msra.mxu0 %v154
    %174 = vmatpush.msra.mxu0 %v153
    %175 = vmatpush.msra.mxu0 %v152
    %176 = vmatpush.msra.mxu0 %v151
    %177 = vmatmul.f32.gmra.mxu0 %v156
    %v178 = vpop.f32.mrf.mxu0
    %v179 = vadd.f32 0.0, %v178
    %180 = vmatmul.f32.gmra.mxu0 %v159
    %v181 = vpop.f32.mrf.mxu0
    %v182 = vadd.f32 0.0, %v181
    %183 = vdwg.mxu0
    %v184 = vmul.f32 %v179, 0.35355338
    %v185 = vmul.f32 %v182, 0.35355338
    %186 = vst.msk [vmem:[%s6] sm:$0xff] %vm89, %v184
    %187 = vst.msk [vmem:[%s6 + $0x8] sm:$0xff] %vm89, %v185
    %v188 = vld [vmem:[#allocation6] sm:$0xff]
    %v189 = vld [vmem:[#allocation6 + $0x8] sm:$0xff]
    %v190 = vld [vmem:[#allocation6 + $0x10] sm:$0xff]
    %v191 = vld [vmem:[#allocation6 + $0x18] sm:$0xff]
    %192 = vmatpush.msra.mxu0 0.0
    %193 = vmatpush.msra.mxu0 0.0
    %194 = vmatpush.msra.mxu0 0.0
    %195 = vmatpush.msra.mxu0 0.0
    %196 = vmatpush.msra.mxu0 0.0
    %197 = vmatpush.msra.mxu0 0.0
    %198 = vmatpush.msra.mxu0 0.0
    %199 = vmatpush.msra.mxu0 0.0
    %200 = vmatpush.msra.mxu0 0.0
    %201 = vmatpush.msra.mxu0 0.0
    %202 = vmatpush.msra.mxu0 0.0
    %203 = vmatpush.msra.mxu0 0.0
    %204 = vmatpush.msra.mxu0 %v191
    %205 = vmatpush.msra.mxu0 %v190
    %206 = vmatpush.msra.mxu0 %v189
    %207 = vmatpush.msra.mxu0 %v188
    %208 = vmatmul.f32.gmra.mxu0 %v156
    %v209 = vpop.f32.mrf.mxu0
    %v210 = vadd.f32 0.0, %v209
    %211 = vmatmul.f32.gmra.mxu0 %v159
    %v212 = vpop.f32.mrf.mxu0
    %v213 = vadd.f32 0.0, %v212
    %214 = vdwg.mxu0
    %215 = vst.msk [vmem:[%s7] sm:$0xff] %vm89, %v210
    %216 = vst.msk [vmem:[%s7 + $0x8] sm:$0xff] %vm89, %v213
    %v217 = vld [vmem:[#allocation7] sm:$0xff]
    %v218 = vld [vmem:[#allocation7 + $0x8] sm:$0xff]
    %v219 = vld [vmem:[#allocation7 + $0x10] sm:$0xff]
    %v220 = vld [vmem:[#allocation7 + $0x18] sm:$0xff]
    %221 = vmatpush.msra.mxu0 0.0
    %222 = vmatpush.msra.mxu0 0.0
    %223 = vmatpush.msra.mxu0 0.0
    %224 = vmatpush.msra.mxu0 0.0
    %225 = vmatpush.msra.mxu0 0.0
    %226 = vmatpush.msra.mxu0 0.0
    %227 = vmatpush.msra.mxu0 0.0
    %228 = vmatpush.msra.mxu0 0.0
    %229 = vmatpush.msra.mxu0 0.0
    %230 = vmatpush.msra.mxu0 0.0
    %231 = vmatpush.msra.mxu0 0.0
    %232 = vmatpush.msra.mxu0 0.0
    %233 = vmatpush.msra.mxu0 %v220
    %234 = vmatpush.msra.mxu0 %v219
    %235 = vmatpush.msra.mxu0 %v218
    %236 = vmatpush.msra.mxu0 %v217
    %237 = vmatmul.f32.gmra.mxu0 %v156
    %v238 = vpop.f32.mrf.mxu0
    %v239 = vadd.f32 0.0, %v238
    %240 = vmatmul.f32.gmra.mxu0 %v159
    %v241 = vpop.f32.mrf.mxu0
    %v242 = vadd.f32 0.0, %v241
    %243 = vdwg.mxu0
    %244 = vst.msk [vmem:[%s8] sm:$0xff] %vm89, %v239
    %245 = vst.msk [vmem:[%s8 + $0x8] sm:$0xff] %vm89, %v242
    // Predicated region
    $region42: #{transformer_forward.9} parent=1 // pred_check
      _
    $region43: #{transformer_forward.9} parent=1 // pred_check_branch
      %247 = sbr.rel (0) target = $region45
    $region44: #{transformer_forward.9} parent=1 // pred_region
      _
    $region45: #{transformer_forward.9} parent=1 // pred_fallthru
      _
    // Predicated region
    $region46: #{transformer_forward.9} parent=1 // pred_check
      _
    $region47: #{transformer_forward.9} parent=1 // pred_check_branch
      %249 = sbr.rel (0) target = $region49
    $region48: #{transformer_forward.9} parent=1 // pred_region
      _
    $region49: #{transformer_forward.9} parent=1 // pred_fallthru
      _
    // Predicated region
    $region50: #{transformer_forward.9} parent=1 // pred_check
      _
    $region51: #{transformer_forward.9} parent=1 // pred_check_branch
      %251 = sbr.rel (0) target = $region53
    $region52: #{transformer_forward.9} parent=1 // pred_region
      _
    $region53: #{transformer_forward.9} parent=1 // pred_fallthru
      _
    // Predicated region
    $region54: #{transformer_forward.9} parent=1 // pred_check
      _
    $region55: #{transformer_forward.9} parent=1 // pred_check_branch
      %253 = sbr.rel (0) target = $region57
    $region56: #{transformer_forward.9} parent=1 // pred_region
      _
    $region57: #{transformer_forward.9} parent=1 // pred_fallthru
      _
    // Predicated region
    $region58: #{transformer_forward.9} parent=1 // pred_check
      _
    $region59: #{transformer_forward.9} parent=1 // pred_check_branch
      %255 = sbr.rel (0) target = $region61
    $region60: #{transformer_forward.9} parent=1 // pred_region
      _
    $region61: #{transformer_forward.9} parent=1 // pred_fallthru
      _
    // Predicated region
    $region62: #{transformer_forward.9} parent=1 // pred_check
      _
    $region63: #{transformer_forward.9} parent=1 // pred_check_branch
      %257 = sbr.rel (0) target = $region65
    $region64: #{transformer_forward.9} parent=1 // pred_region
      _
    $region65: #{transformer_forward.9} parent=1 // pred_fallthru
      _
    %258 = vsyncpa [#allocation3], 1
    %259 = vsyncpa [#allocation5], 1
    %260 = vsyncpa [#allocation8], 1

// kernel: transformer_forward.11
$region0: #{transformer_forward.11}
  #allocation0 [shape = 'u32[]', space=smem, size = 0x4, offset = 0x4, fixed_abs, tag = 'smem constant byte address 0x4 - core index']
  #allocation1 [shape = 'u32[72,128]{1,0:T(1,128)}', space=vmem, size = 0x9000, scoped, tag = 'internal scratch']
  %s0 = inlined_call_operand.vmem [shape: f32[16,32], index: 0, kind: input, shape index: {}]
  %s1 = inlined_call_operand.vmem [shape: f32[16,32], index: 1, kind: input, shape index: {}]
  %s2 = inlined_call_operand.vmem [shape: f32[32,32], index: 2, kind: input, shape index: {}]
  %s3 = inlined_call_operand.vmem [shape: f32[1,32], index: 3, kind: input, shape index: {}]
  %s4 = inlined_call_operand.vmem [shape: f32[1,32], index: 4, kind: input, shape index: {}]
  %s5 = inlined_call_operand.vmem [shape: f32[1,32], index: 5, kind: input, shape index: {}]
  %s6 = inlined_call_operand.vmem [shape: f32[32,64], index: 6, kind: input, shape index: {}]
  %s7 = inlined_call_operand.vmem [shape: f32[1,64], index: 7, kind: input, shape index: {}]
  %s8 = inlined_call_operand.vmem [shape: f32[64,32], index: 8, kind: input, shape index: {}]
  %s9 = inlined_call_operand.vmem [shape: f32[1,32], index: 9, kind: input, shape index: {}]
  %s10 = inlined_call_operand.hbm [shape: f32[16,32], index: 10, kind: output, shape index: {}]
  %s11 = sld [smem:[#allocation0]]
  $region50: #{transformer_forward.11} parent=0
    _
  %s13 = ssub.s32 1, %s11
  %s14 = scalar_select 0, %s13, %s11
  $region1: #{transformer_forward.11} parent=0
    #allocation2 [shape = 'u8[8192]{0}', space=vmem, size = 0x2000, scoped, tag = 'output window, operand 0, single buffered']
    #allocation3 [shape = 's32[1]{0}', space=sflag, size = 0x4, scoped, tag = 'scoped memory for transformer_forward.11']
    %15 = vsyncpa [#allocation3], 0
    // Predicated region
    $region2: #{transformer_forward.11} parent=1 // pred_check
      _
    $region3: #{transformer_forward.11} parent=1 // pred_check_branch
      %17 = sbr.rel (0) target = $region5
    $region4: #{transformer_forward.11} parent=1 // pred_region
      _
    $region5: #{transformer_forward.11} parent=1 // pred_fallthru
      _
    // Predicated region
    $region6: #{transformer_forward.11} parent=1 // pred_check
      _
    $region7: #{transformer_forward.11} parent=1 // pred_check_branch
      %19 = sbr.rel (0) target = $region9
    $region8: #{transformer_forward.11} parent=1 // pred_region
      _
    $region9: #{transformer_forward.11} parent=1 // pred_fallthru
      _
    // Predicated region
    $region10: #{transformer_forward.11} parent=1 // pred_check
      _
    $region11: #{transformer_forward.11} parent=1 // pred_check_branch
      %21 = sbr.rel (0) target = $region13
    $region12: #{transformer_forward.11} parent=1 // pred_region
      _
    $region13: #{transformer_forward.11} parent=1 // pred_fallthru
      _
    // Predicated region
    $region14: #{transformer_forward.11} parent=1 // pred_check
      _
    $region15: #{transformer_forward.11} parent=1 // pred_check_branch
      %23 = sbr.rel (0) target = $region17
    $region16: #{transformer_forward.11} parent=1 // pred_region
      _
    $region17: #{transformer_forward.11} parent=1 // pred_fallthru
      _
    // Predicated region
    $region18: #{transformer_forward.11} parent=1 // pred_check
      _
    $region19: #{transformer_forward.11} parent=1 // pred_check_branch
      %25 = sbr.rel (0) target = $region21
    $region20: #{transformer_forward.11} parent=1 // pred_region
      _
    $region21: #{transformer_forward.11} parent=1 // pred_fallthru
      _
    // Predicated region
    $region22: #{transformer_forward.11} parent=1 // pred_check
      _
    $region23: #{transformer_forward.11} parent=1 // pred_check_branch
      %27 = sbr.rel (0) target = $region25
    $region24: #{transformer_forward.11} parent=1 // pred_region
      _
    $region25: #{transformer_forward.11} parent=1 // pred_fallthru
      _
    // Predicated region
    $region26: #{transformer_forward.11} parent=1 // pred_check
      _
    $region27: #{transformer_forward.11} parent=1 // pred_check_branch
      %29 = sbr.rel (0) target = $region29
    $region28: #{transformer_forward.11} parent=1 // pred_region
      _
    $region29: #{transformer_forward.11} parent=1 // pred_fallthru
      _
    // Predicated region
    $region30: #{transformer_forward.11} parent=1 // pred_check
      _
    $region31: #{transformer_forward.11} parent=1 // pred_check_branch
      %31 = sbr.rel (0) target = $region33
    $region32: #{transformer_forward.11} parent=1 // pred_region
      _
    $region33: #{transformer_forward.11} parent=1 // pred_fallthru
      _
    // Predicated region
    $region34: #{transformer_forward.11} parent=1 // pred_check
      _
    $region35: #{transformer_forward.11} parent=1 // pred_check_branch
      %33 = sbr.rel (0) target = $region37
    $region36: #{transformer_forward.11} parent=1 // pred_region
      _
    $region37: #{transformer_forward.11} parent=1 // pred_fallthru
      _
    // Predicated region
    $region38: #{transformer_forward.11} parent=1 // pred_check
      _
    $region39: #{transformer_forward.11} parent=1 // pred_check_branch
      %35 = sbr.rel (0) target = $region41
    $region40: #{transformer_forward.11} parent=1 // pred_region
      _
    $region41: #{transformer_forward.11} parent=1 // pred_fallthru
      _
    %v36 = vld [vmem:[%s0] sm:$0xff]
    %v37 = vld [vmem:[%s0 + $0x8] sm:$0xff]
    %v38 = vld [vmem:[%s2] sm:$0xff]
    %v39 = vld [vmem:[%s2 + $0x8] sm:$0xff]
    %v40 = vld [vmem:[%s2 + $0x10] sm:$0xff]
    %v41 = vld [vmem:[%s2 + $0x18] sm:$0xff]
    %v42 = vld [vmem:[%s3] sm:$0x1]
    %v44 = vperm.slane %v42, 0
    %vm46 = vcmask 261120
    %v48 = vsel %vm46, %v36, 0
    %v51 = vsel %vm46, %v37, 0
    %53 = vmatpush.msra.mxu0 0.0
    %54 = vmatpush.msra.mxu0 0.0
    %55 = vmatpush.msra.mxu0 0.0
    %56 = vmatpush.msra.mxu0 0.0
    %57 = vmatpush.msra.mxu0 0.0
    %58 = vmatpush.msra.mxu0 0.0
    %59 = vmatpush.msra.mxu0 0.0
    %60 = vmatpush.msra.mxu0 0.0
    %61 = vmatpush.msra.mxu0 0.0
    %62 = vmatpush.msra.mxu0 0.0
    %63 = vmatpush.msra.mxu0 0.0
    %64 = vmatpush.msra.mxu0 0.0
    %65 = vmatpush.msra.mxu0 %v41
    %66 = vmatpush.msra.mxu0 %v40
    %67 = vmatpush.msra.mxu0 %v39
    %68 = vmatpush.msra.mxu0 %v38
    %69 = vmatmul.f32.gmra.mxu0 %v48
    %v70 = vpop.f32.mrf.mxu0
    %v71 = vadd.f32 %v44, %v70
    %72 = vmatmul.f32.gmra.mxu0 %v51
    %v73 = vpop.f32.mrf.mxu0
    %v74 = vadd.f32 %v44, %v73
    %75 = vdwg.mxu0
    %v76 = vld [vmem:[%s1] sm:$0xff]
    %v77 = vld [vmem:[%s1 + $0x8] sm:$0xff]
    %v78 = vadd.f32 %v71, %v76
    %v79 = vadd.f32 %v74, %v77
    %v80 = vld [vmem:[%s4] sm:$0x1]
    %v81 = vld [vmem:[%s5] sm:$0x1]
    %v82 = vsel %vm46, %v78, 0.0
    %83 = vadd.xlane.f32.xlu0 %v82
    %v84 = vpop.xlane.xlu0 %83
    %v85 = vsel %vm46, %v79, 0.0
    %86 = vadd.xlane.f32.xlu0 %v85
    %v87 = vpop.xlane.xlu0 %86
    %v88 = vrcp.pop 32.0
    %v89 = vmul.f32 32.0, %v88
    %v90 = vsub.f32 1.0, %v89
    %v91 = vmul.f32 %v88, %v90
    %v92 = vadd.f32 %v88, %v91
    %vm93 = vweird.f32 %v88
    %v94 = vsel %vm93, %v88, %v92
    %v95 = vmul.f32 %v84, %v94
    %v96 = vmul.f32 %v87, %v94
    %v97 = vsub.f32 %v78, %v95
    %v98 = vsub.f32 %v79, %v96
    %v99 = vmul.f32 %v97, %v97
    %v100 = vmul.f32 %v98, %v98
    %v101 = vsel %vm46, %v99, 0.0
    %102 = vadd.xlane.f32.xlu0 %v101
    %v103 = vpop.xlane.xlu0 %102
    %v104 = vsel %vm46, %v100, 0.0
    %105 = vadd.xlane.f32.xlu0 %v104
    %v106 = vpop.xlane.xlu0 %105
    %v107 = vmul.f32 %v103, %v94
    %v108 = vmul.f32 %v106, %v94
    %v109 = vadd.f32 %v107, 1e-05
    %v110 = vadd.f32 %v108, 1e-05
    %v111 = vrsqrt.pop %v109
    %v112 = vmul.f32 %v111, %v109
    %v113 = vmul.f32 %v112, %v111
    %v114 = vmul.f32 0.5, %v113
    %v115 = vsub.f32 1.5, %v114
    %v116 = vmul.f32 %v111, %v115
    %vm117 = vweird.f32 %v109
    %vm118 = vweird.f32 %v111
    %vm119 = vmor %vm117, %vm118
    %v120 = vsel %vm119, %v111, %v116
    %v121 = vrsqrt.pop %v110
    %v122 = vmul.f32 %v121, %v110
    %v123 = vmul.f32 %v122, %v121
    %v124 = vmul.f32 0.5, %v123
    %v125 = vsub.f32 1.5, %v124
    %v126 = vmul.f32 %v121, %v125
    %vm127 = vweird.f32 %v110
    %vm128 = vweird.f32 %v121
    %vm129 = vmor %vm127, %vm128
    %v130 = vsel %vm129, %v121, %v126
    %v131 = vmul.f32 %v97, %v120
    %v132 = vmul.f32 %v98, %v130
    %v134 = vperm.slane %v80, 0
    %v136 = vmul.f32 %v131, %v134
    %v137 = vmul.f32 %v132, %v134
    %v139 = vperm.slane %v81, 0
    %v141 = vadd.f32 %v136, %v139
    %v142 = vadd.f32 %v137, %v139
    %v143 = vld [vmem:[%s9] sm:$0x1]
    %v145 = vperm.slane %v143, 0
    %v147 = vadd.f32 %v78, %v145
    %v148 = vadd.f32 %v79, %v145
    %v149 = vld [vmem:[%s6] sm:$0xff]
    %v150 = vld [vmem:[%s6 + $0x8] sm:$0xff]
    %v151 = vld [vmem:[%s6 + $0x10] sm:$0xff]
    %v152 = vld [vmem:[%s6 + $0x18] sm:$0xff]
    %v153 = vld [vmem:[%s7] sm:$0x1]
    %v155 = vperm.slane %v153, 0
    %v158 = vsel %vm46, %v141, 0
    %v161 = vsel %vm46, %v142, 0
    %163 = vmatpush.msra.mxu0 0.0
    %164 = vmatpush.msra.mxu0 0.0
    %165 = vmatpush.msra.mxu0 0.0
    %166 = vmatpush.msra.mxu0 0.0
    %167 = vmatpush.msra.mxu0 0.0
    %168 = vmatpush.msra.mxu0 0.0
    %169 = vmatpush.msra.mxu0 0.0
    %170 = vmatpush.msra.mxu0 0.0
    %171 = vmatpush.msra.mxu0 0.0
    %172 = vmatpush.msra.mxu0 0.0
    %173 = vmatpush.msra.mxu0 0.0
    %174 = vmatpush.msra.mxu0 0.0
    %175 = vmatpush.msra.mxu0 %v152
    %176 = vmatpush.msra.mxu0 %v151
    %177 = vmatpush.msra.mxu0 %v150
    %178 = vmatpush.msra.mxu0 %v149
    %179 = vmatmul.f32.gmra.mxu0 %v158
    %v180 = vpop.f32.mrf.mxu0
    %v181 = vadd.f32 %v155, %v180
    %182 = vmatmul.f32.gmra.mxu0 %v161
    %v183 = vpop.f32.mrf.mxu0
    %v184 = vadd.f32 %v155, %v183
    %185 = vdwg.mxu0
    %v186 = vmul.f32 %v181, 0.5
    %v187 = vmul.f32 %v184, 0.5
    %v188 = vmul.f32 %v181, 0.70710677
    %v189 = vmul.f32 %v184, 0.70710677
    %v190 = vand.u32 2147483647, %v188
    %v191 = vand.u32 2147483647, %v189
    %v192 = vmul.f32 %v190, 0.3275911
    %v193 = vmul.f32 %v191, 0.3275911
    %v194 = vadd.f32 %v192, 1.0
    %v195 = vadd.f32 %v193, 1.0
    %v196 = vrcp.pop %v194
    %v197 = vmul.f32 %v194, %v196
    %v198 = vsub.f32 1.0, %v197
    %v199 = vmul.f32 %v196, %v198
    %v200 = vadd.f32 %v196, %v199
    %vm201 = vweird.f32 %v194
    %vm202 = vweird.f32 %v196
    %vm203 = vmor %vm201, %vm202
    %v204 = vsel %vm203, %v196, %v200
    %v205 = vand.u32 2147483647, %v194
    %vm206 = vcmp.eq.f32.partialorder %v205, 8.507059e+37
    %v207 = vand.u32 %v194, 2147483648
    %v208 = vor.u32 1.1754944e-38, %v207
    %v209 = vsel %vm206, %v208, %v204
    %v210 = vmul.f32 1.0, %v209
    %v211 = vrcp.pop %v195
    %v212 = vmul.f32 %v195, %v211
    %v213 = vsub.f32 1.0, %v212
    %v214 = vmul.f32 %v211, %v213
    %v215 = vadd.f32 %v211, %v214
    %vm216 = vweird.f32 %v195
    %vm217 = vweird.f32 %v211
    %vm218 = vmor %vm216, %vm217
    %v219 = vsel %vm218, %v211, %v215
    %v220 = vand.u32 2147483647, %v195
    %vm221 = vcmp.eq.f32.partialorder %v220, 8.507059e+37
    %v222 = vand.u32 %v195, 2147483648
    %v223 = vor.u32 1.1754944e-38, %v222
    %v224 = vsel %vm221, %v223, %v219
    %v225 = vmul.f32 1.0, %v224
    %v226 = vmul.f32 %v210, 1.0614054
    %v227 = vmul.f32 %v225, 1.0614054
    %v228 = vadd.f32 %v226, -1.4531521
    %v229 = vadd.f32 %v227, -1.4531521
    %v230 = vmul.f32 %v228, %v210
    %v231 = vmul.f32 %v229, %v225
    %v232 = vadd.f32 %v230, 1.4214138
    %v233 = vadd.f32 %v231, 1.4214138
    %v234 = vmul.f32 %v232, %v210
    %v235 = vmul.f32 %v233, %v225
    %v236 = vadd.f32 %v234, -0.28449672
    %v237 = vadd.f32 %v235, -0.28449672
    %v238 = vmul.f32 %v236, %v210
    %v239 = vmul.f32 %v237, %v225
    %v240 = vadd.f32 %v238, 0.2548296
    %v241 = vadd.f32 %v239, 0.2548296
    %v242 = vmul.f32 %v240, %v210
    %v243 = vmul.f32 %v241, %v225
    %v244 = vsub.f32 0.0, %v190
    %v245 = vsub.f32 0.0, %v191
    %v246 = vmul.f32 %v244, %v190
    %v247 = vmul.f32 %v245, %v191
    %v248 = vmul.f32 %v246, 1.442695
    %v249 = vpow.pop %v248
    %v250 = vmul.f32 %v247, 1.442695
    %v251 = vpow.pop %v250
    %v252 = vmul.f32 %v242, %v249
    %v253 = vmul.f32 %v243, %v251
    %v254 = vsub.f32 1.0, %v252
    %v255 = vsub.f32 1.0, %v253
    %vm256 = vcmp.lt.f32.partialorder %v188, 0.0
    %vm257 = vcmp.lt.f32.partialorder %v189, 0.0
    %v258 = vsub.f32 0.0, %v254
    %v259 = vsub.f32 0.0, %v255
    %v260 = vsel %vm256, %v258, %v254
    %v261 = vsel %vm257, %v259, %v255
    %v262 = vadd.f32 %v260, 1.0
    %v263 = vadd.f32 %v261, 1.0
    %v264 = vmul.f32 %v186, %v262
    %v265 = vmul.f32 %v187, %v263
    %v266 = vld [vmem:[%s8] sm:$0xff]
    %v267 = vld [vmem:[%s8 + $0x8] sm:$0xff]
    %v268 = vld [vmem:[%s8 + $0x10] sm:$0xff]
    %v269 = vld [vmem:[%s8 + $0x18] sm:$0xff]
    %v270 = vld [vmem:[%s8 + $0x20] sm:$0xff]
    %v271 = vld [vmem:[%s8 + $0x28] sm:$0xff]
    %v272 = vld [vmem:[%s8 + $0x30] sm:$0xff]
    %v273 = vld [vmem:[%s8 + $0x38] sm:$0xff]
    %vm274 = vcmask 523264
    %v276 = vsel %vm274, %v264, 0
    %v279 = vsel %vm274, %v265, 0
    %281 = vmatpush.msra.mxu0 0.0
    %282 = vmatpush.msra.mxu0 0.0
    %283 = vmatpush.msra.mxu0 0.0
    %284 = vmatpush.msra.mxu0 0.0
    %285 = vmatpush.msra.mxu0 0.0
    %286 = vmatpush.msra.mxu0 0.0
    %287 = vmatpush.msra.mxu0 0.0
    %288 = vmatpush.msra.mxu0 0.0
    %289 = vmatpush.msra.mxu0 %v273
    %290 = vmatpush.msra.mxu0 %v272
    %291 = vmatpush.msra.mxu0 %v271
    %292 = vmatpush.msra.mxu0 %v270
    %293 = vmatpush.msra.mxu0 %v269
    %294 = vmatpush.msra.mxu0 %v268
    %295 = vmatpush.msra.mxu0 %v267
    %296 = vmatpush.msra.mxu0 %v266
    %297 = vmatmul.f32.gmra.mxu0 %v276
    %v298 = vpop.f32.mrf.mxu0
    %v299 = vadd.f32 0.0, %v298
    %300 = vmatmul.f32.gmra.mxu0 %v279
    %v301 = vpop.f32.mrf.mxu0
    %v302 = vadd.f32 0.0, %v301
    %303 = vdwg.mxu0
    %v304 = vadd.f32 %v147, %v299
    %v305 = vadd.f32 %v148, %v302
    %306 = vst.msk [vmem:[#allocation2] sm:$0xff] %vm46, %v304
    %307 = vst.msk [vmem:[#allocation2 + $0x8] sm:$0xff] %vm46, %v305
    // Predicated region
    $region42: #{transformer_forward.11} parent=1 // pred_check
      _
    $region43: #{transformer_forward.11} parent=1 // pred_check_branch
      %309 = sbr.rel (0) target = $region45
    $region44: #{transformer_forward.11} parent=1 // pred_region
      %311 = vsyncadd [#allocation3], 0
      %s312 = sshll.u32 [#allocation2], 4
      %s313 = int_to_ptr.vmem [resolvable:$true] %s312
      %s314 = sshll.u32 %s10, 4
      %s315 = int_to_ptr.hbm [resolvable:$true] %s314
      %320 = dma.vmem_to_hbm [thread:$0]  %s313, 256, %s315, [#allocation3], 128, 128, 8
    $region45: #{transformer_forward.11} parent=1 // pred_fallthru
      _
    // Predicated region
    $region46: #{transformer_forward.11} parent=1 // pred_check
      _
    $region47: #{transformer_forward.11} parent=1 // pred_check_branch
      %322 = sbr.rel (0) target = $region49
    $region48: #{transformer_forward.11} parent=1 // pred_region
      %324 = dma.done [#allocation3], 256
    $region49: #{transformer_forward.11} parent=1 // pred_fallthru
      _
    %325 = vsyncpa [#allocation3], 1

</llo_original>
